<compile_context>
chip_gen: v5e
topology: v5e:2x2
jax: 0.10.0
libtpu: 0.0.40
codegen_flags: <defaults>
</compile_context>

<pallas_src>
import jax
import jax.numpy as jnp
from jax.experimental import pallas as pl
from jax.experimental.pallas import tpu as pltpu

# ---- model config (mirrors the PyTorch module) ----
DIM = 1            # input_size / output_size
H = 250            # hidden_layer_size
NUM_LAYERS = 3
SEQ = 8            # small example sequence length

# ---- padded sizes for TPU layout ----
HP = 256           # hidden padded to multiple of 128


# ------------------------------------------------------------------
# Fused Pallas kernel: grid axis = LSTM layer, recurrence inside.
# ------------------------------------------------------------------
def fused_lstm_kernel(x_ref, wih0_ref, wihh_ref, whh_ref, b_ref,
                      wlin_ref, blin_ref, o_ref, hseq_ref, xproj_ref):
    """One grid step == one LSTM layer (batch=1, sequence-major).

    x_ref:    (S, 1)          raw input sequence (f32, grid-invariant)
    wih0_ref: (1, 4*HP)       layer-0 W_ih^T (true input dim is 1, f32)
    wihh_ref: (1, HP, 4*HP)   this layer's W_ih^T block (bf16; layers 1..L-1)
    whh_ref:  (1, HP, 4*HP)   this layer's W_hh^T block (bf16)
    b_ref:    (1, 1, 4*HP)    this layer's b_ih + b_hh (f32)
    wlin_ref: (1, HP)         linear head weight row (f32)
    blin_ref: (1, 1)          linear head bias
    o_ref:    (1, 1)          output: prediction for the last timestep
    hseq_ref: (S, HP)         persistent VMEM scratch: layer's hidden sequence
    xproj_ref:(S, 4*HP)       persistent VMEM scratch: input projections
    """
    layer = pl.program_id(0)
    last_layer = pl.num_programs(0) - 1
    S = x_ref.shape[0]

    # ---- input projection for this layer (no sequential dependency) ----
    @pl.when(layer == 0)
    def _():
        # True input dim is 1: broadcast outer product on the VPU, no padded
        # 128-wide MXU weight stream.
        xproj_ref[...] = x_ref[...] * wih0_ref[...]                 # (S, 4*HP)
        o_ref[...] = jnp.zeros_like(o_ref)

    @pl.when(layer > 0)
    def _():
        # Previous layer's hidden sequence (persistent scratch) -> gates,
        # one (S, HP) x (HP, 4*HP) bf16 matmul with f32 accumulation.
        xproj_ref[...] = jnp.dot(hseq_ref[...].astype(jnp.bfloat16),
                                 wihh_ref[0],
                                 preferred_element_type=jnp.float32)

    whh = whh_ref[0]            # (HP, 4*HP) bf16; loop-invariant across t
    bias = b_ref[0]             # (1, 4*HP)  f32

    def step(t, carry):
        h, c = carry
        gates = (jnp.dot(h.astype(jnp.bfloat16), whh,
                         preferred_element_type=jnp.float32)
                 + xproj_ref[pl.ds(t, 1), :] + bias)                # (1, 4*HP)
        # Gate packing [i | f | o | g]: one sigmoid over 3*HP, one tanh over HP.
        ifo = jax.nn.sigmoid(gates[:, :3 * HP])
        g = jnp.tanh(gates[:, 3 * HP:])
        i = ifo[:, 0 * HP:1 * HP]
        f = ifo[:, 1 * HP:2 * HP]
        o = ifo[:, 2 * HP:3 * HP]
        c = f * c + i * g
        h = o * jnp.tanh(c)
        hseq_ref[pl.ds(t, 1), :] = h          # feeds the next layer (cheap)
        return h, c

    h, _ = jax.lax.fori_loop(
        0, S, step,
        (jnp.zeros((1, HP), jnp.float32), jnp.zeros((1, HP), jnp.float32)),
        unroll=True)

    # ---- linear head on the last timestep of the last layer ----
    @pl.when(layer == last_layer)
    def _():
        # VPU multiply + lane reduction instead of a 256x128 MXU tile.
        o_ref[...] = (jnp.sum(h * wlin_ref[...], axis=-1, keepdims=True)
                      + blin_ref[...])


# ------------------------------------------------------------------
# pallas_call wrapper (jit-able)
# ------------------------------------------------------------------
def fused_forward(input_seq, packed):
    """Single-pallas_call forward for the whole network."""
    S = input_seq.shape[0]
    x = input_seq.reshape(S, DIM).astype(jnp.float32)
    y = pl.pallas_call(
        fused_lstm_kernel,
        out_shape=jax.ShapeDtypeStruct((1, 1), jnp.float32),
        grid_spec=pltpu.PrefetchScalarGridSpec(
            num_scalar_prefetch=0,
            grid=(NUM_LAYERS,),
            in_specs=[
                pl.BlockSpec((S, DIM), lambda l: (0, 0)),                # x
                pl.BlockSpec((1, 4 * HP), lambda l: (0, 0)),             # wih0
                pl.BlockSpec((1, HP, 4 * HP),
                             lambda l: (jnp.maximum(l - 1, 0), 0, 0)),   # wihh
                pl.BlockSpec((1, HP, 4 * HP), lambda l: (l, 0, 0)),      # whh
                pl.BlockSpec((1, 1, 4 * HP), lambda l: (l, 0, 0)),       # bias
                pl.BlockSpec((1, HP), lambda l: (0, 0)),                 # wlin
                pl.BlockSpec((1, 1), lambda l: (0, 0)),                  # blin
            ],
            out_specs=pl.BlockSpec((1, 1), lambda l: (0, 0)),
            scratch_shapes=[pltpu.VMEM((S, HP), jnp.float32),
                            pltpu.VMEM((S, 4 * HP), jnp.float32)],
        ),
        compiler_params=pltpu.CompilerParams(
            dimension_semantics=("arbitrary",)),   # layers are sequential
    )(x, packed["wih0"], packed["wihh"], packed["whh"], packed["b"],
      packed["wlin"], packed["blin"])
    return y[0, :DIM]                      # predictions[-1], shape (1,)


# ------------------------------------------------------------------
# Parameter construction (deterministic, PyTorch-style U(-k, k) init)
# ------------------------------------------------------------------
def make_params(key):
    k = 1.0 / jnp.sqrt(jnp.float32(H))
    params = {"layers": []}
    for layer in range(NUM_LAYERS):
        in_dim = DIM if layer == 0 else H
        key, k1, k2, k3, k4 = jax.random.split(key, 5)
        w_ih = jax.random.uniform(k1, (4 * H, in_dim), jnp.float32, -k, k)
        w_hh = jax.random.uniform(k2, (4 * H, H), jnp.float32, -k, k)
        b_ih = jax.random.uniform(k3, (4 * H,), jnp.float32, -k, k)
        b_hh = jax.random.uniform(k4, (4 * H,), jnp.float32, -k, k)
        params["layers"].append(dict(w_ih=w_ih, w_hh=w_hh, b_ih=b_ih, b_hh=b_hh))
    key, k1, k2 = jax.random.split(key, 3)
    params["w_lin"] = jax.random.uniform(k1, (DIM, H), jnp.float32, -k, k)
    params["b_lin"] = jax.random.uniform(k2, (DIM,), jnp.float32, -k, k)
    return params


# PyTorch gate order is [i | f | g | o]; kernel uses [i | f | o | g].
_GATE_PERM = (0, 1, 3, 2)


def _pad_gate_weight_T(w, in_pad, dtype):
    """w: (4H, in) PyTorch layout -> (in_pad, 4*HP) transposed/padded per gate,
    gates reordered to [i|f|o|g]."""
    in_dim = w.shape[1]
    w4 = w.reshape(4, H, in_dim)[jnp.array(_GATE_PERM)]
    out = jnp.zeros((4, HP, in_pad), jnp.float32)
    out = out.at[:, :H, :in_dim].set(w4)
    return out.transpose(2, 0, 1).reshape(in_pad, 4 * HP).astype(dtype)


def _pad_gate_bias(b_ih, b_hh):
    b = (b_ih + b_hh).reshape(4, H)[jnp.array(_GATE_PERM)]
    out = jnp.zeros((4, HP), jnp.float32).at[:, :H].set(b)
    return out.reshape(1, 4 * HP)


def pack_params(params):
    """One-time padding/transposition/casting into kernel layout (hoisted out
    of the forward pass)."""
    layers = params["layers"]
    # Layer-0 input weights feed a VPU broadcast multiply -> keep f32.
    wih0 = _pad_gate_weight_T(layers[0]["w_ih"], 1, jnp.float32)   # (1, 4*HP)
    # Matmul operands: bf16 weights, f32 accumulation in-kernel.
    wihh = jnp.stack([_pad_gate_weight_T(p["w_ih"], HP, jnp.bfloat16)
                      for p in layers[1:]])                        # (L-1, HP, 4*HP)
    whh = jnp.stack([_pad_gate_weight_T(p["w_hh"], HP, jnp.bfloat16)
                     for p in layers])                             # (L, HP, 4*HP)
    b = jnp.stack([_pad_gate_bias(p["b_ih"], p["b_hh"])
                   for p in layers])                               # (L, 1, 4*HP)
    # Linear head as a (1, HP) row for a VPU mul + lane reduce (f32).
    wlin = jnp.zeros((1, HP), jnp.float32).at[:, :H].set(params["w_lin"])
    blin = params["b_lin"].reshape(1, 1).astype(jnp.float32)
    return dict(wih0=wih0, wihh=wihh, whh=whh, b=b, wlin=wlin, blin=blin)


# ------------------------------------------------------------------
# Pure-JAX reference (unpadded, f32) for correctness check
# ------------------------------------------------------------------
def lstm_forward_ref(input_seq, params):
    S = input_seq.shape[0]
    x_seq = input_seq.reshape(S, -1).astype(jnp.float32)
    layer_in = x_seq
    for p in params["layers"]:
        h = jnp.zeros((H,), jnp.float32)
        c = jnp.zeros((H,), jnp.float32)
        outs = []
        for t in range(S):
            gates = p["w_ih"] @ layer_in[t] + p["b_ih"] + p["w_hh"] @ h + p["b_hh"]
            i = jax.nn.sigmoid(gates[0 * H:1 * H])
            f = jax.nn.sigmoid(gates[1 * H:2 * H])
            g = jnp.tanh(gates[2 * H:3 * H])
            o = jax.nn.sigmoid(gates[3 * H:4 * H])
            c = f * c + i * g
            h = o * jnp.tanh(c)
            outs.append(h)
        layer_in = jnp.stack(outs)
    return params["w_lin"] @ layer_in[-1] + params["b_lin"]


if __name__ == "__main__":
    key = jax.random.PRNGKey(0)
    kp, kx = jax.random.split(key)
    params = make_params(kp)
    packed = pack_params(params)                 # packed ONCE, outside the jit
    input_seq = jax.random.normal(kx, (SEQ, DIM), jnp.float32)

    forward = jax.jit(fused_forward)
    out = jax.block_until_ready(forward(input_seq, packed))
    ref = jax.block_until_ready(lstm_forward_ref(input_seq, params))

    assert out.shape == (DIM,), out.shape
    # bf16 matmul operands (f32 accumulation) through an 8-step x 3-layer
    # recurrence -> loosened tolerance vs. the pure-f32 reference.
    assert jnp.allclose(out, ref, atol=3e-2, rtol=3e-2), (out, ref)
    print("KERNEL_OK")
</pallas_src>

<mosaic_0001>
module attributes {stable_mosaic.version = 11 : i64} {
  func.func @fused_lstm_kernel(%arg0: i32, %arg1: memref<8x1xf32, #tpu.memory_space<vmem>>, %arg2: memref<1x1024xf32, #tpu.memory_space<vmem>>, %arg3: memref<1x256x1024xbf16, #tpu.memory_space<vmem>>, %arg4: memref<1x256x1024xbf16, #tpu.memory_space<vmem>>, %arg5: memref<1x1x1024xf32, #tpu.memory_space<vmem>>, %arg6: memref<1x256xf32, #tpu.memory_space<vmem>>, %arg7: memref<1x1xf32, #tpu.memory_space<vmem>>, %arg8: memref<1x1xf32, #tpu.memory_space<vmem>>, %arg9: memref<8x256xf32, #tpu.memory_space<vmem>>, %arg10: memref<8x1024xf32, #tpu.memory_space<vmem>>) attributes {dimension_semantics = [#tpu.dimension_semantics<arbitrary>], iteration_bounds = array<i64: 3>, scalar_prefetch = 0 : i64, scratch_operands = 2 : i64, tpu.core_type = #tpu.core_type<tc>, window_params = [{pipeline_mode = #tpu.pipeline_mode<synchronous>, transform_indices = @transform_0, window_bounds = array<i64: 8, 1>}, {pipeline_mode = #tpu.pipeline_mode<synchronous>, transform_indices = @transform_1, window_bounds = array<i64: 1, 1024>}, {transform_indices = @transform_2, window_bounds = array<i64: 1, 256, 1024>}, {transform_indices = @transform_3, window_bounds = array<i64: 1, 256, 1024>}, {transform_indices = @transform_4, window_bounds = array<i64: 1, 1, 1024>}, {pipeline_mode = #tpu.pipeline_mode<synchronous>, transform_indices = @transform_5, window_bounds = array<i64: 1, 256>}, {pipeline_mode = #tpu.pipeline_mode<synchronous>, transform_indices = @transform_6, window_bounds = array<i64: 1, 1>}, {pipeline_mode = #tpu.pipeline_mode<synchronous>, transform_indices = @transform_7, window_bounds = array<i64: 1, 1>}]} {
    %c0_i32 = arith.constant 0 : i32
    %0 = arith.cmpi eq, %arg0, %c0_i32 : i32
    %1 = arith.extui %0 : i1 to i32
    %c0_i32_0 = arith.constant 0 : i32
    %2 = arith.cmpi ne, %1, %c0_i32_0 : i32
    scf.if %2 {
      %c0_44 = arith.constant 0 : index
      %c0_45 = arith.constant 0 : index
      %207 = vector.load %arg1[%c0_44, %c0_45] : memref<8x1xf32, #tpu.memory_space<vmem>>, vector<8x1xf32>
      %c0_46 = arith.constant 0 : index
      %c0_47 = arith.constant 0 : index
      %208 = vector.load %arg2[%c0_46, %c0_47] : memref<1x1024xf32, #tpu.memory_space<vmem>>, vector<1x1024xf32>
      %209 = vector.broadcast %207 : vector<8x1xf32> to vector<8x1024xf32>
      %210 = vector.broadcast %208 : vector<1x1024xf32> to vector<8x1024xf32>
      %211 = arith.mulf %209, %210 : vector<8x1024xf32>
      %c0_48 = arith.constant 0 : index
      %c0_49 = arith.constant 0 : index
      %212 = vector.load %arg10[%c0_48, %c0_49] : memref<8x1024xf32, #tpu.memory_space<vmem>>, vector<8x1024xf32>
      tpu.vector_store %arg10[%c0_48, %c0_49], %211 {strides = array<i32>} : memref<8x1024xf32, #tpu.memory_space<vmem>>, vector<8x1024xf32>,
      %cst_50 = arith.constant 0.000000e+00 : f32
      %213 = vector.broadcast %cst_50 : f32 to vector<1x1xf32>
      %c0_51 = arith.constant 0 : index
      %c0_52 = arith.constant 0 : index
      %214 = vector.load %arg8[%c0_51, %c0_52] : memref<1x1xf32, #tpu.memory_space<vmem>>, vector<1x1xf32>
      tpu.vector_store %arg8[%c0_51, %c0_52], %213 {strides = array<i32>} : memref<1x1xf32, #tpu.memory_space<vmem>>, vector<1x1xf32>,
    } else {
    }
    %c0_i32_1 = arith.constant 0 : i32
    %3 = arith.cmpi sgt, %arg0, %c0_i32_1 : i32
    %4 = arith.extui %3 : i1 to i32
    %c0_i32_2 = arith.constant 0 : i32
    %5 = arith.cmpi ne, %4, %c0_i32_2 : i32
    scf.if %5 {
      %c0_44 = arith.constant 0 : index
      %c0_45 = arith.constant 0 : index
      %207 = vector.load %arg9[%c0_44, %c0_45] : memref<8x256xf32, #tpu.memory_space<vmem>>, vector<8x256xf32>
      %208 = arith.truncf %207 : vector<8x256xf32> to vector<8x256xbf16>
      %c0_46 = arith.constant 0 : index
      %c0_47 = arith.constant 0 : index
      %c0_48 = arith.constant 0 : index
      %209 = vector.load %arg3[%c0_46, %c0_47, %c0_48] : memref<1x256x1024xbf16, #tpu.memory_space<vmem>>, vector<1x256x1024xbf16>
      %210 = vector.shape_cast %209 : vector<1x256x1024xbf16> to vector<256x1024xbf16>
      %cst_49 = arith.constant dense<0.000000e+00> : vector<8x1024xf32>
      %211 = tpu.matmul %208, %210, %cst_49 {dimension_numbers = #tpu.dot_dimension_numbers<[1], [0], [0], [1], [0, 0, 1, 1], [], []>} : vector<8x256xbf16>, vector<256x1024xbf16>, vector<8x1024xf32> -> vector<8x1024xf32>
      %c0_50 = arith.constant 0 : index
      %c0_51 = arith.constant 0 : index
      %212 = vector.load %arg10[%c0_50, %c0_51] : memref<8x1024xf32, #tpu.memory_space<vmem>>, vector<8x1024xf32>
      tpu.vector_store %arg10[%c0_50, %c0_51], %211 {strides = array<i32>} : memref<8x1024xf32, #tpu.memory_space<vmem>>, vector<8x1024xf32>,
    } else {
    }
    %c0 = arith.constant 0 : index
    %c0_3 = arith.constant 0 : index
    %c0_4 = arith.constant 0 : index
    %6 = vector.load %arg4[%c0, %c0_3, %c0_4] : memref<1x256x1024xbf16, #tpu.memory_space<vmem>>, vector<1x256x1024xbf16>
    %7 = vector.shape_cast %6 : vector<1x256x1024xbf16> to vector<256x1024xbf16>
    %c0_5 = arith.constant 0 : index
    %c0_6 = arith.constant 0 : index
    %c0_7 = arith.constant 0 : index
    %8 = vector.load %arg5[%c0_5, %c0_6, %c0_7] : memref<1x1x1024xf32, #tpu.memory_space<vmem>>, vector<1x1x1024xf32>
    %9 = vector.shape_cast %8 : vector<1x1x1024xf32> to vector<1x1024xf32>
    %cst = arith.constant 0.000000e+00 : f32
    %10 = vector.broadcast %cst : f32 to vector<1x256xf32>
    %cst_8 = arith.constant 0.000000e+00 : f32
    %11 = vector.broadcast %cst_8 : f32 to vector<1x256xf32>
    %c0_i32_9 = arith.constant 0 : i32
    %12 = arith.truncf %10 : vector<1x256xf32> to vector<1x256xbf16>
    %cst_10 = arith.constant dense<0.000000e+00> : vector<1x1024xf32>
    %13 = tpu.matmul %12, %7, %cst_10 {dimension_numbers = #tpu.dot_dimension_numbers<[1], [0], [0], [1], [0, 0, 1, 1], [], []>} : vector<1x256xbf16>, vector<256x1024xbf16>, vector<1x1024xf32> -> vector<1x1024xf32>
    %14 = arith.index_cast %c0_i32_9 : i32 to index
    %c0_11 = arith.constant 0 : index
    %15 = vector.load %arg10[%14, %c0_11] : memref<8x1024xf32, #tpu.memory_space<vmem>>, vector<1x1024xf32>
    %16 = arith.addf %13, %15 : vector<1x1024xf32>
    %17 = arith.addf %16, %9 : vector<1x1024xf32>
    %18 = vector.extract_strided_slice %17 {offsets = [0, 0], sizes = [1, 768], strides = [1, 1]} : vector<1x1024xf32> to vector<1x768xf32>
    %19 = arith.negf %18 : vector<1x768xf32>
    %20 = math.exp %19 : vector<1x768xf32>
    %cst_12 = arith.constant 1.000000e+00 : f32
    %21 = vector.broadcast %cst_12 : f32 to vector<1x768xf32>
    %22 = arith.addf %21, %20 : vector<1x768xf32>
    %23 = arith.divf %21, %22 : vector<1x768xf32>
    %24 = vector.extract_strided_slice %17 {offsets = [0, 768], sizes = [1, 256], strides = [1, 1]} : vector<1x1024xf32> to vector<1x256xf32>
    %25 = math.tanh %24 : vector<1x256xf32>
    %26 = vector.extract_strided_slice %23 {offsets = [0, 0], sizes = [1, 256], strides = [1, 1]} : vector<1x768xf32> to vector<1x256xf32>
    %27 = vector.extract_strided_slice %23 {offsets = [0, 256], sizes = [1, 256], strides = [1, 1]} : vector<1x768xf32> to vector<1x256xf32>
    %28 = vector.extract_strided_slice %23 {offsets = [0, 512], sizes = [1, 256], strides = [1, 1]} : vector<1x768xf32> to vector<1x256xf32>
    %29 = arith.mulf %27, %11 : vector<1x256xf32>
    %30 = arith.mulf %26, %25 : vector<1x256xf32>
    %31 = arith.addf %29, %30 : vector<1x256xf32>
    %32 = math.tanh %31 : vector<1x256xf32>
    %33 = arith.mulf %28, %32 : vector<1x256xf32>
    %34 = arith.index_cast %c0_i32_9 : i32 to index
    %c0_13 = arith.constant 0 : index
    %35 = vector.load %arg9[%34, %c0_13] : memref<8x256xf32, #tpu.memory_space<vmem>>, vector<1x256xf32>
    tpu.vector_store %arg9[%34, %c0_13], %33 {strides = array<i32>} : memref<8x256xf32, #tpu.memory_space<vmem>>, vector<1x256xf32>,
    %c1_i32 = arith.constant 1 : i32
    %36 = arith.truncf %33 : vector<1x256xf32> to vector<1x256xbf16>
    %cst_14 = arith.constant dense<0.000000e+00> : vector<1x1024xf32>
    %37 = tpu.matmul %36, %7, %cst_14 {dimension_numbers = #tpu.dot_dimension_numbers<[1], [0], [0], [1], [0, 0, 1, 1], [], []>} : vector<1x256xbf16>, vector<256x1024xbf16>, vector<1x1024xf32> -> vector<1x1024xf32>
    %38 = arith.index_cast %c1_i32 : i32 to index
    %c0_15 = arith.constant 0 : index
    %39 = vector.load %arg10[%38, %c0_15] : memref<8x1024xf32, #tpu.memory_space<vmem>>, vector<1x1024xf32>
    %40 = arith.addf %37, %39 : vector<1x1024xf32>
    %41 = arith.addf %40, %9 : vector<1x1024xf32>
    %42 = vector.extract_strided_slice %41 {offsets = [0, 0], sizes = [1, 768], strides = [1, 1]} : vector<1x1024xf32> to vector<1x768xf32>
    %43 = arith.negf %42 : vector<1x768xf32>
    %44 = math.exp %43 : vector<1x768xf32>
    %cst_16 = arith.constant 1.000000e+00 : f32
    %45 = vector.broadcast %cst_16 : f32 to vector<1x768xf32>
    %46 = arith.addf %45, %44 : vector<1x768xf32>
    %47 = arith.divf %45, %46 : vector<1x768xf32>
    %48 = vector.extract_strided_slice %41 {offsets = [0, 768], sizes = [1, 256], strides = [1, 1]} : vector<1x1024xf32> to vector<1x256xf32>
    %49 = math.tanh %48 : vector<1x256xf32>
    %50 = vector.extract_strided_slice %47 {offsets = [0, 0], sizes = [1, 256], strides = [1, 1]} : vector<1x768xf32> to vector<1x256xf32>
    %51 = vector.extract_strided_slice %47 {offsets = [0, 256], sizes = [1, 256], strides = [1, 1]} : vector<1x768xf32> to vector<1x256xf32>
    %52 = vector.extract_strided_slice %47 {offsets = [0, 512], sizes = [1, 256], strides = [1, 1]} : vector<1x768xf32> to vector<1x256xf32>
    %53 = arith.mulf %51, %31 : vector<1x256xf32>
    %54 = arith.mulf %50, %49 : vector<1x256xf32>
    %55 = arith.addf %53, %54 : vector<1x256xf32>
    %56 = math.tanh %55 : vector<1x256xf32>
    %57 = arith.mulf %52, %56 : vector<1x256xf32>
    %58 = arith.index_cast %c1_i32 : i32 to index
    %c0_17 = arith.constant 0 : index
    %59 = vector.load %arg9[%58, %c0_17] : memref<8x256xf32, #tpu.memory_space<vmem>>, vector<1x256xf32>
    tpu.vector_store %arg9[%58, %c0_17], %57 {strides = array<i32>} : memref<8x256xf32, #tpu.memory_space<vmem>>, vector<1x256xf32>,
    %c2_i32 = arith.constant 2 : i32
    %60 = arith.truncf %57 : vector<1x256xf32> to vector<1x256xbf16>
    %cst_18 = arith.constant dense<0.000000e+00> : vector<1x1024xf32>
    %61 = tpu.matmul %60, %7, %cst_18 {dimension_numbers = #tpu.dot_dimension_numbers<[1], [0], [0], [1], [0, 0, 1, 1], [], []>} : vector<1x256xbf16>, vector<256x1024xbf16>, vector<1x1024xf32> -> vector<1x1024xf32>
    %62 = arith.index_cast %c2_i32 : i32 to index
    %c0_19 = arith.constant 0 : index
    %63 = vector.load %arg10[%62, %c0_19] : memref<8x1024xf32, #tpu.memory_space<vmem>>, vector<1x1024xf32>
    %64 = arith.addf %61, %63 : vector<1x1024xf32>
    %65 = arith.addf %64, %9 : vector<1x1024xf32>
    %66 = vector.extract_strided_slice %65 {offsets = [0, 0], sizes = [1, 768], strides = [1, 1]} : vector<1x1024xf32> to vector<1x768xf32>
    %67 = arith.negf %66 : vector<1x768xf32>
    %68 = math.exp %67 : vector<1x768xf32>
    %cst_20 = arith.constant 1.000000e+00 : f32
    %69 = vector.broadcast %cst_20 : f32 to vector<1x768xf32>
    %70 = arith.addf %69, %68 : vector<1x768xf32>
    %71 = arith.divf %69, %70 : vector<1x768xf32>
    %72 = vector.extract_strided_slice %65 {offsets = [0, 768], sizes = [1, 256], strides = [1, 1]} : vector<1x1024xf32> to vector<1x256xf32>
    %73 = math.tanh %72 : vector<1x256xf32>
    %74 = vector.extract_strided_slice %71 {offsets = [0, 0], sizes = [1, 256], strides = [1, 1]} : vector<1x768xf32> to vector<1x256xf32>
    %75 = vector.extract_strided_slice %71 {offsets = [0, 256], sizes = [1, 256], strides = [1, 1]} : vector<1x768xf32> to vector<1x256xf32>
    %76 = vector.extract_strided_slice %71 {offsets = [0, 512], sizes = [1, 256], strides = [1, 1]} : vector<1x768xf32> to vector<1x256xf32>
    %77 = arith.mulf %75, %55 : vector<1x256xf32>
    %78 = arith.mulf %74, %73 : vector<1x256xf32>
    %79 = arith.addf %77, %78 : vector<1x256xf32>
    %80 = math.tanh %79 : vector<1x256xf32>
    %81 = arith.mulf %76, %80 : vector<1x256xf32>
    %82 = arith.index_cast %c2_i32 : i32 to index
    %c0_21 = arith.constant 0 : index
    %83 = vector.load %arg9[%82, %c0_21] : memref<8x256xf32, #tpu.memory_space<vmem>>, vector<1x256xf32>
    tpu.vector_store %arg9[%82, %c0_21], %81 {strides = array<i32>} : memref<8x256xf32, #tpu.memory_space<vmem>>, vector<1x256xf32>,
    %c3_i32 = arith.constant 3 : i32
    %84 = arith.truncf %81 : vector<1x256xf32> to vector<1x256xbf16>
    %cst_22 = arith.constant dense<0.000000e+00> : vector<1x1024xf32>
    %85 = tpu.matmul %84, %7, %cst_22 {dimension_numbers = #tpu.dot_dimension_numbers<[1], [0], [0], [1], [0, 0, 1, 1], [], []>} : vector<1x256xbf16>, vector<256x1024xbf16>, vector<1x1024xf32> -> vector<1x1024xf32>
    %86 = arith.index_cast %c3_i32 : i32 to index
    %c0_23 = arith.constant 0 : index
    %87 = vector.load %arg10[%86, %c0_23] : memref<8x1024xf32, #tpu.memory_space<vmem>>, vector<1x1024xf32>
    %88 = arith.addf %85, %87 : vector<1x1024xf32>
    %89 = arith.addf %88, %9 : vector<1x1024xf32>
    %90 = vector.extract_strided_slice %89 {offsets = [0, 0], sizes = [1, 768], strides = [1, 1]} : vector<1x1024xf32> to vector<1x768xf32>
    %91 = arith.negf %90 : vector<1x768xf32>
    %92 = math.exp %91 : vector<1x768xf32>
    %cst_24 = arith.constant 1.000000e+00 : f32
    %93 = vector.broadcast %cst_24 : f32 to vector<1x768xf32>
    %94 = arith.addf %93, %92 : vector<1x768xf32>
    %95 = arith.divf %93, %94 : vector<1x768xf32>
    %96 = vector.extract_strided_slice %89 {offsets = [0, 768], sizes = [1, 256], strides = [1, 1]} : vector<1x1024xf32> to vector<1x256xf32>
    %97 = math.tanh %96 : vector<1x256xf32>
    %98 = vector.extract_strided_slice %95 {offsets = [0, 0], sizes = [1, 256], strides = [1, 1]} : vector<1x768xf32> to vector<1x256xf32>
    %99 = vector.extract_strided_slice %95 {offsets = [0, 256], sizes = [1, 256], strides = [1, 1]} : vector<1x768xf32> to vector<1x256xf32>
    %100 = vector.extract_strided_slice %95 {offsets = [0, 512], sizes = [1, 256], strides = [1, 1]} : vector<1x768xf32> to vector<1x256xf32>
    %101 = arith.mulf %99, %79 : vector<1x256xf32>
    %102 = arith.mulf %98, %97 : vector<1x256xf32>
    %103 = arith.addf %101, %102 : vector<1x256xf32>
    %104 = math.tanh %103 : vector<1x256xf32>
    %105 = arith.mulf %100, %104 : vector<1x256xf32>
    %106 = arith.index_cast %c3_i32 : i32 to index
    %c0_25 = arith.constant 0 : index
    %107 = vector.load %arg9[%106, %c0_25] : memref<8x256xf32, #tpu.memory_space<vmem>>, vector<1x256xf32>
    tpu.vector_store %arg9[%106, %c0_25], %105 {strides = array<i32>} : memref<8x256xf32, #tpu.memory_space<vmem>>, vector<1x256xf32>,
    %c4_i32 = arith.constant 4 : i32
    %108 = arith.truncf %105 : vector<1x256xf32> to vector<1x256xbf16>
    %cst_26 = arith.constant dense<0.000000e+00> : vector<1x1024xf32>
    %109 = tpu.matmul %108, %7, %cst_26 {dimension_numbers = #tpu.dot_dimension_numbers<[1], [0], [0], [1], [0, 0, 1, 1], [], []>} : vector<1x256xbf16>, vector<256x1024xbf16>, vector<1x1024xf32> -> vector<1x1024xf32>
    %110 = arith.index_cast %c4_i32 : i32 to index
    %c0_27 = arith.constant 0 : index
    %111 = vector.load %arg10[%110, %c0_27] : memref<8x1024xf32, #tpu.memory_space<vmem>>, vector<1x1024xf32>
    %112 = arith.addf %109, %111 : vector<1x1024xf32>
    %113 = arith.addf %112, %9 : vector<1x1024xf32>
    %114 = vector.extract_strided_slice %113 {offsets = [0, 0], sizes = [1, 768], strides = [1, 1]} : vector<1x1024xf32> to vector<1x768xf32>
    %115 = arith.negf %114 : vector<1x768xf32>
    %116 = math.exp %115 : vector<1x768xf32>
    %cst_28 = arith.constant 1.000000e+00 : f32
    %117 = vector.broadcast %cst_28 : f32 to vector<1x768xf32>
    %118 = arith.addf %117, %116 : vector<1x768xf32>
    %119 = arith.divf %117, %118 : vector<1x768xf32>
    %120 = vector.extract_strided_slice %113 {offsets = [0, 768], sizes = [1, 256], strides = [1, 1]} : vector<1x1024xf32> to vector<1x256xf32>
    %121 = math.tanh %120 : vector<1x256xf32>
    %122 = vector.extract_strided_slice %119 {offsets = [0, 0], sizes = [1, 256], strides = [1, 1]} : vector<1x768xf32> to vector<1x256xf32>
    %123 = vector.extract_strided_slice %119 {offsets = [0, 256], sizes = [1, 256], strides = [1, 1]} : vector<1x768xf32> to vector<1x256xf32>
    %124 = vector.extract_strided_slice %119 {offsets = [0, 512], sizes = [1, 256], strides = [1, 1]} : vector<1x768xf32> to vector<1x256xf32>
    %125 = arith.mulf %123, %103 : vector<1x256xf32>
    %126 = arith.mulf %122, %121 : vector<1x256xf32>
    %127 = arith.addf %125, %126 : vector<1x256xf32>
    %128 = math.tanh %127 : vector<1x256xf32>
    %129 = arith.mulf %124, %128 : vector<1x256xf32>
    %130 = arith.index_cast %c4_i32 : i32 to index
    %c0_29 = arith.constant 0 : index
    %131 = vector.load %arg9[%130, %c0_29] : memref<8x256xf32, #tpu.memory_space<vmem>>, vector<1x256xf32>
    tpu.vector_store %arg9[%130, %c0_29], %129 {strides = array<i32>} : memref<8x256xf32, #tpu.memory_space<vmem>>, vector<1x256xf32>,
    %c5_i32 = arith.constant 5 : i32
    %132 = arith.truncf %129 : vector<1x256xf32> to vector<1x256xbf16>
    %cst_30 = arith.constant dense<0.000000e+00> : vector<1x1024xf32>
    %133 = tpu.matmul %132, %7, %cst_30 {dimension_numbers = #tpu.dot_dimension_numbers<[1], [0], [0], [1], [0, 0, 1, 1], [], []>} : vector<1x256xbf16>, vector<256x1024xbf16>, vector<1x1024xf32> -> vector<1x1024xf32>
    %134 = arith.index_cast %c5_i32 : i32 to index
    %c0_31 = arith.constant 0 : index
    %135 = vector.load %arg10[%134, %c0_31] : memref<8x1024xf32, #tpu.memory_space<vmem>>, vector<1x1024xf32>
    %136 = arith.addf %133, %135 : vector<1x1024xf32>
    %137 = arith.addf %136, %9 : vector<1x1024xf32>
    %138 = vector.extract_strided_slice %137 {offsets = [0, 0], sizes = [1, 768], strides = [1, 1]} : vector<1x1024xf32> to vector<1x768xf32>
    %139 = arith.negf %138 : vector<1x768xf32>
    %140 = math.exp %139 : vector<1x768xf32>
    %cst_32 = arith.constant 1.000000e+00 : f32
    %141 = vector.broadcast %cst_32 : f32 to vector<1x768xf32>
    %142 = arith.addf %141, %140 : vector<1x768xf32>
    %143 = arith.divf %141, %142 : vector<1x768xf32>
    %144 = vector.extract_strided_slice %137 {offsets = [0, 768], sizes = [1, 256], strides = [1, 1]} : vector<1x1024xf32> to vector<1x256xf32>
    %145 = math.tanh %144 : vector<1x256xf32>
    %146 = vector.extract_strided_slice %143 {offsets = [0, 0], sizes = [1, 256], strides = [1, 1]} : vector<1x768xf32> to vector<1x256xf32>
    %147 = vector.extract_strided_slice %143 {offsets = [0, 256], sizes = [1, 256], strides = [1, 1]} : vector<1x768xf32> to vector<1x256xf32>
    %148 = vector.extract_strided_slice %143 {offsets = [0, 512], sizes = [1, 256], strides = [1, 1]} : vector<1x768xf32> to vector<1x256xf32>
    %149 = arith.mulf %147, %127 : vector<1x256xf32>
    %150 = arith.mulf %146, %145 : vector<1x256xf32>
    %151 = arith.addf %149, %150 : vector<1x256xf32>
    %152 = math.tanh %151 : vector<1x256xf32>
    %153 = arith.mulf %148, %152 : vector<1x256xf32>
    %154 = arith.index_cast %c5_i32 : i32 to index
    %c0_33 = arith.constant 0 : index
    %155 = vector.load %arg9[%154, %c0_33] : memref<8x256xf32, #tpu.memory_space<vmem>>, vector<1x256xf32>
    tpu.vector_store %arg9[%154, %c0_33], %153 {strides = array<i32>} : memref<8x256xf32, #tpu.memory_space<vmem>>, vector<1x256xf32>,
    %c6_i32 = arith.constant 6 : i32
    %156 = arith.truncf %153 : vector<1x256xf32> to vector<1x256xbf16>
    %cst_34 = arith.constant dense<0.000000e+00> : vector<1x1024xf32>
    %157 = tpu.matmul %156, %7, %cst_34 {dimension_numbers = #tpu.dot_dimension_numbers<[1], [0], [0], [1], [0, 0, 1, 1], [], []>} : vector<1x256xbf16>, vector<256x1024xbf16>, vector<1x1024xf32> -> vector<1x1024xf32>
    %158 = arith.index_cast %c6_i32 : i32 to index
    %c0_35 = arith.constant 0 : index
    %159 = vector.load %arg10[%158, %c0_35] : memref<8x1024xf32, #tpu.memory_space<vmem>>, vector<1x1024xf32>
    %160 = arith.addf %157, %159 : vector<1x1024xf32>
    %161 = arith.addf %160, %9 : vector<1x1024xf32>
    %162 = vector.extract_strided_slice %161 {offsets = [0, 0], sizes = [1, 768], strides = [1, 1]} : vector<1x1024xf32> to vector<1x768xf32>
    %163 = arith.negf %162 : vector<1x768xf32>
    %164 = math.exp %163 : vector<1x768xf32>
    %cst_36 = arith.constant 1.000000e+00 : f32
    %165 = vector.broadcast %cst_36 : f32 to vector<1x768xf32>
    %166 = arith.addf %165, %164 : vector<1x768xf32>
    %167 = arith.divf %165, %166 : vector<1x768xf32>
    %168 = vector.extract_strided_slice %161 {offsets = [0, 768], sizes = [1, 256], strides = [1, 1]} : vector<1x1024xf32> to vector<1x256xf32>
    %169 = math.tanh %168 : vector<1x256xf32>
    %170 = vector.extract_strided_slice %167 {offsets = [0, 0], sizes = [1, 256], strides = [1, 1]} : vector<1x768xf32> to vector<1x256xf32>
    %171 = vector.extract_strided_slice %167 {offsets = [0, 256], sizes = [1, 256], strides = [1, 1]} : vector<1x768xf32> to vector<1x256xf32>
    %172 = vector.extract_strided_slice %167 {offsets = [0, 512], sizes = [1, 256], strides = [1, 1]} : vector<1x768xf32> to vector<1x256xf32>
    %173 = arith.mulf %171, %151 : vector<1x256xf32>
    %174 = arith.mulf %170, %169 : vector<1x256xf32>
    %175 = arith.addf %173, %174 : vector<1x256xf32>
    %176 = math.tanh %175 : vector<1x256xf32>
    %177 = arith.mulf %172, %176 : vector<1x256xf32>
    %178 = arith.index_cast %c6_i32 : i32 to index
    %c0_37 = arith.constant 0 : index
    %179 = vector.load %arg9[%178, %c0_37] : memref<8x256xf32, #tpu.memory_space<vmem>>, vector<1x256xf32>
    tpu.vector_store %arg9[%178, %c0_37], %177 {strides = array<i32>} : memref<8x256xf32, #tpu.memory_space<vmem>>, vector<1x256xf32>,
    %c7_i32 = arith.constant 7 : i32
    %180 = arith.truncf %177 : vector<1x256xf32> to vector<1x256xbf16>
    %cst_38 = arith.constant dense<0.000000e+00> : vector<1x1024xf32>
    %181 = tpu.matmul %180, %7, %cst_38 {dimension_numbers = #tpu.dot_dimension_numbers<[1], [0], [0], [1], [0, 0, 1, 1], [], []>} : vector<1x256xbf16>, vector<256x1024xbf16>, vector<1x1024xf32> -> vector<1x1024xf32>
    %182 = arith.index_cast %c7_i32 : i32 to index
    %c0_39 = arith.constant 0 : index
    %183 = vector.load %arg10[%182, %c0_39] : memref<8x1024xf32, #tpu.memory_space<vmem>>, vector<1x1024xf32>
    %184 = arith.addf %181, %183 : vector<1x1024xf32>
    %185 = arith.addf %184, %9 : vector<1x1024xf32>
    %186 = vector.extract_strided_slice %185 {offsets = [0, 0], sizes = [1, 768], strides = [1, 1]} : vector<1x1024xf32> to vector<1x768xf32>
    %187 = arith.negf %186 : vector<1x768xf32>
    %188 = math.exp %187 : vector<1x768xf32>
    %cst_40 = arith.constant 1.000000e+00 : f32
    %189 = vector.broadcast %cst_40 : f32 to vector<1x768xf32>
    %190 = arith.addf %189, %188 : vector<1x768xf32>
    %191 = arith.divf %189, %190 : vector<1x768xf32>
    %192 = vector.extract_strided_slice %185 {offsets = [0, 768], sizes = [1, 256], strides = [1, 1]} : vector<1x1024xf32> to vector<1x256xf32>
    %193 = math.tanh %192 : vector<1x256xf32>
    %194 = vector.extract_strided_slice %191 {offsets = [0, 0], sizes = [1, 256], strides = [1, 1]} : vector<1x768xf32> to vector<1x256xf32>
    %195 = vector.extract_strided_slice %191 {offsets = [0, 256], sizes = [1, 256], strides = [1, 1]} : vector<1x768xf32> to vector<1x256xf32>
    %196 = vector.extract_strided_slice %191 {offsets = [0, 512], sizes = [1, 256], strides = [1, 1]} : vector<1x768xf32> to vector<1x256xf32>
    %197 = arith.mulf %195, %175 : vector<1x256xf32>
    %198 = arith.mulf %194, %193 : vector<1x256xf32>
    %199 = arith.addf %197, %198 : vector<1x256xf32>
    %200 = math.tanh %199 : vector<1x256xf32>
    %201 = arith.mulf %196, %200 : vector<1x256xf32>
    %202 = arith.index_cast %c7_i32 : i32 to index
    %c0_41 = arith.constant 0 : index
    %203 = vector.load %arg9[%202, %c0_41] : memref<8x256xf32, #tpu.memory_space<vmem>>, vector<1x256xf32>
    tpu.vector_store %arg9[%202, %c0_41], %201 {strides = array<i32>} : memref<8x256xf32, #tpu.memory_space<vmem>>, vector<1x256xf32>,
    %c8_i32 = arith.constant 8 : i32
    %c2_i32_42 = arith.constant 2 : i32
    %204 = arith.cmpi eq, %arg0, %c2_i32_42 : i32
    %205 = arith.extui %204 : i1 to i32
    %c0_i32_43 = arith.constant 0 : i32
    %206 = arith.cmpi ne, %205, %c0_i32_43 : i32
    scf.if %206 {
      %c0_44 = arith.constant 0 : index
      %c0_45 = arith.constant 0 : index
      %207 = vector.load %arg6[%c0_44, %c0_45] : memref<1x256xf32, #tpu.memory_space<vmem>>, vector<1x256xf32>
      %208 = arith.mulf %201, %207 : vector<1x256xf32>
      %cst_46 = arith.constant dense<0.000000e+00> : vector<1xf32>
      %209 = vector.multi_reduction <add>, %208, %cst_46 [1] : vector<1x256xf32> to vector<1xf32>
      %210 = vector.shape_cast %209 : vector<1xf32> to vector<1x1xf32>
      %c0_47 = arith.constant 0 : index
      %c0_48 = arith.constant 0 : index
      %211 = vector.load %arg7[%c0_47, %c0_48] : memref<1x1xf32, #tpu.memory_space<vmem>>, vector<1x1xf32>
      %212 = arith.addf %210, %211 : vector<1x1xf32>
      %c0_49 = arith.constant 0 : index
      %c0_50 = arith.constant 0 : index
      %213 = vector.load %arg8[%c0_49, %c0_50] : memref<1x1xf32, #tpu.memory_space<vmem>>, vector<1x1xf32>
      tpu.vector_store %arg8[%c0_49, %c0_50], %212 {strides = array<i32>} : memref<1x1xf32, #tpu.memory_space<vmem>>, vector<1x1xf32>,
    } else {
    }
    return
  }
  func.func @transform_0(%arg0: i32) -> (i32, i32) {
    %c0_i32 = arith.constant 0 : i32
    %c0_i32_0 = arith.constant 0 : i32
    %c0_i32_1 = arith.constant 0 : i32
    return %c0_i32, %c0_i32_0 : i32, i32
  }
  func.func @transform_1(%arg0: i32) -> (i32, i32) {
    %c0_i32 = arith.constant 0 : i32
    %c0_i32_0 = arith.constant 0 : i32
    %c0_i32_1 = arith.constant 0 : i32
    return %c0_i32, %c0_i32_0 : i32, i32
  }
  func.func @transform_2(%arg0: i32) -> (i32, i32, i32) {
    %c1_i32 = arith.constant 1 : i32
    %0 = arith.subi %arg0, %c1_i32 : i32
    %c0_i32 = arith.constant 0 : i32
    %1 = arith.maxsi %0, %c0_i32 : i32
    %c0_i32_0 = arith.constant 0 : i32
    %c0_i32_1 = arith.constant 0 : i32
    %c0_i32_2 = arith.constant 0 : i32
    return %1, %c0_i32_0, %c0_i32_1 : i32, i32, i32
  }
  func.func @transform_3(%arg0: i32) -> (i32, i32, i32) {
    %c0_i32 = arith.constant 0 : i32
    %c0_i32_0 = arith.constant 0 : i32
    %c0_i32_1 = arith.constant 0 : i32
    return %arg0, %c0_i32, %c0_i32_0 : i32, i32, i32
  }
  func.func @transform_4(%arg0: i32) -> (i32, i32, i32) {
    %c0_i32 = arith.constant 0 : i32
    %c0_i32_0 = arith.constant 0 : i32
    %c0_i32_1 = arith.constant 0 : i32
    return %arg0, %c0_i32, %c0_i32_0 : i32, i32, i32
  }
  func.func @transform_5(%arg0: i32) -> (i32, i32) {
    %c0_i32 = arith.constant 0 : i32
    %c0_i32_0 = arith.constant 0 : i32
    %c0_i32_1 = arith.constant 0 : i32
    return %c0_i32, %c0_i32_0 : i32, i32
  }
  func.func @transform_6(%arg0: i32) -> (i32, i32) {
    %c0_i32 = arith.constant 0 : i32
    %c0_i32_0 = arith.constant 0 : i32
    %c0_i32_1 = arith.constant 0 : i32
    return %c0_i32, %c0_i32_0 : i32, i32
  }
  func.func @transform_7(%arg0: i32) -> (i32, i32) {
    %c0_i32 = arith.constant 0 : i32
    %c0_i32_0 = arith.constant 0 : i32
    %c0_i32_1 = arith.constant 0 : i32
    return %c0_i32, %c0_i32_0 : i32, i32
  }
}

</mosaic_0001>

<llo_original>
// kernel: fused_forward.1
$region0: #{fused_forward.1}
  #allocation0 [shape = 'u32[]', space=smem, size = 0x4, offset = 0x4, fixed_abs, tag = 'smem constant byte address 0x4 - core index']
  #allocation1 [shape = 'u32[72,128]{1,0:T(1,128)}', space=vmem, size = 0x9000, scoped, tag = 'internal scratch']
  #allocation2 [shape = 'f32[8,256]{1,0:T(8,128)}', space=vmem, size = 0x2000, scoped, tag = 'scratch operand']
  #allocation3 [shape = 'f32[8,1024]{1,0:T(8,128)}', space=vmem, size = 0x8000, scoped, tag = 'scratch operand']
  #allocation4 [shape = 'f32[1,1]{1,0:T(1,128)S(1)}', space=vmem, size = 0x200, scoped, tag = 'scoped memory for fused_forward.1']
  %s0 = inlined_call_operand.vmem [shape: f32[8,1], index: 0, kind: input, shape index: {}]
  %s1 = inlined_call_operand.hbm [shape: f32[1,1024], index: 1, kind: input, shape index: {}]
  %s2 = inlined_call_operand.hbm [shape: bf16[2,256,1024], index: 2, kind: input, shape index: {}]
  %s3 = inlined_call_operand.hbm [shape: bf16[3,256,1024], index: 3, kind: input, shape index: {}]
  %s4 = inlined_call_operand.hbm [shape: f32[3,1,1024], index: 4, kind: input, shape index: {}]
  %s5 = inlined_call_operand.hbm [shape: f32[1,256], index: 5, kind: input, shape index: {}]
  %s6 = inlined_call_operand.<no memory space> [shape: f32[1,1], index: 6, kind: input, shape index: {}]
  %s7 = inlined_call_operand.hbm [shape: f32[1,1], index: 7, kind: output, shape index: {}]
  %s8 = sld [smem:[#allocation0]]
  $region93: #{fused_forward.1} parent=0
    _
  %s10 = ssub.s32 1, %s8
  %s11 = scalar_select 0, %s10, %s8
  %v12 = vstv %s6
  %13 = vst [vmem:[#allocation4] sm:$0x1] %v12
  $region1: #{fused_forward.1} parent=0
    #allocation5 [shape = 'u8[4096]{0}', space=vmem, size = 0x1000, scoped, tag = 'input window, operand 1, single buffered']
    #allocation6 [shape = 's32[2]{0}', space=sflag, size = 0x8, scoped, tag = 'scoped memory for fused_forward.1']
    #allocation7 [shape = 's32[2]{0}', space=sflag, size = 0x8, scoped, tag = 'scoped memory for fused_forward.1']
    #allocation8 [shape = 'u8[1048576]{0}', space=vmem, size = 0x100000, scoped, tag = 'input window, operand 2']
    #allocation9 [shape = 's32[2]{0}', space=sflag, size = 0x8, scoped, tag = 'scoped memory for fused_forward.1']
    #allocation10 [shape = 'u8[1048576]{0}', space=vmem, size = 0x100000, scoped, tag = 'input window, operand 3']
    #allocation11 [shape = 'u8[8192]{0}', space=vmem, size = 0x2000, scoped, tag = 'input window, operand 4']
    #allocation12 [shape = 's32[2]{0}', space=sflag, size = 0x8, scoped, tag = 'scoped memory for fused_forward.1']
    #allocation13 [shape = 'u8[1024]{0}', space=vmem, size = 0x400, scoped, tag = 'input window, operand 5, single buffered']
    #allocation14 [shape = 'u8[512]{0}', space=vmem, size = 0x400, scoped, tag = 'output window, operand 0, single buffered']
    %14 = vsyncpa [#allocation6], 0
    %15 = vsyncpa [#allocation9], 0
    %s16 = scalar_lea.sflag [#allocation9], 1
    %17 = vsyncpa %s16, 0
    %18 = vsyncpa [#allocation12], 0
    %s19 = scalar_lea.sflag [#allocation12], 1
    %20 = vsyncpa %s19, 0
    %21 = vsyncpa [#allocation7], 0
    loop: start=0, step=1, limit=5
    $region2: #{fused_forward.1} parent=1 // loop_pre_header
      _
    $region3: #{fused_forward.1} parent=1 // loop_header
      %s23 = sphi 0, %s27
      %p24 = scmp.ge.s32.totalorder %s23, 5
      %s31 = sphi 0, %s31
      %s33 = sphi 0, %s31
      %s34 = sphi 0, %s33
      %s48 = sphi 0, %s34
      %s52 = sphi 0, %s52
      %s54 = sphi 0, %s52
      %s55 = sphi 0, %s54
      %s69 = sphi 0, %s55
      %s81 = sphi 0, %s83
      %s84 = sphi 0, %s81
      %s85 = sphi 0, %s84
      %s101 = sphi 0, %s85
      %s107 = sphi 0, %s109
      %s110 = sphi 0, %s107
      %s111 = sphi 0, %s110
      %s127 = sphi 0, %s111
      %s133 = sphi 0, %s135
      %s136 = sphi 0, %s133
      %s137 = sphi 0, %s136
      %s153 = sphi 0, %s137
      %s157 = sphi 0, %s157
      %s159 = sphi 0, %s157
      %s160 = sphi 0, %s159
      %s174 = sphi 0, %s160
      %s178 = sphi 0, %s178
      %s180 = sphi 0, %s178
      %s181 = sphi 0, %s180
      %s195 = sphi 0, %s181
      %s199 = sphi 0, %s199
      %s201 = sphi 0, %s199
      %s202 = sphi 0, %s201
      %s216 = sphi 0, %s202
    $region4: #{fused_forward.1} parent=1 // loop_header_branch
      %26 = sbr.rel (%p24) target = $region8
    $region5: #{fused_forward.1} parent=1 // loop_body
      %s28 = ssub.s32 %s23, 1
      %s29 = ssub.s32 %s23, 2
      %s30 = sadd.s32 %s23, 1
      %s32 = sadd.s32 %s31, 1
      %p35 = scmp.eq.s32.totalorder %s23, 2
      %p36 = scmp.ne.s32.totalorder %s31, %s33
      %p37 = scmp.eq.s32.totalorder %s23, 0
      %p38 = por %p36, %p37
      %p39 = scmp.ne.s32.totalorder %s31, %s33
      %p40 = scmp.eq.s32.totalorder %s28, 2
      %p41 = por %p39, %p40
      %p42 = scmp.ne.s32.totalorder %s33, %s34
      %p43 = scmp.eq.s32.totalorder %s28, 0
      %p44 = por %p42, %p43
      %p45 = scmp.ne.s32.totalorder %s33, %s34
      %p46 = scmp.eq.s32.totalorder %s29, 2
      %p47 = por %p45, %p46
      %p49 = scmp.ne.s32.totalorder %s34, %s48
      %p50 = scmp.eq.s32.totalorder %s29, 0
      %p51 = por %p49, %p50
      %s53 = sadd.s32 %s52, 1
      %p56 = scmp.eq.s32.totalorder %s23, 2
      %p57 = scmp.ne.s32.totalorder %s52, %s54
      %p58 = scmp.eq.s32.totalorder %s23, 0
      %p59 = por %p57, %p58
      %p60 = scmp.ne.s32.totalorder %s52, %s54
      %p61 = scmp.eq.s32.totalorder %s28, 2
      %p62 = por %p60, %p61
      %p63 = scmp.ne.s32.totalorder %s54, %s55
      %p64 = scmp.eq.s32.totalorder %s28, 0
      %p65 = por %p63, %p64
      %p66 = scmp.ne.s32.totalorder %s54, %s55
      %p67 = scmp.eq.s32.totalorder %s29, 2
      %p68 = por %p66, %p67
      %p70 = scmp.ne.s32.totalorder %s55, %s69
      %p71 = scmp.eq.s32.totalorder %s29, 0
      %p72 = por %p70, %p71
      %s73 = ssub.s32 %s23, 1
      %p74 = scmp.gt.s32.totalorder %s73, 0
      %s75 = scalar_select %p74, %s73, 0
      %s76 = ssub.s32 %s30, 1
      %p77 = scmp.gt.s32.totalorder %s76, 0
      %s78 = scalar_select %p77, %s76, 0
      %s79 = ssub.s32 %s75, %s78
      %p80 = scmp.eq.s32.totalorder %s79, 0
      %s82 = sadd.s32 %s81, 1
      %s83 = scalar_select %p80, %s81, %s82
      %p86 = pneg %p80
      %p87 = scmp.eq.s32.totalorder %s23, 2
      %p88 = por %p86, %p87
      %p89 = scmp.ne.s32.totalorder %s81, %s84
      %p90 = scmp.eq.s32.totalorder %s23, 0
      %p91 = por %p89, %p90
      %p92 = scmp.ne.s32.totalorder %s81, %s84
      %p93 = scmp.eq.s32.totalorder %s28, 2
      %p94 = por %p92, %p93
      %p95 = scmp.ne.s32.totalorder %s84, %s85
      %p96 = scmp.eq.s32.totalorder %s28, 0
      %p97 = por %p95, %p96
      %p98 = scmp.ne.s32.totalorder %s84, %s85
      %p99 = scmp.eq.s32.totalorder %s29, 2
      %p100 = por %p98, %p99
      %p102 = scmp.ne.s32.totalorder %s85, %s101
      %p103 = scmp.eq.s32.totalorder %s29, 0
      %p104 = por %p102, %p103
      %s105 = ssub.s32 %s23, %s30
      %p106 = scmp.eq.s32.totalorder %s105, 0
      %s108 = sadd.s32 %s107, 1
      %s109 = scalar_select %p106, %s107, %s108
      %p112 = pneg %p106
      %p113 = scmp.eq.s32.totalorder %s23, 2
      %p114 = por %p112, %p113
      %p115 = scmp.ne.s32.totalorder %s107, %s110
      %p116 = scmp.eq.s32.totalorder %s23, 0
      %p117 = por %p115, %p116
      %p118 = scmp.ne.s32.totalorder %s107, %s110
      %p119 = scmp.eq.s32.totalorder %s28, 2
      %p120 = por %p118, %p119
      %p121 = scmp.ne.s32.totalorder %s110, %s111
      %p122 = scmp.eq.s32.totalorder %s28, 0
      %p123 = por %p121, %p122
      %p124 = scmp.ne.s32.totalorder %s110, %s111
      %p125 = scmp.eq.s32.totalorder %s29, 2
      %p126 = por %p124, %p125
      %p128 = scmp.ne.s32.totalorder %s111, %s127
      %p129 = scmp.eq.s32.totalorder %s29, 0
      %p130 = por %p128, %p129
      %s131 = ssub.s32 %s23, %s30
      %p132 = scmp.eq.s32.totalorder %s131, 0
      %s134 = sadd.s32 %s133, 1
      %s135 = scalar_select %p132, %s133, %s134
      %p138 = pneg %p132
      %p139 = scmp.eq.s32.totalorder %s23, 2
      %p140 = por %p138, %p139
      %p141 = scmp.ne.s32.totalorder %s133, %s136
      %p142 = scmp.eq.s32.totalorder %s23, 0
      %p143 = por %p141, %p142
      %p144 = scmp.ne.s32.totalorder %s133, %s136
      %p145 = scmp.eq.s32.totalorder %s28, 2
      %p146 = por %p144, %p145
      %p147 = scmp.ne.s32.totalorder %s136, %s137
      %p148 = scmp.eq.s32.totalorder %s28, 0
      %p149 = por %p147, %p148
      %p150 = scmp.ne.s32.totalorder %s136, %s137
      %p151 = scmp.eq.s32.totalorder %s29, 2
      %p152 = por %p150, %p151
      %p154 = scmp.ne.s32.totalorder %s137, %s153
      %p155 = scmp.eq.s32.totalorder %s29, 0
      %p156 = por %p154, %p155
      %s158 = sadd.s32 %s157, 1
      %p161 = scmp.eq.s32.totalorder %s23, 2
      %p162 = scmp.ne.s32.totalorder %s157, %s159
      %p163 = scmp.eq.s32.totalorder %s23, 0
      %p164 = por %p162, %p163
      %p165 = scmp.ne.s32.totalorder %s157, %s159
      %p166 = scmp.eq.s32.totalorder %s28, 2
      %p167 = por %p165, %p166
      %p168 = scmp.ne.s32.totalorder %s159, %s160
      %p169 = scmp.eq.s32.totalorder %s28, 0
      %p170 = por %p168, %p169
      %p171 = scmp.ne.s32.totalorder %s159, %s160
      %p172 = scmp.eq.s32.totalorder %s29, 2
      %p173 = por %p171, %p172
      %p175 = scmp.ne.s32.totalorder %s160, %s174
      %p176 = scmp.eq.s32.totalorder %s29, 0
      %p177 = por %p175, %p176
      %s179 = sadd.s32 %s178, 1
      %p182 = scmp.eq.s32.totalorder %s23, 2
      %p183 = scmp.ne.s32.totalorder %s178, %s180
      %p184 = scmp.eq.s32.totalorder %s23, 0
      %p185 = por %p183, %p184
      %p186 = scmp.ne.s32.totalorder %s178, %s180
      %p187 = scmp.eq.s32.totalorder %s28, 2
      %p188 = por %p186, %p187
      %p189 = scmp.ne.s32.totalorder %s180, %s181
      %p190 = scmp.eq.s32.totalorder %s28, 0
      %p191 = por %p189, %p190
      %p192 = scmp.ne.s32.totalorder %s180, %s181
      %p193 = scmp.eq.s32.totalorder %s29, 2
      %p194 = por %p192, %p193
      %p196 = scmp.ne.s32.totalorder %s181, %s195
      %p197 = scmp.eq.s32.totalorder %s29, 0
      %p198 = por %p196, %p197
      %s200 = sadd.s32 %s199, 1
      %p203 = scmp.eq.s32.totalorder %s23, 2
      %p204 = scmp.ne.s32.totalorder %s199, %s201
      %p205 = scmp.eq.s32.totalorder %s23, 0
      %p206 = por %p204, %p205
      %p207 = scmp.ne.s32.totalorder %s199, %s201
      %p208 = scmp.eq.s32.totalorder %s28, 2
      %p209 = por %p207, %p208
      %p210 = scmp.ne.s32.totalorder %s201, %s202
      %p211 = scmp.eq.s32.totalorder %s28, 0
      %p212 = por %p210, %p211
      %p213 = scmp.ne.s32.totalorder %s201, %s202
      %p214 = scmp.eq.s32.totalorder %s29, 2
      %p215 = por %p213, %p214
      %p217 = scmp.ne.s32.totalorder %s202, %s216
      %p218 = scmp.eq.s32.totalorder %s29, 0
      %p219 = por %p217, %p218
      %p220 = scmp.le.s32.totalorder 1, %s23
      %p221 = scmp.lt.s32.totalorder %s23, 4
      %p222 = pnand %p220, %p221
      %p223 = pneg %p222
      // Predicated region
      $region9: #{fused_forward.1} parent=5 // pred_check
        _
      $region10: #{fused_forward.1} parent=5 // pred_check_branch
        %225 = sbr.rel (%p222) target = $region12
      $region11: #{fused_forward.1} parent=5 // pred_region
        %s226 = ssub.s32 %s23, 1
        // Predicated region
        $region13: #{fused_forward.1} parent=11 // pred_check
          %p227 = pneg %p44
        $region14: #{fused_forward.1} parent=11 // pred_check_branch
          %229 = sbr.rel (%p227) target = $region16
        $region15: #{fused_forward.1} parent=11 // pred_region
          _
        $region16: #{fused_forward.1} parent=11 // pred_fallthru
          _
        // Predicated region
        $region17: #{fused_forward.1} parent=11 // pred_check
          %p230 = pneg %p65
        $region18: #{fused_forward.1} parent=11 // pred_check_branch
          %232 = sbr.rel (%p230) target = $region20
        $region19: #{fused_forward.1} parent=11 // pred_region
          %234 = vsyncadd [#allocation6], 0
          %s236 = sshll.u32 %s1, 4
          %s237 = int_to_ptr.hbm [resolvable:$true] %s236
          %s238 = sshll.u32 [#allocation5], 4
          %s239 = int_to_ptr.vmem [resolvable:$true] %s238
          %241 = dma.hbm_to_vmem [thread:$0]  %s237, 128, %s239, [#allocation6]
        $region20: #{fused_forward.1} parent=11 // pred_fallthru
          _
        // Predicated region
        $region21: #{fused_forward.1} parent=11 // pred_check
          %p242 = pneg %p170
        $region22: #{fused_forward.1} parent=11 // pred_check_branch
          %244 = sbr.rel (%p242) target = $region24
        $region23: #{fused_forward.1} parent=11 // pred_region
          %246 = vsyncadd [#allocation12], 0
          %s248 = sshll.u32 %s5, 4
          %s249 = int_to_ptr.hbm [resolvable:$true] %s248
          %s250 = sshll.u32 [#allocation13], 4
          %s251 = int_to_ptr.vmem [resolvable:$true] %s250
          %253 = dma.hbm_to_vmem [thread:$0]  %s249, 32, %s251, [#allocation12]
        $region24: #{fused_forward.1} parent=11 // pred_fallthru
          _
        // Predicated region
        $region25: #{fused_forward.1} parent=11 // pred_check
          %p254 = pneg %p191
        $region26: #{fused_forward.1} parent=11 // pred_check_branch
          %256 = sbr.rel (%p254) target = $region28
        $region27: #{fused_forward.1} parent=11 // pred_region
          _
        $region28: #{fused_forward.1} parent=11 // pred_fallthru
          _
      $region12: #{fused_forward.1} parent=5 // pred_fallthru
        _
      %p257 = scmp.lt.s32.totalorder %s23, 3
      // Predicated region
      $region29: #{fused_forward.1} parent=5 // pred_check
        %p258 = pneg %p257
      $region30: #{fused_forward.1} parent=5 // pred_check_branch
        %260 = sbr.rel (%p258) target = $region32
      $region31: #{fused_forward.1} parent=5 // pred_region
        // Predicated region
        $region33: #{fused_forward.1} parent=31 // pred_check
          %p261 = pneg %p91
        $region34: #{fused_forward.1} parent=31 // pred_check_branch
          %263 = sbr.rel (%p261) target = $region36
        $region35: #{fused_forward.1} parent=31 // pred_region
          %s264 = sand.u32 %s23, 1
          %s265 = scalar_lea.sflag [#allocation9], %s264
          %s266 = sand.u32 %s81, 1
          %s267 = smul.addr %s266, 1024
          %s268 = scalar_lea.vmem [#allocation8], %s267
          %s269 = ssub.s32 %s23, 1
          %p270 = scmp.gt.s32.totalorder %s269, 0
          %s271 = scalar_select %p270, %s269, 0
          %273 = vsyncadd %s265, 0
          %s274 = smul.addr %s271, 256
          %s275 = smul.addr %s274, 4
          %s276 = scalar_lea.hbm %s2, %s275
          %s277 = sshll.u32 %s276, 4
          %s278 = int_to_ptr.hbm [resolvable:$true] %s277
          %s279 = sshll.u32 %s268, 4
          %s280 = int_to_ptr.vmem [resolvable:$true] %s279
          %285 = dma.hbm_to_vmem [thread:$0]  %s278, 16384, %s280, %s265, 512, 512, 32
        $region36: #{fused_forward.1} parent=31 // pred_fallthru
          _
        // Predicated region
        $region37: #{fused_forward.1} parent=31 // pred_check
          %p286 = pneg %p117
        $region38: #{fused_forward.1} parent=31 // pred_check_branch
          %288 = sbr.rel (%p286) target = $region40
        $region39: #{fused_forward.1} parent=31 // pred_region
          %s289 = sand.u32 %s23, 1
          %s290 = scalar_lea.sflag [#allocation9], %s289
          %s291 = sand.u32 %s107, 1
          %s292 = smul.addr %s291, 1024
          %s293 = scalar_lea.vmem [#allocation10], %s292
          %295 = vsyncadd %s290, 0
          %s296 = smul.addr %s23, 256
          %s297 = smul.addr %s296, 4
          %s298 = scalar_lea.hbm %s3, %s297
          %s299 = sshll.u32 %s298, 4
          %s300 = int_to_ptr.hbm [resolvable:$true] %s299
          %s301 = sshll.u32 %s293, 4
          %s302 = int_to_ptr.vmem [resolvable:$true] %s301
          %307 = dma.hbm_to_vmem [thread:$0]  %s300, 16384, %s302, %s290, 512, 512, 32
        $region40: #{fused_forward.1} parent=31 // pred_fallthru
          _
        // Predicated region
        $region41: #{fused_forward.1} parent=31 // pred_check
          %p308 = pneg %p143
        $region42: #{fused_forward.1} parent=31 // pred_check_branch
          %310 = sbr.rel (%p308) target = $region44
        $region43: #{fused_forward.1} parent=31 // pred_region
          %s311 = sand.u32 %s23, 1
          %s312 = scalar_lea.sflag [#allocation12], %s311
          %s313 = sand.u32 %s133, 1
          %s314 = smul.addr %s313, 8
          %s315 = scalar_lea.vmem [#allocation11], %s314
          %317 = vsyncadd %s312, 0
          %s318 = smul.addr %s23, 8
          %s319 = scalar_lea.hbm %s4, %s318
          %s321 = sshll.u32 %s319, 4
          %s322 = int_to_ptr.hbm [resolvable:$true] %s321
          %s323 = sshll.u32 %s315, 4
          %s324 = int_to_ptr.vmem [resolvable:$true] %s323
          %326 = dma.hbm_to_vmem [thread:$0]  %s322, 128, %s324, %s312
        $region44: #{fused_forward.1} parent=31 // pred_fallthru
          _
      $region32: #{fused_forward.1} parent=5 // pred_fallthru
        _
      %p327 = scmp.le.s32.totalorder 1, %s23
      %p328 = scmp.lt.s32.totalorder %s23, 4
      %p329 = pnand %p327, %p328
      %p330 = pneg %p329
      // Predicated region
      $region45: #{fused_forward.1} parent=5 // pred_check
        _
      $region46: #{fused_forward.1} parent=5 // pred_check_branch
        %332 = sbr.rel (%p329) target = $region48
      $region47: #{fused_forward.1} parent=5 // pred_region
        %s333 = ssub.s32 %s23, 1
        // Predicated region
        $region49: #{fused_forward.1} parent=47 // pred_check
          %p334 = pneg %p65
        $region50: #{fused_forward.1} parent=47 // pred_check_branch
          %336 = sbr.rel (%p334) target = $region52
        $region51: #{fused_forward.1} parent=47 // pred_region
          %338 = dma.done [#allocation6], 128
        $region52: #{fused_forward.1} parent=47 // pred_fallthru
          _
        %s339 = sand.u32 %s28, 1
        %s340 = scalar_lea.sflag [#allocation9], %s339
        %s341 = sand.u32 %s84, 1
        %s342 = smul.addr %s341, 1024
        %s343 = scalar_lea.vmem [#allocation8], %s342
        // Predicated region
        $region53: #{fused_forward.1} parent=47 // pred_check
          %p344 = pneg %p97
        $region54: #{fused_forward.1} parent=47 // pred_check_branch
          %346 = sbr.rel (%p344) target = $region56
        $region55: #{fused_forward.1} parent=47 // pred_region
          %348 = dma.done %s340, 16384
        $region56: #{fused_forward.1} parent=47 // pred_fallthru
          _
        %s349 = sand.u32 %s28, 1
        %s350 = scalar_lea.sflag [#allocation9], %s349
        %s351 = sand.u32 %s110, 1
        %s352 = smul.addr %s351, 1024
        %s353 = scalar_lea.vmem [#allocation10], %s352
        // Predicated region
        $region57: #{fused_forward.1} parent=47 // pred_check
          %p354 = pneg %p123
        $region58: #{fused_forward.1} parent=47 // pred_check_branch
          %356 = sbr.rel (%p354) target = $region60
        $region59: #{fused_forward.1} parent=47 // pred_region
          %358 = dma.done %s350, 16384
        $region60: #{fused_forward.1} parent=47 // pred_fallthru
          _
        %s359 = sand.u32 %s28, 1
        %s360 = scalar_lea.sflag [#allocation12], %s359
        %s361 = sand.u32 %s136, 1
        %s362 = smul.addr %s361, 8
        %s363 = scalar_lea.vmem [#allocation11], %s362
        // Predicated region
        $region61: #{fused_forward.1} parent=47 // pred_check
          %p364 = pneg %p149
        $region62: #{fused_forward.1} parent=47 // pred_check_branch
          %366 = sbr.rel (%p364) target = $region64
        $region63: #{fused_forward.1} parent=47 // pred_region
          %368 = dma.done %s360, 128
        $region64: #{fused_forward.1} parent=47 // pred_fallthru
          _
        // Predicated region
        $region65: #{fused_forward.1} parent=47 // pred_check
          %p369 = pneg %p170
        $region66: #{fused_forward.1} parent=47 // pred_check_branch
          %371 = sbr.rel (%p369) target = $region68
        $region67: #{fused_forward.1} parent=47 // pred_region
          %373 = dma.done [#allocation12], 32
        $region68: #{fused_forward.1} parent=47 // pred_fallthru
          _
        %p374 = pneg %p44
        %p375 = pneg %p41
        %p376 = pneg %p65
        %p377 = pneg %p62
        %s378 = sand.u32 %s28, 1
        %s379 = scalar_lea.sflag [#allocation9], %s378
        %s380 = sand.u32 %s84, 1
        %s381 = smul.addr %s380, 1024
        %s382 = scalar_lea.vmem [#allocation8], %s381
        %p383 = pneg %p97
        %p384 = pneg %p94
        %s385 = sand.u32 %s28, 1
        %s386 = scalar_lea.sflag [#allocation9], %s385
        %s387 = sand.u32 %s110, 1
        %s388 = smul.addr %s387, 1024
        %s389 = scalar_lea.vmem [#allocation10], %s388
        %p390 = pneg %p123
        %p391 = pneg %p120
        %s392 = sand.u32 %s28, 1
        %s393 = scalar_lea.sflag [#allocation12], %s392
        %s394 = sand.u32 %s136, 1
        %s395 = smul.addr %s394, 8
        %s396 = scalar_lea.vmem [#allocation11], %s395
        %p397 = pneg %p149
        %p398 = pneg %p146
        %p399 = pneg %p170
        %p400 = pneg %p167
        %p401 = pneg %p191
        %p402 = pneg %p188
        %p403 = pneg %p212
        %p404 = pneg %p209
        %s405 = ssub.s32 %s28, 1
        %p406 = scmp.gt.s32.totalorder %s405, 0
        %s407 = scalar_select %p406, %s405, 0
        %p409 = scmp.eq.s32.totalorder %s28, 0
        // Predicated region
        $region69: #{fused_forward.1} parent=47 // pred_check
          %p410 = pneg %p409
        $region70: #{fused_forward.1} parent=47 // pred_check_branch
          %412 = sbr.rel (%p410) target = $region72
        $region71: #{fused_forward.1} parent=47 // pred_region
          %v413 = vld [vmem:[%s0] sm:$0xff]
          %v414 = vld [vmem:[#allocation5] sm:$0xff]
          %416 = vset.pattern.permute.xlu0 0
          %417 = vperm.xlu0 %416, %v413
          %v418 = vpop.permute.xlu0 %417
          %v421 = vperm.slane %v414, 0
          %v422 = vperm.slane %v414, 1
          %v423 = vperm.slane %v414, 2
          %v424 = vperm.slane %v414, 3
          %v425 = vperm.slane %v414, 4
          %v426 = vperm.slane %v414, 5
          %v427 = vperm.slane %v414, 6
          %v428 = vperm.slane %v414, 7
          %v437 = vmul.f32 %v418, %v421
          %v438 = vmul.f32 %v418, %v422
          %v439 = vmul.f32 %v418, %v423
          %v440 = vmul.f32 %v418, %v424
          %v441 = vmul.f32 %v418, %v425
          %v442 = vmul.f32 %v418, %v426
          %v443 = vmul.f32 %v418, %v427
          %v444 = vmul.f32 %v418, %v428
          %445 = vst [vmem:[#allocation3] sm:$0xff] %v437
          %446 = vst [vmem:[#allocation3 + $0x8] sm:$0xff] %v438
          %447 = vst [vmem:[#allocation3 + $0x10] sm:$0xff] %v439
          %448 = vst [vmem:[#allocation3 + $0x18] sm:$0xff] %v440
          %449 = vst [vmem:[#allocation3 + $0x20] sm:$0xff] %v441
          %450 = vst [vmem:[#allocation3 + $0x28] sm:$0xff] %v442
          %451 = vst [vmem:[#allocation3 + $0x30] sm:$0xff] %v443
          %452 = vst [vmem:[#allocation3 + $0x38] sm:$0xff] %v444
          %vm453 = vcmask 0
          %454 = vst.msk [vmem:[#allocation14] sm:$0x1] %vm453, 0.0
        $region72: #{fused_forward.1} parent=47 // pred_fallthru
          _
        %p455 = scmp.gt.s32.totalorder %s28, 0
        // Predicated region
        $region73: #{fused_forward.1} parent=47 // pred_check
          %p456 = pneg %p455
        $region74: #{fused_forward.1} parent=47 // pred_check_branch
          %458 = sbr.rel (%p456) target = $region76
        $region75: #{fused_forward.1} parent=47 // pred_region
          %v459 = vld [vmem:[#allocation2] sm:$0xff]
          %v460 = vld [vmem:[#allocation2 + $0x8] sm:$0xff]
          %v461 = vpack.c.bf16 %v459, %v459
          %v462 = vpack.c.bf16 %v460, %v460
          %v463 = vld [vmem:[%s343] sm:$0xff]
          %v464 = vld [vmem:[%s343 + $0x8] sm:$0xff]
          %v465 = vld [vmem:[%s343 + $0x10] sm:$0xff]
          %v466 = vld [vmem:[%s343 + $0x18] sm:$0xff]
          %v467 = vld [vmem:[%s343 + $0x20] sm:$0xff]
          %v468 = vld [vmem:[%s343 + $0x28] sm:$0xff]
          %v469 = vld [vmem:[%s343 + $0x30] sm:$0xff]
          %v470 = vld [vmem:[%s343 + $0x38] sm:$0xff]
          %v471 = vld [vmem:[%s343 + $0x40] sm:$0xff]
          %v472 = vld [vmem:[%s343 + $0x48] sm:$0xff]
          %v473 = vld [vmem:[%s343 + $0x50] sm:$0xff]
          %v474 = vld [vmem:[%s343 + $0x58] sm:$0xff]
          %v475 = vld [vmem:[%s343 + $0x60] sm:$0xff]
          %v476 = vld [vmem:[%s343 + $0x68] sm:$0xff]
          %v477 = vld [vmem:[%s343 + $0x70] sm:$0xff]
          %v478 = vld [vmem:[%s343 + $0x78] sm:$0xff]
          %v479 = vld [vmem:[%s343 + $0x80] sm:$0xff]
          %v480 = vld [vmem:[%s343 + $0x88] sm:$0xff]
          %v481 = vld [vmem:[%s343 + $0x90] sm:$0xff]
          %v482 = vld [vmem:[%s343 + $0x98] sm:$0xff]
          %v483 = vld [vmem:[%s343 + $0xa0] sm:$0xff]
          %v484 = vld [vmem:[%s343 + $0xa8] sm:$0xff]
          %v485 = vld [vmem:[%s343 + $0xb0] sm:$0xff]
          %v486 = vld [vmem:[%s343 + $0xb8] sm:$0xff]
          %v487 = vld [vmem:[%s343 + $0xc0] sm:$0xff]
          %v488 = vld [vmem:[%s343 + $0xc8] sm:$0xff]
          %v489 = vld [vmem:[%s343 + $0xd0] sm:$0xff]
          %v490 = vld [vmem:[%s343 + $0xd8] sm:$0xff]
          %v491 = vld [vmem:[%s343 + $0xe0] sm:$0xff]
          %v492 = vld [vmem:[%s343 + $0xe8] sm:$0xff]
          %v493 = vld [vmem:[%s343 + $0xf0] sm:$0xff]
          %v494 = vld [vmem:[%s343 + $0xf8] sm:$0xff]
          %v495 = vld [vmem:[%s343 + $0x100] sm:$0xff]
          %v496 = vld [vmem:[%s343 + $0x108] sm:$0xff]
          %v497 = vld [vmem:[%s343 + $0x110] sm:$0xff]
          %v498 = vld [vmem:[%s343 + $0x118] sm:$0xff]
          %v499 = vld [vmem:[%s343 + $0x120] sm:$0xff]
          %v500 = vld [vmem:[%s343 + $0x128] sm:$0xff]
          %v501 = vld [vmem:[%s343 + $0x130] sm:$0xff]
          %v502 = vld [vmem:[%s343 + $0x138] sm:$0xff]
          %v503 = vld [vmem:[%s343 + $0x140] sm:$0xff]
          %v504 = vld [vmem:[%s343 + $0x148] sm:$0xff]
          %v505 = vld [vmem:[%s343 + $0x150] sm:$0xff]
          %v506 = vld [vmem:[%s343 + $0x158] sm:$0xff]
          %v507 = vld [vmem:[%s343 + $0x160] sm:$0xff]
          %v508 = vld [vmem:[%s343 + $0x168] sm:$0xff]
          %v509 = vld [vmem:[%s343 + $0x170] sm:$0xff]
          %v510 = vld [vmem:[%s343 + $0x178] sm:$0xff]
          %v511 = vld [vmem:[%s343 + $0x180] sm:$0xff]
          %v512 = vld [vmem:[%s343 + $0x188] sm:$0xff]
          %v513 = vld [vmem:[%s343 + $0x190] sm:$0xff]
          %v514 = vld [vmem:[%s343 + $0x198] sm:$0xff]
          %v515 = vld [vmem:[%s343 + $0x1a0] sm:$0xff]
          %v516 = vld [vmem:[%s343 + $0x1a8] sm:$0xff]
          %v517 = vld [vmem:[%s343 + $0x1b0] sm:$0xff]
          %v518 = vld [vmem:[%s343 + $0x1b8] sm:$0xff]
          %v519 = vld [vmem:[%s343 + $0x1c0] sm:$0xff]
          %v520 = vld [vmem:[%s343 + $0x1c8] sm:$0xff]
          %v521 = vld [vmem:[%s343 + $0x1d0] sm:$0xff]
          %v522 = vld [vmem:[%s343 + $0x1d8] sm:$0xff]
          %v523 = vld [vmem:[%s343 + $0x1e0] sm:$0xff]
          %v524 = vld [vmem:[%s343 + $0x1e8] sm:$0xff]
          %v525 = vld [vmem:[%s343 + $0x1f0] sm:$0xff]
          %v526 = vld [vmem:[%s343 + $0x1f8] sm:$0xff]
          %v527 = vld [vmem:[%s343 + $0x200] sm:$0xff]
          %v528 = vld [vmem:[%s343 + $0x208] sm:$0xff]
          %v529 = vld [vmem:[%s343 + $0x210] sm:$0xff]
          %v530 = vld [vmem:[%s343 + $0x218] sm:$0xff]
          %v531 = vld [vmem:[%s343 + $0x220] sm:$0xff]
          %v532 = vld [vmem:[%s343 + $0x228] sm:$0xff]
          %v533 = vld [vmem:[%s343 + $0x230] sm:$0xff]
          %v534 = vld [vmem:[%s343 + $0x238] sm:$0xff]
          %v535 = vld [vmem:[%s343 + $0x240] sm:$0xff]
          %v536 = vld [vmem:[%s343 + $0x248] sm:$0xff]
          %v537 = vld [vmem:[%s343 + $0x250] sm:$0xff]
          %v538 = vld [vmem:[%s343 + $0x258] sm:$0xff]
          %v539 = vld [vmem:[%s343 + $0x260] sm:$0xff]
          %v540 = vld [vmem:[%s343 + $0x268] sm:$0xff]
          %v541 = vld [vmem:[%s343 + $0x270] sm:$0xff]
          %v542 = vld [vmem:[%s343 + $0x278] sm:$0xff]
          %v543 = vld [vmem:[%s343 + $0x280] sm:$0xff]
          %v544 = vld [vmem:[%s343 + $0x288] sm:$0xff]
          %v545 = vld [vmem:[%s343 + $0x290] sm:$0xff]
          %v546 = vld [vmem:[%s343 + $0x298] sm:$0xff]
          %v547 = vld [vmem:[%s343 + $0x2a0] sm:$0xff]
          %v548 = vld [vmem:[%s343 + $0x2a8] sm:$0xff]
          %v549 = vld [vmem:[%s343 + $0x2b0] sm:$0xff]
          %v550 = vld [vmem:[%s343 + $0x2b8] sm:$0xff]
          %v551 = vld [vmem:[%s343 + $0x2c0] sm:$0xff]
          %v552 = vld [vmem:[%s343 + $0x2c8] sm:$0xff]
          %v553 = vld [vmem:[%s343 + $0x2d0] sm:$0xff]
          %v554 = vld [vmem:[%s343 + $0x2d8] sm:$0xff]
          %v555 = vld [vmem:[%s343 + $0x2e0] sm:$0xff]
          %v556 = vld [vmem:[%s343 + $0x2e8] sm:$0xff]
          %v557 = vld [vmem:[%s343 + $0x2f0] sm:$0xff]
          %v558 = vld [vmem:[%s343 + $0x2f8] sm:$0xff]
          %v559 = vld [vmem:[%s343 + $0x300] sm:$0xff]
          %v560 = vld [vmem:[%s343 + $0x308] sm:$0xff]
          %v561 = vld [vmem:[%s343 + $0x310] sm:$0xff]
          %v562 = vld [vmem:[%s343 + $0x318] sm:$0xff]
          %v563 = vld [vmem:[%s343 + $0x320] sm:$0xff]
          %v564 = vld [vmem:[%s343 + $0x328] sm:$0xff]
          %v565 = vld [vmem:[%s343 + $0x330] sm:$0xff]
          %v566 = vld [vmem:[%s343 + $0x338] sm:$0xff]
          %v567 = vld [vmem:[%s343 + $0x340] sm:$0xff]
          %v568 = vld [vmem:[%s343 + $0x348] sm:$0xff]
          %v569 = vld [vmem:[%s343 + $0x350] sm:$0xff]
          %v570 = vld [vmem:[%s343 + $0x358] sm:$0xff]
          %v571 = vld [vmem:[%s343 + $0x360] sm:$0xff]
          %v572 = vld [vmem:[%s343 + $0x368] sm:$0xff]
          %v573 = vld [vmem:[%s343 + $0x370] sm:$0xff]
          %v574 = vld [vmem:[%s343 + $0x378] sm:$0xff]
          %v575 = vld [vmem:[%s343 + $0x380] sm:$0xff]
          %v576 = vld [vmem:[%s343 + $0x388] sm:$0xff]
          %v577 = vld [vmem:[%s343 + $0x390] sm:$0xff]
          %v578 = vld [vmem:[%s343 + $0x398] sm:$0xff]
          %v579 = vld [vmem:[%s343 + $0x3a0] sm:$0xff]
          %v580 = vld [vmem:[%s343 + $0x3a8] sm:$0xff]
          %v581 = vld [vmem:[%s343 + $0x3b0] sm:$0xff]
          %v582 = vld [vmem:[%s343 + $0x3b8] sm:$0xff]
          %v583 = vld [vmem:[%s343 + $0x3c0] sm:$0xff]
          %v584 = vld [vmem:[%s343 + $0x3c8] sm:$0xff]
          %v585 = vld [vmem:[%s343 + $0x3d0] sm:$0xff]
          %v586 = vld [vmem:[%s343 + $0x3d8] sm:$0xff]
          %v587 = vld [vmem:[%s343 + $0x3e0] sm:$0xff]
          %v588 = vld [vmem:[%s343 + $0x3e8] sm:$0xff]
          %v589 = vld [vmem:[%s343 + $0x3f0] sm:$0xff]
          %v590 = vld [vmem:[%s343 + $0x3f8] sm:$0xff]
          %v719 = vunpack.c.l.b16 %v463
          %v720 = vunpack.c.h.b16 %v463
          %v721 = vunpack.c.l.b16 %v464
          %v722 = vunpack.c.h.b16 %v464
          %v723 = vunpack.c.l.b16 %v465
          %v724 = vunpack.c.h.b16 %v465
          %v725 = vunpack.c.l.b16 %v466
          %v726 = vunpack.c.h.b16 %v466
          %v727 = vunpack.c.l.b16 %v467
          %v728 = vunpack.c.h.b16 %v467
          %v729 = vunpack.c.l.b16 %v468
          %v730 = vunpack.c.h.b16 %v468
          %v731 = vunpack.c.l.b16 %v469
          %v732 = vunpack.c.h.b16 %v469
          %v733 = vunpack.c.l.b16 %v470
          %v734 = vunpack.c.h.b16 %v470
          %v735 = vunpack.c.l.b16 %v471
          %v736 = vunpack.c.h.b16 %v471
          %v737 = vunpack.c.l.b16 %v472
          %v738 = vunpack.c.h.b16 %v472
          %v739 = vunpack.c.l.b16 %v473
          %v740 = vunpack.c.h.b16 %v473
          %v741 = vunpack.c.l.b16 %v474
          %v742 = vunpack.c.h.b16 %v474
          %v743 = vunpack.c.l.b16 %v475
          %v744 = vunpack.c.h.b16 %v475
          %v745 = vunpack.c.l.b16 %v476
          %v746 = vunpack.c.h.b16 %v476
          %v747 = vunpack.c.l.b16 %v477
          %v748 = vunpack.c.h.b16 %v477
          %v749 = vunpack.c.l.b16 %v478
          %v750 = vunpack.c.h.b16 %v478
          %v751 = vunpack.c.l.b16 %v479
          %v752 = vunpack.c.h.b16 %v479
          %v753 = vunpack.c.l.b16 %v480
          %v754 = vunpack.c.h.b16 %v480
          %v755 = vunpack.c.l.b16 %v481
          %v756 = vunpack.c.h.b16 %v481
          %v757 = vunpack.c.l.b16 %v482
          %v758 = vunpack.c.h.b16 %v482
          %v759 = vunpack.c.l.b16 %v483
          %v760 = vunpack.c.h.b16 %v483
          %v761 = vunpack.c.l.b16 %v484
          %v762 = vunpack.c.h.b16 %v484
          %v763 = vunpack.c.l.b16 %v485
          %v764 = vunpack.c.h.b16 %v485
          %v765 = vunpack.c.l.b16 %v486
          %v766 = vunpack.c.h.b16 %v486
          %v767 = vunpack.c.l.b16 %v487
          %v768 = vunpack.c.h.b16 %v487
          %v769 = vunpack.c.l.b16 %v488
          %v770 = vunpack.c.h.b16 %v488
          %v771 = vunpack.c.l.b16 %v489
          %v772 = vunpack.c.h.b16 %v489
          %v773 = vunpack.c.l.b16 %v490
          %v774 = vunpack.c.h.b16 %v490
          %v775 = vunpack.c.l.b16 %v491
          %v776 = vunpack.c.h.b16 %v491
          %v777 = vunpack.c.l.b16 %v492
          %v778 = vunpack.c.h.b16 %v492
          %v779 = vunpack.c.l.b16 %v493
          %v780 = vunpack.c.h.b16 %v493
          %v781 = vunpack.c.l.b16 %v494
          %v782 = vunpack.c.h.b16 %v494
          %v783 = vunpack.c.l.b16 %v495
          %v784 = vunpack.c.h.b16 %v495
          %v785 = vunpack.c.l.b16 %v496
          %v786 = vunpack.c.h.b16 %v496
          %v787 = vunpack.c.l.b16 %v497
          %v788 = vunpack.c.h.b16 %v497
          %v789 = vunpack.c.l.b16 %v498
          %v790 = vunpack.c.h.b16 %v498
          %v791 = vunpack.c.l.b16 %v499
          %v792 = vunpack.c.h.b16 %v499
          %v793 = vunpack.c.l.b16 %v500
          %v794 = vunpack.c.h.b16 %v500
          %v795 = vunpack.c.l.b16 %v501
          %v796 = vunpack.c.h.b16 %v501
          %v797 = vunpack.c.l.b16 %v502
          %v798 = vunpack.c.h.b16 %v502
          %v799 = vunpack.c.l.b16 %v503
          %v800 = vunpack.c.h.b16 %v503
          %v801 = vunpack.c.l.b16 %v504
          %v802 = vunpack.c.h.b16 %v504
          %v803 = vunpack.c.l.b16 %v505
          %v804 = vunpack.c.h.b16 %v505
          %v805 = vunpack.c.l.b16 %v506
          %v806 = vunpack.c.h.b16 %v506
          %v807 = vunpack.c.l.b16 %v507
          %v808 = vunpack.c.h.b16 %v507
          %v809 = vunpack.c.l.b16 %v508
          %v810 = vunpack.c.h.b16 %v508
          %v811 = vunpack.c.l.b16 %v509
          %v812 = vunpack.c.h.b16 %v509
          %v813 = vunpack.c.l.b16 %v510
          %v814 = vunpack.c.h.b16 %v510
          %v815 = vunpack.c.l.b16 %v511
          %v816 = vunpack.c.h.b16 %v511
          %v817 = vunpack.c.l.b16 %v512
          %v818 = vunpack.c.h.b16 %v512
          %v819 = vunpack.c.l.b16 %v513
          %v820 = vunpack.c.h.b16 %v513
          %v821 = vunpack.c.l.b16 %v514
          %v822 = vunpack.c.h.b16 %v514
          %v823 = vunpack.c.l.b16 %v515
          %v824 = vunpack.c.h.b16 %v515
          %v825 = vunpack.c.l.b16 %v516
          %v826 = vunpack.c.h.b16 %v516
          %v827 = vunpack.c.l.b16 %v517
          %v828 = vunpack.c.h.b16 %v517
          %v829 = vunpack.c.l.b16 %v518
          %v830 = vunpack.c.h.b16 %v518
          %v831 = vunpack.c.l.b16 %v519
          %v832 = vunpack.c.h.b16 %v519
          %v833 = vunpack.c.l.b16 %v520
          %v834 = vunpack.c.h.b16 %v520
          %v835 = vunpack.c.l.b16 %v521
          %v836 = vunpack.c.h.b16 %v521
          %v837 = vunpack.c.l.b16 %v522
          %v838 = vunpack.c.h.b16 %v522
          %v839 = vunpack.c.l.b16 %v523
          %v840 = vunpack.c.h.b16 %v523
          %v841 = vunpack.c.l.b16 %v524
          %v842 = vunpack.c.h.b16 %v524
          %v843 = vunpack.c.l.b16 %v525
          %v844 = vunpack.c.h.b16 %v525
          %v845 = vunpack.c.l.b16 %v526
          %v846 = vunpack.c.h.b16 %v526
          %v847 = vunpack.c.l.b16 %v527
          %v848 = vunpack.c.h.b16 %v527
          %v849 = vunpack.c.l.b16 %v528
          %v850 = vunpack.c.h.b16 %v528
          %v851 = vunpack.c.l.b16 %v529
          %v852 = vunpack.c.h.b16 %v529
          %v853 = vunpack.c.l.b16 %v530
          %v854 = vunpack.c.h.b16 %v530
          %v855 = vunpack.c.l.b16 %v531
          %v856 = vunpack.c.h.b16 %v531
          %v857 = vunpack.c.l.b16 %v532
          %v858 = vunpack.c.h.b16 %v532
          %v859 = vunpack.c.l.b16 %v533
          %v860 = vunpack.c.h.b16 %v533
          %v861 = vunpack.c.l.b16 %v534
          %v862 = vunpack.c.h.b16 %v534
          %v863 = vunpack.c.l.b16 %v535
          %v864 = vunpack.c.h.b16 %v535
          %v865 = vunpack.c.l.b16 %v536
          %v866 = vunpack.c.h.b16 %v536
          %v867 = vunpack.c.l.b16 %v537
          %v868 = vunpack.c.h.b16 %v537
          %v869 = vunpack.c.l.b16 %v538
          %v870 = vunpack.c.h.b16 %v538
          %v871 = vunpack.c.l.b16 %v539
          %v872 = vunpack.c.h.b16 %v539
          %v873 = vunpack.c.l.b16 %v540
          %v874 = vunpack.c.h.b16 %v540
          %v875 = vunpack.c.l.b16 %v541
          %v876 = vunpack.c.h.b16 %v541
          %v877 = vunpack.c.l.b16 %v542
          %v878 = vunpack.c.h.b16 %v542
          %v879 = vunpack.c.l.b16 %v543
          %v880 = vunpack.c.h.b16 %v543
          %v881 = vunpack.c.l.b16 %v544
          %v882 = vunpack.c.h.b16 %v544
          %v883 = vunpack.c.l.b16 %v545
          %v884 = vunpack.c.h.b16 %v545
          %v885 = vunpack.c.l.b16 %v546
          %v886 = vunpack.c.h.b16 %v546
          %v887 = vunpack.c.l.b16 %v547
          %v888 = vunpack.c.h.b16 %v547
          %v889 = vunpack.c.l.b16 %v548
          %v890 = vunpack.c.h.b16 %v548
          %v891 = vunpack.c.l.b16 %v549
          %v892 = vunpack.c.h.b16 %v549
          %v893 = vunpack.c.l.b16 %v550
          %v894 = vunpack.c.h.b16 %v550
          %v895 = vunpack.c.l.b16 %v551
          %v896 = vunpack.c.h.b16 %v551
          %v897 = vunpack.c.l.b16 %v552
          %v898 = vunpack.c.h.b16 %v552
          %v899 = vunpack.c.l.b16 %v553
          %v900 = vunpack.c.h.b16 %v553
          %v901 = vunpack.c.l.b16 %v554
          %v902 = vunpack.c.h.b16 %v554
          %v903 = vunpack.c.l.b16 %v555
          %v904 = vunpack.c.h.b16 %v555
          %v905 = vunpack.c.l.b16 %v556
          %v906 = vunpack.c.h.b16 %v556
          %v907 = vunpack.c.l.b16 %v557
          %v908 = vunpack.c.h.b16 %v557
          %v909 = vunpack.c.l.b16 %v558
          %v910 = vunpack.c.h.b16 %v558
          %v911 = vunpack.c.l.b16 %v559
          %v912 = vunpack.c.h.b16 %v559
          %v913 = vunpack.c.l.b16 %v560
          %v914 = vunpack.c.h.b16 %v560
          %v915 = vunpack.c.l.b16 %v561
          %v916 = vunpack.c.h.b16 %v561
          %v917 = vunpack.c.l.b16 %v562
          %v918 = vunpack.c.h.b16 %v562
          %v919 = vunpack.c.l.b16 %v563
          %v920 = vunpack.c.h.b16 %v563
          %v921 = vunpack.c.l.b16 %v564
          %v922 = vunpack.c.h.b16 %v564
          %v923 = vunpack.c.l.b16 %v565
          %v924 = vunpack.c.h.b16 %v565
          %v925 = vunpack.c.l.b16 %v566
          %v926 = vunpack.c.h.b16 %v566
          %v927 = vunpack.c.l.b16 %v567
          %v928 = vunpack.c.h.b16 %v567
          %v929 = vunpack.c.l.b16 %v568
          %v930 = vunpack.c.h.b16 %v568
          %v931 = vunpack.c.l.b16 %v569
          %v932 = vunpack.c.h.b16 %v569
          %v933 = vunpack.c.l.b16 %v570
          %v934 = vunpack.c.h.b16 %v570
          %v935 = vunpack.c.l.b16 %v571
          %v936 = vunpack.c.h.b16 %v571
          %v937 = vunpack.c.l.b16 %v572
          %v938 = vunpack.c.h.b16 %v572
          %v939 = vunpack.c.l.b16 %v573
          %v940 = vunpack.c.h.b16 %v573
          %v941 = vunpack.c.l.b16 %v574
          %v942 = vunpack.c.h.b16 %v574
          %v943 = vunpack.c.l.b16 %v575
          %v944 = vunpack.c.h.b16 %v575
          %v945 = vunpack.c.l.b16 %v576
          %v946 = vunpack.c.h.b16 %v576
          %v947 = vunpack.c.l.b16 %v577
          %v948 = vunpack.c.h.b16 %v577
          %v949 = vunpack.c.l.b16 %v578
          %v950 = vunpack.c.h.b16 %v578
          %v951 = vunpack.c.l.b16 %v579
          %v952 = vunpack.c.h.b16 %v579
          %v953 = vunpack.c.l.b16 %v580
          %v954 = vunpack.c.h.b16 %v580
          %v955 = vunpack.c.l.b16 %v581
          %v956 = vunpack.c.h.b16 %v581
          %v957 = vunpack.c.l.b16 %v582
          %v958 = vunpack.c.h.b16 %v582
          %v959 = vunpack.c.l.b16 %v583
          %v960 = vunpack.c.h.b16 %v583
          %v961 = vunpack.c.l.b16 %v584
          %v962 = vunpack.c.h.b16 %v584
          %v963 = vunpack.c.l.b16 %v585
          %v964 = vunpack.c.h.b16 %v585
          %v965 = vunpack.c.l.b16 %v586
          %v966 = vunpack.c.h.b16 %v586
          %v967 = vunpack.c.l.b16 %v587
          %v968 = vunpack.c.h.b16 %v587
          %v969 = vunpack.c.l.b16 %v588
          %v970 = vunpack.c.h.b16 %v588
          %v971 = vunpack.c.l.b16 %v589
          %v972 = vunpack.c.h.b16 %v589
          %v973 = vunpack.c.l.b16 %v590
          %v974 = vunpack.c.h.b16 %v590
          %v975 = vpack.c.b16 %v727, %v719
          %v976 = vpack.c.b16 %v728, %v720
          %v977 = vpack.c.b16 %v729, %v721
          %v978 = vpack.c.b16 %v730, %v722
          %v979 = vpack.c.b16 %v731, %v723
          %v980 = vpack.c.b16 %v732, %v724
          %v981 = vpack.c.b16 %v733, %v725
          %v982 = vpack.c.b16 %v734, %v726
          %v983 = vpack.c.b16 %v743, %v735
          %v984 = vpack.c.b16 %v744, %v736
          %v985 = vpack.c.b16 %v745, %v737
          %v986 = vpack.c.b16 %v746, %v738
          %v987 = vpack.c.b16 %v747, %v739
          %v988 = vpack.c.b16 %v748, %v740
          %v989 = vpack.c.b16 %v749, %v741
          %v990 = vpack.c.b16 %v750, %v742
          %v991 = vpack.c.b16 %v759, %v751
          %v992 = vpack.c.b16 %v760, %v752
          %v993 = vpack.c.b16 %v761, %v753
          %v994 = vpack.c.b16 %v762, %v754
          %v995 = vpack.c.b16 %v763, %v755
          %v996 = vpack.c.b16 %v764, %v756
          %v997 = vpack.c.b16 %v765, %v757
          %v998 = vpack.c.b16 %v766, %v758
          %v999 = vpack.c.b16 %v775, %v767
          %v1000 = vpack.c.b16 %v776, %v768
          %v1001 = vpack.c.b16 %v777, %v769
          %v1002 = vpack.c.b16 %v778, %v770
          %v1003 = vpack.c.b16 %v779, %v771
          %v1004 = vpack.c.b16 %v780, %v772
          %v1005 = vpack.c.b16 %v781, %v773
          %v1006 = vpack.c.b16 %v782, %v774
          %v1007 = vpack.c.b16 %v791, %v783
          %v1008 = vpack.c.b16 %v792, %v784
          %v1009 = vpack.c.b16 %v793, %v785
          %v1010 = vpack.c.b16 %v794, %v786
          %v1011 = vpack.c.b16 %v795, %v787
          %v1012 = vpack.c.b16 %v796, %v788
          %v1013 = vpack.c.b16 %v797, %v789
          %v1014 = vpack.c.b16 %v798, %v790
          %v1015 = vpack.c.b16 %v807, %v799
          %v1016 = vpack.c.b16 %v808, %v800
          %v1017 = vpack.c.b16 %v809, %v801
          %v1018 = vpack.c.b16 %v810, %v802
          %v1019 = vpack.c.b16 %v811, %v803
          %v1020 = vpack.c.b16 %v812, %v804
          %v1021 = vpack.c.b16 %v813, %v805
          %v1022 = vpack.c.b16 %v814, %v806
          %v1023 = vpack.c.b16 %v823, %v815
          %v1024 = vpack.c.b16 %v824, %v816
          %v1025 = vpack.c.b16 %v825, %v817
          %v1026 = vpack.c.b16 %v826, %v818
          %v1027 = vpack.c.b16 %v827, %v819
          %v1028 = vpack.c.b16 %v828, %v820
          %v1029 = vpack.c.b16 %v829, %v821
          %v1030 = vpack.c.b16 %v830, %v822
          %v1031 = vpack.c.b16 %v839, %v831
          %v1032 = vpack.c.b16 %v840, %v832
          %v1033 = vpack.c.b16 %v841, %v833
          %v1034 = vpack.c.b16 %v842, %v834
          %v1035 = vpack.c.b16 %v843, %v835
          %v1036 = vpack.c.b16 %v844, %v836
          %v1037 = vpack.c.b16 %v845, %v837
          %v1038 = vpack.c.b16 %v846, %v838
          %v1039 = vpack.c.b16 %v855, %v847
          %v1040 = vpack.c.b16 %v856, %v848
          %v1041 = vpack.c.b16 %v857, %v849
          %v1042 = vpack.c.b16 %v858, %v850
          %v1043 = vpack.c.b16 %v859, %v851
          %v1044 = vpack.c.b16 %v860, %v852
          %v1045 = vpack.c.b16 %v861, %v853
          %v1046 = vpack.c.b16 %v862, %v854
          %v1047 = vpack.c.b16 %v871, %v863
          %v1048 = vpack.c.b16 %v872, %v864
          %v1049 = vpack.c.b16 %v873, %v865
          %v1050 = vpack.c.b16 %v874, %v866
          %v1051 = vpack.c.b16 %v875, %v867
          %v1052 = vpack.c.b16 %v876, %v868
          %v1053 = vpack.c.b16 %v877, %v869
          %v1054 = vpack.c.b16 %v878, %v870
          %v1055 = vpack.c.b16 %v887, %v879
          %v1056 = vpack.c.b16 %v888, %v880
          %v1057 = vpack.c.b16 %v889, %v881
          %v1058 = vpack.c.b16 %v890, %v882
          %v1059 = vpack.c.b16 %v891, %v883
          %v1060 = vpack.c.b16 %v892, %v884
          %v1061 = vpack.c.b16 %v893, %v885
          %v1062 = vpack.c.b16 %v894, %v886
          %v1063 = vpack.c.b16 %v903, %v895
          %v1064 = vpack.c.b16 %v904, %v896
          %v1065 = vpack.c.b16 %v905, %v897
          %v1066 = vpack.c.b16 %v906, %v898
          %v1067 = vpack.c.b16 %v907, %v899
          %v1068 = vpack.c.b16 %v908, %v900
          %v1069 = vpack.c.b16 %v909, %v901
          %v1070 = vpack.c.b16 %v910, %v902
          %v1071 = vpack.c.b16 %v919, %v911
          %v1072 = vpack.c.b16 %v920, %v912
          %v1073 = vpack.c.b16 %v921, %v913
          %v1074 = vpack.c.b16 %v922, %v914
          %v1075 = vpack.c.b16 %v923, %v915
          %v1076 = vpack.c.b16 %v924, %v916
          %v1077 = vpack.c.b16 %v925, %v917
          %v1078 = vpack.c.b16 %v926, %v918
          %v1079 = vpack.c.b16 %v935, %v927
          %v1080 = vpack.c.b16 %v936, %v928
          %v1081 = vpack.c.b16 %v937, %v929
          %v1082 = vpack.c.b16 %v938, %v930
          %v1083 = vpack.c.b16 %v939, %v931
          %v1084 = vpack.c.b16 %v940, %v932
          %v1085 = vpack.c.b16 %v941, %v933
          %v1086 = vpack.c.b16 %v942, %v934
          %v1087 = vpack.c.b16 %v951, %v943
          %v1088 = vpack.c.b16 %v952, %v944
          %v1089 = vpack.c.b16 %v953, %v945
          %v1090 = vpack.c.b16 %v954, %v946
          %v1091 = vpack.c.b16 %v955, %v947
          %v1092 = vpack.c.b16 %v956, %v948
          %v1093 = vpack.c.b16 %v957, %v949
          %v1094 = vpack.c.b16 %v958, %v950
          %v1095 = vpack.c.b16 %v967, %v959
          %v1096 = vpack.c.b16 %v968, %v960
          %v1097 = vpack.c.b16 %v969, %v961
          %v1098 = vpack.c.b16 %v970, %v962
          %v1099 = vpack.c.b16 %v971, %v963
          %v1100 = vpack.c.b16 %v972, %v964
          %v1101 = vpack.c.b16 %v973, %v965
          %v1102 = vpack.c.b16 %v974, %v966
          %1231 = vmatpush.bf16.msra.mxu0 %v1031
          %1232 = vmatpush.bf16.msra.mxu0 %v1023
          %1233 = vmatpush.bf16.msra.mxu0 %v1015
          %1234 = vmatpush.bf16.msra.mxu0 %v1007
          %1235 = vmatpush.bf16.msra.mxu0 %v999
          %1236 = vmatpush.bf16.msra.mxu0 %v991
          %1237 = vmatpush.bf16.msra.mxu0 %v983
          %1238 = vmatpush.bf16.msra.mxu0 %v975
          %1239 = vmatmul.bf16.gmra.mxu0 %v461
          %v1240 = vpop.f32.mrf.mxu0
          %v1241 = vadd.f32 0.0, %v1240
          %v1242 = vpop.f32.mrf.mxu0
          %1243 = vdwg.mxu0
          %1244 = vmatpush.bf16.msra.mxu0 %v1095
          %1245 = vmatpush.bf16.msra.mxu0 %v1087
          %1246 = vmatpush.bf16.msra.mxu0 %v1079
          %1247 = vmatpush.bf16.msra.mxu0 %v1071
          %1248 = vmatpush.bf16.msra.mxu0 %v1063
          %1249 = vmatpush.bf16.msra.mxu0 %v1055
          %1250 = vmatpush.bf16.msra.mxu0 %v1047
          %1251 = vmatpush.bf16.msra.mxu0 %v1039
          %1252 = vmatmul.bf16.gmra.mxu0 %v462
          %v1253 = vpop.f32.mrf.mxu0
          %v1254 = vadd.f32 %v1241, %v1253
          %v1255 = vpop.f32.mrf.mxu0
          %1256 = vdwg.mxu0
          %1257 = vmatpush.bf16.msra.mxu0 %v1032
          %1258 = vmatpush.bf16.msra.mxu0 %v1024
          %1259 = vmatpush.bf16.msra.mxu0 %v1016
          %1260 = vmatpush.bf16.msra.mxu0 %v1008
          %1261 = vmatpush.bf16.msra.mxu0 %v1000
          %1262 = vmatpush.bf16.msra.mxu0 %v992
          %1263 = vmatpush.bf16.msra.mxu0 %v984
          %1264 = vmatpush.bf16.msra.mxu0 %v976
          %1265 = vmatmul.bf16.gmra.mxu0 %v461
          %v1266 = vpop.f32.mrf.mxu0
          %v1267 = vadd.f32 0.0, %v1266
          %v1268 = vpop.f32.mrf.mxu0
          %1269 = vdwg.mxu0
          %1270 = vmatpush.bf16.msra.mxu0 %v1096
          %1271 = vmatpush.bf16.msra.mxu0 %v1088
          %1272 = vmatpush.bf16.msra.mxu0 %v1080
          %1273 = vmatpush.bf16.msra.mxu0 %v1072
          %1274 = vmatpush.bf16.msra.mxu0 %v1064
          %1275 = vmatpush.bf16.msra.mxu0 %v1056
          %1276 = vmatpush.bf16.msra.mxu0 %v1048
          %1277 = vmatpush.bf16.msra.mxu0 %v1040
          %1278 = vmatmul.bf16.gmra.mxu0 %v462
          %v1279 = vpop.f32.mrf.mxu0
          %v1280 = vadd.f32 %v1267, %v1279
          %v1281 = vpop.f32.mrf.mxu0
          %1282 = vdwg.mxu0
          %1283 = vmatpush.bf16.msra.mxu0 %v1033
          %1284 = vmatpush.bf16.msra.mxu0 %v1025
          %1285 = vmatpush.bf16.msra.mxu0 %v1017
          %1286 = vmatpush.bf16.msra.mxu0 %v1009
          %1287 = vmatpush.bf16.msra.mxu0 %v1001
          %1288 = vmatpush.bf16.msra.mxu0 %v993
          %1289 = vmatpush.bf16.msra.mxu0 %v985
          %1290 = vmatpush.bf16.msra.mxu0 %v977
          %1291 = vmatmul.bf16.gmra.mxu0 %v461
          %v1292 = vpop.f32.mrf.mxu0
          %v1293 = vadd.f32 0.0, %v1292
          %v1294 = vpop.f32.mrf.mxu0
          %1295 = vdwg.mxu0
          %1296 = vmatpush.bf16.msra.mxu0 %v1097
          %1297 = vmatpush.bf16.msra.mxu0 %v1089
          %1298 = vmatpush.bf16.msra.mxu0 %v1081
          %1299 = vmatpush.bf16.msra.mxu0 %v1073
          %1300 = vmatpush.bf16.msra.mxu0 %v1065
          %1301 = vmatpush.bf16.msra.mxu0 %v1057
          %1302 = vmatpush.bf16.msra.mxu0 %v1049
          %1303 = vmatpush.bf16.msra.mxu0 %v1041
          %1304 = vmatmul.bf16.gmra.mxu0 %v462
          %v1305 = vpop.f32.mrf.mxu0
          %v1306 = vadd.f32 %v1293, %v1305
          %v1307 = vpop.f32.mrf.mxu0
          %1308 = vdwg.mxu0
          %1309 = vmatpush.bf16.msra.mxu0 %v1034
          %1310 = vmatpush.bf16.msra.mxu0 %v1026
          %1311 = vmatpush.bf16.msra.mxu0 %v1018
          %1312 = vmatpush.bf16.msra.mxu0 %v1010
          %1313 = vmatpush.bf16.msra.mxu0 %v1002
          %1314 = vmatpush.bf16.msra.mxu0 %v994
          %1315 = vmatpush.bf16.msra.mxu0 %v986
          %1316 = vmatpush.bf16.msra.mxu0 %v978
          %1317 = vmatmul.bf16.gmra.mxu0 %v461
          %v1318 = vpop.f32.mrf.mxu0
          %v1319 = vadd.f32 0.0, %v1318
          %v1320 = vpop.f32.mrf.mxu0
          %1321 = vdwg.mxu0
          %1322 = vmatpush.bf16.msra.mxu0 %v1098
          %1323 = vmatpush.bf16.msra.mxu0 %v1090
          %1324 = vmatpush.bf16.msra.mxu0 %v1082
          %1325 = vmatpush.bf16.msra.mxu0 %v1074
          %1326 = vmatpush.bf16.msra.mxu0 %v1066
          %1327 = vmatpush.bf16.msra.mxu0 %v1058
          %1328 = vmatpush.bf16.msra.mxu0 %v1050
          %1329 = vmatpush.bf16.msra.mxu0 %v1042
          %1330 = vmatmul.bf16.gmra.mxu0 %v462
          %v1331 = vpop.f32.mrf.mxu0
          %v1332 = vadd.f32 %v1319, %v1331
          %v1333 = vpop.f32.mrf.mxu0
          %1334 = vdwg.mxu0
          %1335 = vmatpush.bf16.msra.mxu0 %v1035
          %1336 = vmatpush.bf16.msra.mxu0 %v1027
          %1337 = vmatpush.bf16.msra.mxu0 %v1019
          %1338 = vmatpush.bf16.msra.mxu0 %v1011
          %1339 = vmatpush.bf16.msra.mxu0 %v1003
          %1340 = vmatpush.bf16.msra.mxu0 %v995
          %1341 = vmatpush.bf16.msra.mxu0 %v987
          %1342 = vmatpush.bf16.msra.mxu0 %v979
          %1343 = vmatmul.bf16.gmra.mxu0 %v461
          %v1344 = vpop.f32.mrf.mxu0
          %v1345 = vadd.f32 0.0, %v1344
          %v1346 = vpop.f32.mrf.mxu0
          %1347 = vdwg.mxu0
          %1348 = vmatpush.bf16.msra.mxu0 %v1099
          %1349 = vmatpush.bf16.msra.mxu0 %v1091
          %1350 = vmatpush.bf16.msra.mxu0 %v1083
          %1351 = vmatpush.bf16.msra.mxu0 %v1075
          %1352 = vmatpush.bf16.msra.mxu0 %v1067
          %1353 = vmatpush.bf16.msra.mxu0 %v1059
          %1354 = vmatpush.bf16.msra.mxu0 %v1051
          %1355 = vmatpush.bf16.msra.mxu0 %v1043
          %1356 = vmatmul.bf16.gmra.mxu0 %v462
          %v1357 = vpop.f32.mrf.mxu0
          %v1358 = vadd.f32 %v1345, %v1357
          %v1359 = vpop.f32.mrf.mxu0
          %1360 = vdwg.mxu0
          %1361 = vmatpush.bf16.msra.mxu0 %v1036
          %1362 = vmatpush.bf16.msra.mxu0 %v1028
          %1363 = vmatpush.bf16.msra.mxu0 %v1020
          %1364 = vmatpush.bf16.msra.mxu0 %v1012
          %1365 = vmatpush.bf16.msra.mxu0 %v1004
          %1366 = vmatpush.bf16.msra.mxu0 %v996
          %1367 = vmatpush.bf16.msra.mxu0 %v988
          %1368 = vmatpush.bf16.msra.mxu0 %v980
          %1369 = vmatmul.bf16.gmra.mxu0 %v461
          %v1370 = vpop.f32.mrf.mxu0
          %v1371 = vadd.f32 0.0, %v1370
          %v1372 = vpop.f32.mrf.mxu0
          %1373 = vdwg.mxu0
          %1374 = vmatpush.bf16.msra.mxu0 %v1100
          %1375 = vmatpush.bf16.msra.mxu0 %v1092
          %1376 = vmatpush.bf16.msra.mxu0 %v1084
          %1377 = vmatpush.bf16.msra.mxu0 %v1076
          %1378 = vmatpush.bf16.msra.mxu0 %v1068
          %1379 = vmatpush.bf16.msra.mxu0 %v1060
          %1380 = vmatpush.bf16.msra.mxu0 %v1052
          %1381 = vmatpush.bf16.msra.mxu0 %v1044
          %1382 = vmatmul.bf16.gmra.mxu0 %v462
          %v1383 = vpop.f32.mrf.mxu0
          %v1384 = vadd.f32 %v1371, %v1383
          %v1385 = vpop.f32.mrf.mxu0
          %1386 = vdwg.mxu0
          %1387 = vmatpush.bf16.msra.mxu0 %v1037
          %1388 = vmatpush.bf16.msra.mxu0 %v1029
          %1389 = vmatpush.bf16.msra.mxu0 %v1021
          %1390 = vmatpush.bf16.msra.mxu0 %v1013
          %1391 = vmatpush.bf16.msra.mxu0 %v1005
          %1392 = vmatpush.bf16.msra.mxu0 %v997
          %1393 = vmatpush.bf16.msra.mxu0 %v989
          %1394 = vmatpush.bf16.msra.mxu0 %v981
          %1395 = vmatmul.bf16.gmra.mxu0 %v461
          %v1396 = vpop.f32.mrf.mxu0
          %v1397 = vadd.f32 0.0, %v1396
          %v1398 = vpop.f32.mrf.mxu0
          %1399 = vdwg.mxu0
          %1400 = vmatpush.bf16.msra.mxu0 %v1101
          %1401 = vmatpush.bf16.msra.mxu0 %v1093
          %1402 = vmatpush.bf16.msra.mxu0 %v1085
          %1403 = vmatpush.bf16.msra.mxu0 %v1077
          %1404 = vmatpush.bf16.msra.mxu0 %v1069
          %1405 = vmatpush.bf16.msra.mxu0 %v1061
          %1406 = vmatpush.bf16.msra.mxu0 %v1053
          %1407 = vmatpush.bf16.msra.mxu0 %v1045
          %1408 = vmatmul.bf16.gmra.mxu0 %v462
          %v1409 = vpop.f32.mrf.mxu0
          %v1410 = vadd.f32 %v1397, %v1409
          %v1411 = vpop.f32.mrf.mxu0
          %1412 = vdwg.mxu0
          %1413 = vmatpush.bf16.msra.mxu0 %v1038
          %1414 = vmatpush.bf16.msra.mxu0 %v1030
          %1415 = vmatpush.bf16.msra.mxu0 %v1022
          %1416 = vmatpush.bf16.msra.mxu0 %v1014
          %1417 = vmatpush.bf16.msra.mxu0 %v1006
          %1418 = vmatpush.bf16.msra.mxu0 %v998
          %1419 = vmatpush.bf16.msra.mxu0 %v990
          %1420 = vmatpush.bf16.msra.mxu0 %v982
          %1421 = vmatmul.bf16.gmra.mxu0 %v461
          %v1422 = vpop.f32.mrf.mxu0
          %v1423 = vadd.f32 0.0, %v1422
          %v1424 = vpop.f32.mrf.mxu0
          %1425 = vdwg.mxu0
          %1426 = vmatpush.bf16.msra.mxu0 %v1102
          %1427 = vmatpush.bf16.msra.mxu0 %v1094
          %1428 = vmatpush.bf16.msra.mxu0 %v1086
          %1429 = vmatpush.bf16.msra.mxu0 %v1078
          %1430 = vmatpush.bf16.msra.mxu0 %v1070
          %1431 = vmatpush.bf16.msra.mxu0 %v1062
          %1432 = vmatpush.bf16.msra.mxu0 %v1054
          %1433 = vmatpush.bf16.msra.mxu0 %v1046
          %1434 = vmatmul.bf16.gmra.mxu0 %v462
          %v1435 = vpop.f32.mrf.mxu0
          %v1436 = vadd.f32 %v1423, %v1435
          %v1437 = vpop.f32.mrf.mxu0
          %1438 = vdwg.mxu0
          %1439 = vst [vmem:[#allocation3] sm:$0xff] %v1254
          %1440 = vst [vmem:[#allocation3 + $0x8] sm:$0xff] %v1280
          %1441 = vst [vmem:[#allocation3 + $0x10] sm:$0xff] %v1306
          %1442 = vst [vmem:[#allocation3 + $0x18] sm:$0xff] %v1332
          %1443 = vst [vmem:[#allocation3 + $0x20] sm:$0xff] %v1358
          %1444 = vst [vmem:[#allocation3 + $0x28] sm:$0xff] %v1384
          %1445 = vst [vmem:[#allocation3 + $0x30] sm:$0xff] %v1410
          %1446 = vst [vmem:[#allocation3 + $0x38] sm:$0xff] %v1436
        $region76: #{fused_forward.1} parent=47 // pred_fallthru
          _
        %v1447 = vld [vmem:[%s353] sm:$0xff]
        %v1448 = vld [vmem:[%s353 + $0x8] sm:$0xff]
        %v1449 = vld [vmem:[%s353 + $0x10] sm:$0xff]
        %v1450 = vld [vmem:[%s353 + $0x18] sm:$0xff]
        %v1451 = vld [vmem:[%s353 + $0x20] sm:$0xff]
        %v1452 = vld [vmem:[%s353 + $0x28] sm:$0xff]
        %v1453 = vld [vmem:[%s353 + $0x30] sm:$0xff]
        %v1454 = vld [vmem:[%s353 + $0x38] sm:$0xff]
        %v1455 = vld [vmem:[%s353 + $0x40] sm:$0xff]
        %v1456 = vld [vmem:[%s353 + $0x48] sm:$0xff]
        %v1457 = vld [vmem:[%s353 + $0x50] sm:$0xff]
        %v1458 = vld [vmem:[%s353 + $0x58] sm:$0xff]
        %v1459 = vld [vmem:[%s353 + $0x60] sm:$0xff]
        %v1460 = vld [vmem:[%s353 + $0x68] sm:$0xff]
        %v1461 = vld [vmem:[%s353 + $0x70] sm:$0xff]
        %v1462 = vld [vmem:[%s353 + $0x78] sm:$0xff]
        %v1463 = vld [vmem:[%s353 + $0x80] sm:$0xff]
        %v1464 = vld [vmem:[%s353 + $0x88] sm:$0xff]
        %v1465 = vld [vmem:[%s353 + $0x90] sm:$0xff]
        %v1466 = vld [vmem:[%s353 + $0x98] sm:$0xff]
        %v1467 = vld [vmem:[%s353 + $0xa0] sm:$0xff]
        %v1468 = vld [vmem:[%s353 + $0xa8] sm:$0xff]
        %v1469 = vld [vmem:[%s353 + $0xb0] sm:$0xff]
        %v1470 = vld [vmem:[%s353 + $0xb8] sm:$0xff]
        %v1471 = vld [vmem:[%s353 + $0xc0] sm:$0xff]
        %v1472 = vld [vmem:[%s353 + $0xc8] sm:$0xff]
        %v1473 = vld [vmem:[%s353 + $0xd0] sm:$0xff]
        %v1474 = vld [vmem:[%s353 + $0xd8] sm:$0xff]
        %v1475 = vld [vmem:[%s353 + $0xe0] sm:$0xff]
        %v1476 = vld [vmem:[%s353 + $0xe8] sm:$0xff]
        %v1477 = vld [vmem:[%s353 + $0xf0] sm:$0xff]
        %v1478 = vld [vmem:[%s353 + $0xf8] sm:$0xff]
        %v1479 = vld [vmem:[%s353 + $0x100] sm:$0xff]
        %v1480 = vld [vmem:[%s353 + $0x108] sm:$0xff]
        %v1481 = vld [vmem:[%s353 + $0x110] sm:$0xff]
        %v1482 = vld [vmem:[%s353 + $0x118] sm:$0xff]
        %v1483 = vld [vmem:[%s353 + $0x120] sm:$0xff]
        %v1484 = vld [vmem:[%s353 + $0x128] sm:$0xff]
        %v1485 = vld [vmem:[%s353 + $0x130] sm:$0xff]
        %v1486 = vld [vmem:[%s353 + $0x138] sm:$0xff]
        %v1487 = vld [vmem:[%s353 + $0x140] sm:$0xff]
        %v1488 = vld [vmem:[%s353 + $0x148] sm:$0xff]
        %v1489 = vld [vmem:[%s353 + $0x150] sm:$0xff]
        %v1490 = vld [vmem:[%s353 + $0x158] sm:$0xff]
        %v1491 = vld [vmem:[%s353 + $0x160] sm:$0xff]
        %v1492 = vld [vmem:[%s353 + $0x168] sm:$0xff]
        %v1493 = vld [vmem:[%s353 + $0x170] sm:$0xff]
        %v1494 = vld [vmem:[%s353 + $0x178] sm:$0xff]
        %v1495 = vld [vmem:[%s353 + $0x180] sm:$0xff]
        %v1496 = vld [vmem:[%s353 + $0x188] sm:$0xff]
        %v1497 = vld [vmem:[%s353 + $0x190] sm:$0xff]
        %v1498 = vld [vmem:[%s353 + $0x198] sm:$0xff]
        %v1499 = vld [vmem:[%s353 + $0x1a0] sm:$0xff]
        %v1500 = vld [vmem:[%s353 + $0x1a8] sm:$0xff]
        %v1501 = vld [vmem:[%s353 + $0x1b0] sm:$0xff]
        %v1502 = vld [vmem:[%s353 + $0x1b8] sm:$0xff]
        %v1503 = vld [vmem:[%s353 + $0x1c0] sm:$0xff]
        %v1504 = vld [vmem:[%s353 + $0x1c8] sm:$0xff]
        %v1505 = vld [vmem:[%s353 + $0x1d0] sm:$0xff]
        %v1506 = vld [vmem:[%s353 + $0x1d8] sm:$0xff]
        %v1507 = vld [vmem:[%s353 + $0x1e0] sm:$0xff]
        %v1508 = vld [vmem:[%s353 + $0x1e8] sm:$0xff]
        %v1509 = vld [vmem:[%s353 + $0x1f0] sm:$0xff]
        %v1510 = vld [vmem:[%s353 + $0x1f8] sm:$0xff]
        %v1511 = vld [vmem:[%s353 + $0x200] sm:$0xff]
        %v1512 = vld [vmem:[%s353 + $0x208] sm:$0xff]
        %v1513 = vld [vmem:[%s353 + $0x210] sm:$0xff]
        %v1514 = vld [vmem:[%s353 + $0x218] sm:$0xff]
        %v1515 = vld [vmem:[%s353 + $0x220] sm:$0xff]
        %v1516 = vld [vmem:[%s353 + $0x228] sm:$0xff]
        %v1517 = vld [vmem:[%s353 + $0x230] sm:$0xff]
        %v1518 = vld [vmem:[%s353 + $0x238] sm:$0xff]
        %v1519 = vld [vmem:[%s353 + $0x240] sm:$0xff]
        %v1520 = vld [vmem:[%s353 + $0x248] sm:$0xff]
        %v1521 = vld [vmem:[%s353 + $0x250] sm:$0xff]
        %v1522 = vld [vmem:[%s353 + $0x258] sm:$0xff]
        %v1523 = vld [vmem:[%s353 + $0x260] sm:$0xff]
        %v1524 = vld [vmem:[%s353 + $0x268] sm:$0xff]
        %v1525 = vld [vmem:[%s353 + $0x270] sm:$0xff]
        %v1526 = vld [vmem:[%s353 + $0x278] sm:$0xff]
        %v1527 = vld [vmem:[%s353 + $0x280] sm:$0xff]
        %v1528 = vld [vmem:[%s353 + $0x288] sm:$0xff]
        %v1529 = vld [vmem:[%s353 + $0x290] sm:$0xff]
        %v1530 = vld [vmem:[%s353 + $0x298] sm:$0xff]
        %v1531 = vld [vmem:[%s353 + $0x2a0] sm:$0xff]
        %v1532 = vld [vmem:[%s353 + $0x2a8] sm:$0xff]
        %v1533 = vld [vmem:[%s353 + $0x2b0] sm:$0xff]
        %v1534 = vld [vmem:[%s353 + $0x2b8] sm:$0xff]
        %v1535 = vld [vmem:[%s353 + $0x2c0] sm:$0xff]
        %v1536 = vld [vmem:[%s353 + $0x2c8] sm:$0xff]
        %v1537 = vld [vmem:[%s353 + $0x2d0] sm:$0xff]
        %v1538 = vld [vmem:[%s353 + $0x2d8] sm:$0xff]
        %v1539 = vld [vmem:[%s353 + $0x2e0] sm:$0xff]
        %v1540 = vld [vmem:[%s353 + $0x2e8] sm:$0xff]
        %v1541 = vld [vmem:[%s353 + $0x2f0] sm:$0xff]
        %v1542 = vld [vmem:[%s353 + $0x2f8] sm:$0xff]
        %v1543 = vld [vmem:[%s353 + $0x300] sm:$0xff]
        %v1544 = vld [vmem:[%s353 + $0x308] sm:$0xff]
        %v1545 = vld [vmem:[%s353 + $0x310] sm:$0xff]
        %v1546 = vld [vmem:[%s353 + $0x318] sm:$0xff]
        %v1547 = vld [vmem:[%s353 + $0x320] sm:$0xff]
        %v1548 = vld [vmem:[%s353 + $0x328] sm:$0xff]
        %v1549 = vld [vmem:[%s353 + $0x330] sm:$0xff]
        %v1550 = vld [vmem:[%s353 + $0x338] sm:$0xff]
        %v1551 = vld [vmem:[%s353 + $0x340] sm:$0xff]
        %v1552 = vld [vmem:[%s353 + $0x348] sm:$0xff]
        %v1553 = vld [vmem:[%s353 + $0x350] sm:$0xff]
        %v1554 = vld [vmem:[%s353 + $0x358] sm:$0xff]
        %v1555 = vld [vmem:[%s353 + $0x360] sm:$0xff]
        %v1556 = vld [vmem:[%s353 + $0x368] sm:$0xff]
        %v1557 = vld [vmem:[%s353 + $0x370] sm:$0xff]
        %v1558 = vld [vmem:[%s353 + $0x378] sm:$0xff]
        %v1559 = vld [vmem:[%s353 + $0x380] sm:$0xff]
        %v1560 = vld [vmem:[%s353 + $0x388] sm:$0xff]
        %v1561 = vld [vmem:[%s353 + $0x390] sm:$0xff]
        %v1562 = vld [vmem:[%s353 + $0x398] sm:$0xff]
        %v1563 = vld [vmem:[%s353 + $0x3a0] sm:$0xff]
        %v1564 = vld [vmem:[%s353 + $0x3a8] sm:$0xff]
        %v1565 = vld [vmem:[%s353 + $0x3b0] sm:$0xff]
        %v1566 = vld [vmem:[%s353 + $0x3b8] sm:$0xff]
        %v1567 = vld [vmem:[%s353 + $0x3c0] sm:$0xff]
        %v1568 = vld [vmem:[%s353 + $0x3c8] sm:$0xff]
        %v1569 = vld [vmem:[%s353 + $0x3d0] sm:$0xff]
        %v1570 = vld [vmem:[%s353 + $0x3d8] sm:$0xff]
        %v1571 = vld [vmem:[%s353 + $0x3e0] sm:$0xff]
        %v1572 = vld [vmem:[%s353 + $0x3e8] sm:$0xff]
        %v1573 = vld [vmem:[%s353 + $0x3f0] sm:$0xff]
        %v1574 = vld [vmem:[%s353 + $0x3f8] sm:$0xff]
        %v1575 = vld [vmem:[%s363] sm:$0xff]
        %v1576 = vld [vmem:[#allocation3] ss:$8 sm:$0xf]
        %v1577 = vld [vmem:[#allocation3] ss:$8 sm:$0xf0]
        %v1578 = vor.u32 %v1576, %v1577
        %v1707 = vunpack.c.l.b16 %v1447
        %v1708 = vunpack.c.h.b16 %v1447
        %v1709 = vunpack.c.l.b16 %v1448
        %v1710 = vunpack.c.h.b16 %v1448
        %v1711 = vunpack.c.l.b16 %v1449
        %v1712 = vunpack.c.h.b16 %v1449
        %v1713 = vunpack.c.l.b16 %v1450
        %v1714 = vunpack.c.h.b16 %v1450
        %v1715 = vunpack.c.l.b16 %v1451
        %v1716 = vunpack.c.h.b16 %v1451
        %v1717 = vunpack.c.l.b16 %v1452
        %v1718 = vunpack.c.h.b16 %v1452
        %v1719 = vunpack.c.l.b16 %v1453
        %v1720 = vunpack.c.h.b16 %v1453
        %v1721 = vunpack.c.l.b16 %v1454
        %v1722 = vunpack.c.h.b16 %v1454
        %v1723 = vunpack.c.l.b16 %v1455
        %v1724 = vunpack.c.h.b16 %v1455
        %v1725 = vunpack.c.l.b16 %v1456
        %v1726 = vunpack.c.h.b16 %v1456
        %v1727 = vunpack.c.l.b16 %v1457
        %v1728 = vunpack.c.h.b16 %v1457
        %v1729 = vunpack.c.l.b16 %v1458
        %v1730 = vunpack.c.h.b16 %v1458
        %v1731 = vunpack.c.l.b16 %v1459
        %v1732 = vunpack.c.h.b16 %v1459
        %v1733 = vunpack.c.l.b16 %v1460
        %v1734 = vunpack.c.h.b16 %v1460
        %v1735 = vunpack.c.l.b16 %v1461
        %v1736 = vunpack.c.h.b16 %v1461
        %v1737 = vunpack.c.l.b16 %v1462
        %v1738 = vunpack.c.h.b16 %v1462
        %v1739 = vunpack.c.l.b16 %v1463
        %v1740 = vunpack.c.h.b16 %v1463
        %v1741 = vunpack.c.l.b16 %v1464
        %v1742 = vunpack.c.h.b16 %v1464
        %v1743 = vunpack.c.l.b16 %v1465
        %v1744 = vunpack.c.h.b16 %v1465
        %v1745 = vunpack.c.l.b16 %v1466
        %v1746 = vunpack.c.h.b16 %v1466
        %v1747 = vunpack.c.l.b16 %v1467
        %v1748 = vunpack.c.h.b16 %v1467
        %v1749 = vunpack.c.l.b16 %v1468
        %v1750 = vunpack.c.h.b16 %v1468
        %v1751 = vunpack.c.l.b16 %v1469
        %v1752 = vunpack.c.h.b16 %v1469
        %v1753 = vunpack.c.l.b16 %v1470
        %v1754 = vunpack.c.h.b16 %v1470
        %v1755 = vunpack.c.l.b16 %v1471
        %v1756 = vunpack.c.h.b16 %v1471
        %v1757 = vunpack.c.l.b16 %v1472
        %v1758 = vunpack.c.h.b16 %v1472
        %v1759 = vunpack.c.l.b16 %v1473
        %v1760 = vunpack.c.h.b16 %v1473
        %v1761 = vunpack.c.l.b16 %v1474
        %v1762 = vunpack.c.h.b16 %v1474
        %v1763 = vunpack.c.l.b16 %v1475
        %v1764 = vunpack.c.h.b16 %v1475
        %v1765 = vunpack.c.l.b16 %v1476
        %v1766 = vunpack.c.h.b16 %v1476
        %v1767 = vunpack.c.l.b16 %v1477
        %v1768 = vunpack.c.h.b16 %v1477
        %v1769 = vunpack.c.l.b16 %v1478
        %v1770 = vunpack.c.h.b16 %v1478
        %v1771 = vunpack.c.l.b16 %v1479
        %v1772 = vunpack.c.h.b16 %v1479
        %v1773 = vunpack.c.l.b16 %v1480
        %v1774 = vunpack.c.h.b16 %v1480
        %v1775 = vunpack.c.l.b16 %v1481
        %v1776 = vunpack.c.h.b16 %v1481
        %v1777 = vunpack.c.l.b16 %v1482
        %v1778 = vunpack.c.h.b16 %v1482
        %v1779 = vunpack.c.l.b16 %v1483
        %v1780 = vunpack.c.h.b16 %v1483
        %v1781 = vunpack.c.l.b16 %v1484
        %v1782 = vunpack.c.h.b16 %v1484
        %v1783 = vunpack.c.l.b16 %v1485
        %v1784 = vunpack.c.h.b16 %v1485
        %v1785 = vunpack.c.l.b16 %v1486
        %v1786 = vunpack.c.h.b16 %v1486
        %v1787 = vunpack.c.l.b16 %v1487
        %v1788 = vunpack.c.h.b16 %v1487
        %v1789 = vunpack.c.l.b16 %v1488
        %v1790 = vunpack.c.h.b16 %v1488
        %v1791 = vunpack.c.l.b16 %v1489
        %v1792 = vunpack.c.h.b16 %v1489
        %v1793 = vunpack.c.l.b16 %v1490
        %v1794 = vunpack.c.h.b16 %v1490
        %v1795 = vunpack.c.l.b16 %v1491
        %v1796 = vunpack.c.h.b16 %v1491
        %v1797 = vunpack.c.l.b16 %v1492
        %v1798 = vunpack.c.h.b16 %v1492
        %v1799 = vunpack.c.l.b16 %v1493
        %v1800 = vunpack.c.h.b16 %v1493
        %v1801 = vunpack.c.l.b16 %v1494
        %v1802 = vunpack.c.h.b16 %v1494
        %v1803 = vunpack.c.l.b16 %v1495
        %v1804 = vunpack.c.h.b16 %v1495
        %v1805 = vunpack.c.l.b16 %v1496
        %v1806 = vunpack.c.h.b16 %v1496
        %v1807 = vunpack.c.l.b16 %v1497
        %v1808 = vunpack.c.h.b16 %v1497
        %v1809 = vunpack.c.l.b16 %v1498
        %v1810 = vunpack.c.h.b16 %v1498
        %v1811 = vunpack.c.l.b16 %v1499
        %v1812 = vunpack.c.h.b16 %v1499
        %v1813 = vunpack.c.l.b16 %v1500
        %v1814 = vunpack.c.h.b16 %v1500
        %v1815 = vunpack.c.l.b16 %v1501
        %v1816 = vunpack.c.h.b16 %v1501
        %v1817 = vunpack.c.l.b16 %v1502
        %v1818 = vunpack.c.h.b16 %v1502
        %v1819 = vunpack.c.l.b16 %v1503
        %v1820 = vunpack.c.h.b16 %v1503
        %v1821 = vunpack.c.l.b16 %v1504
        %v1822 = vunpack.c.h.b16 %v1504
        %v1823 = vunpack.c.l.b16 %v1505
        %v1824 = vunpack.c.h.b16 %v1505
        %v1825 = vunpack.c.l.b16 %v1506
        %v1826 = vunpack.c.h.b16 %v1506
        %v1827 = vunpack.c.l.b16 %v1507
        %v1828 = vunpack.c.h.b16 %v1507
        %v1829 = vunpack.c.l.b16 %v1508
        %v1830 = vunpack.c.h.b16 %v1508
        %v1831 = vunpack.c.l.b16 %v1509
        %v1832 = vunpack.c.h.b16 %v1509
        %v1833 = vunpack.c.l.b16 %v1510
        %v1834 = vunpack.c.h.b16 %v1510
        %v1835 = vunpack.c.l.b16 %v1511
        %v1836 = vunpack.c.h.b16 %v1511
        %v1837 = vunpack.c.l.b16 %v1512
        %v1838 = vunpack.c.h.b16 %v1512
        %v1839 = vunpack.c.l.b16 %v1513
        %v1840 = vunpack.c.h.b16 %v1513
        %v1841 = vunpack.c.l.b16 %v1514
        %v1842 = vunpack.c.h.b16 %v1514
        %v1843 = vunpack.c.l.b16 %v1515
        %v1844 = vunpack.c.h.b16 %v1515
        %v1845 = vunpack.c.l.b16 %v1516
        %v1846 = vunpack.c.h.b16 %v1516
        %v1847 = vunpack.c.l.b16 %v1517
        %v1848 = vunpack.c.h.b16 %v1517
        %v1849 = vunpack.c.l.b16 %v1518
        %v1850 = vunpack.c.h.b16 %v1518
        %v1851 = vunpack.c.l.b16 %v1519
        %v1852 = vunpack.c.h.b16 %v1519
        %v1853 = vunpack.c.l.b16 %v1520
        %v1854 = vunpack.c.h.b16 %v1520
        %v1855 = vunpack.c.l.b16 %v1521
        %v1856 = vunpack.c.h.b16 %v1521
        %v1857 = vunpack.c.l.b16 %v1522
        %v1858 = vunpack.c.h.b16 %v1522
        %v1859 = vunpack.c.l.b16 %v1523
        %v1860 = vunpack.c.h.b16 %v1523
        %v1861 = vunpack.c.l.b16 %v1524
        %v1862 = vunpack.c.h.b16 %v1524
        %v1863 = vunpack.c.l.b16 %v1525
        %v1864 = vunpack.c.h.b16 %v1525
        %v1865 = vunpack.c.l.b16 %v1526
        %v1866 = vunpack.c.h.b16 %v1526
        %v1867 = vunpack.c.l.b16 %v1527
        %v1868 = vunpack.c.h.b16 %v1527
        %v1869 = vunpack.c.l.b16 %v1528
        %v1870 = vunpack.c.h.b16 %v1528
        %v1871 = vunpack.c.l.b16 %v1529
        %v1872 = vunpack.c.h.b16 %v1529
        %v1873 = vunpack.c.l.b16 %v1530
        %v1874 = vunpack.c.h.b16 %v1530
        %v1875 = vunpack.c.l.b16 %v1531
        %v1876 = vunpack.c.h.b16 %v1531
        %v1877 = vunpack.c.l.b16 %v1532
        %v1878 = vunpack.c.h.b16 %v1532
        %v1879 = vunpack.c.l.b16 %v1533
        %v1880 = vunpack.c.h.b16 %v1533
        %v1881 = vunpack.c.l.b16 %v1534
        %v1882 = vunpack.c.h.b16 %v1534
        %v1883 = vunpack.c.l.b16 %v1535
        %v1884 = vunpack.c.h.b16 %v1535
        %v1885 = vunpack.c.l.b16 %v1536
        %v1886 = vunpack.c.h.b16 %v1536
        %v1887 = vunpack.c.l.b16 %v1537
        %v1888 = vunpack.c.h.b16 %v1537
        %v1889 = vunpack.c.l.b16 %v1538
        %v1890 = vunpack.c.h.b16 %v1538
        %v1891 = vunpack.c.l.b16 %v1539
        %v1892 = vunpack.c.h.b16 %v1539
        %v1893 = vunpack.c.l.b16 %v1540
        %v1894 = vunpack.c.h.b16 %v1540
        %v1895 = vunpack.c.l.b16 %v1541
        %v1896 = vunpack.c.h.b16 %v1541
        %v1897 = vunpack.c.l.b16 %v1542
        %v1898 = vunpack.c.h.b16 %v1542
        %v1899 = vunpack.c.l.b16 %v1543
        %v1900 = vunpack.c.h.b16 %v1543
        %v1901 = vunpack.c.l.b16 %v1544
        %v1902 = vunpack.c.h.b16 %v1544
        %v1903 = vunpack.c.l.b16 %v1545
        %v1904 = vunpack.c.h.b16 %v1545
        %v1905 = vunpack.c.l.b16 %v1546
        %v1906 = vunpack.c.h.b16 %v1546
        %v1907 = vunpack.c.l.b16 %v1547
        %v1908 = vunpack.c.h.b16 %v1547
        %v1909 = vunpack.c.l.b16 %v1548
        %v1910 = vunpack.c.h.b16 %v1548
        %v1911 = vunpack.c.l.b16 %v1549
        %v1912 = vunpack.c.h.b16 %v1549
        %v1913 = vunpack.c.l.b16 %v1550
        %v1914 = vunpack.c.h.b16 %v1550
        %v1915 = vunpack.c.l.b16 %v1551
        %v1916 = vunpack.c.h.b16 %v1551
        %v1917 = vunpack.c.l.b16 %v1552
        %v1918 = vunpack.c.h.b16 %v1552
        %v1919 = vunpack.c.l.b16 %v1553
        %v1920 = vunpack.c.h.b16 %v1553
        %v1921 = vunpack.c.l.b16 %v1554
        %v1922 = vunpack.c.h.b16 %v1554
        %v1923 = vunpack.c.l.b16 %v1555
        %v1924 = vunpack.c.h.b16 %v1555
        %v1925 = vunpack.c.l.b16 %v1556
        %v1926 = vunpack.c.h.b16 %v1556
        %v1927 = vunpack.c.l.b16 %v1557
        %v1928 = vunpack.c.h.b16 %v1557
        %v1929 = vunpack.c.l.b16 %v1558
        %v1930 = vunpack.c.h.b16 %v1558
        %v1931 = vunpack.c.l.b16 %v1559
        %v1932 = vunpack.c.h.b16 %v1559
        %v1933 = vunpack.c.l.b16 %v1560
        %v1934 = vunpack.c.h.b16 %v1560
        %v1935 = vunpack.c.l.b16 %v1561
        %v1936 = vunpack.c.h.b16 %v1561
        %v1937 = vunpack.c.l.b16 %v1562
        %v1938 = vunpack.c.h.b16 %v1562
        %v1939 = vunpack.c.l.b16 %v1563
        %v1940 = vunpack.c.h.b16 %v1563
        %v1941 = vunpack.c.l.b16 %v1564
        %v1942 = vunpack.c.h.b16 %v1564
        %v1943 = vunpack.c.l.b16 %v1565
        %v1944 = vunpack.c.h.b16 %v1565
        %v1945 = vunpack.c.l.b16 %v1566
        %v1946 = vunpack.c.h.b16 %v1566
        %v1947 = vunpack.c.l.b16 %v1567
        %v1948 = vunpack.c.h.b16 %v1567
        %v1949 = vunpack.c.l.b16 %v1568
        %v1950 = vunpack.c.h.b16 %v1568
        %v1951 = vunpack.c.l.b16 %v1569
        %v1952 = vunpack.c.h.b16 %v1569
        %v1953 = vunpack.c.l.b16 %v1570
        %v1954 = vunpack.c.h.b16 %v1570
        %v1955 = vunpack.c.l.b16 %v1571
        %v1956 = vunpack.c.h.b16 %v1571
        %v1957 = vunpack.c.l.b16 %v1572
        %v1958 = vunpack.c.h.b16 %v1572
        %v1959 = vunpack.c.l.b16 %v1573
        %v1960 = vunpack.c.h.b16 %v1573
        %v1961 = vunpack.c.l.b16 %v1574
        %v1962 = vunpack.c.h.b16 %v1574
        %v1963 = vpack.c.b16 %v1715, %v1707
        %v1964 = vpack.c.b16 %v1716, %v1708
        %v1965 = vpack.c.b16 %v1717, %v1709
        %v1966 = vpack.c.b16 %v1718, %v1710
        %v1967 = vpack.c.b16 %v1719, %v1711
        %v1968 = vpack.c.b16 %v1720, %v1712
        %v1969 = vpack.c.b16 %v1721, %v1713
        %v1970 = vpack.c.b16 %v1722, %v1714
        %v1971 = vpack.c.b16 %v1731, %v1723
        %v1972 = vpack.c.b16 %v1732, %v1724
        %v1973 = vpack.c.b16 %v1733, %v1725
        %v1974 = vpack.c.b16 %v1734, %v1726
        %v1975 = vpack.c.b16 %v1735, %v1727
        %v1976 = vpack.c.b16 %v1736, %v1728
        %v1977 = vpack.c.b16 %v1737, %v1729
        %v1978 = vpack.c.b16 %v1738, %v1730
        %v1979 = vpack.c.b16 %v1747, %v1739
        %v1980 = vpack.c.b16 %v1748, %v1740
        %v1981 = vpack.c.b16 %v1749, %v1741
        %v1982 = vpack.c.b16 %v1750, %v1742
        %v1983 = vpack.c.b16 %v1751, %v1743
        %v1984 = vpack.c.b16 %v1752, %v1744
        %v1985 = vpack.c.b16 %v1753, %v1745
        %v1986 = vpack.c.b16 %v1754, %v1746
        %v1987 = vpack.c.b16 %v1763, %v1755
        %v1988 = vpack.c.b16 %v1764, %v1756
        %v1989 = vpack.c.b16 %v1765, %v1757
        %v1990 = vpack.c.b16 %v1766, %v1758
        %v1991 = vpack.c.b16 %v1767, %v1759
        %v1992 = vpack.c.b16 %v1768, %v1760
        %v1993 = vpack.c.b16 %v1769, %v1761
        %v1994 = vpack.c.b16 %v1770, %v1762
        %v1995 = vpack.c.b16 %v1779, %v1771
        %v1996 = vpack.c.b16 %v1780, %v1772
        %v1997 = vpack.c.b16 %v1781, %v1773
        %v1998 = vpack.c.b16 %v1782, %v1774
        %v1999 = vpack.c.b16 %v1783, %v1775
        %v2000 = vpack.c.b16 %v1784, %v1776
        %v2001 = vpack.c.b16 %v1785, %v1777
        %v2002 = vpack.c.b16 %v1786, %v1778
        %v2003 = vpack.c.b16 %v1795, %v1787
        %v2004 = vpack.c.b16 %v1796, %v1788
        %v2005 = vpack.c.b16 %v1797, %v1789
        %v2006 = vpack.c.b16 %v1798, %v1790
        %v2007 = vpack.c.b16 %v1799, %v1791
        %v2008 = vpack.c.b16 %v1800, %v1792
        %v2009 = vpack.c.b16 %v1801, %v1793
        %v2010 = vpack.c.b16 %v1802, %v1794
        %v2011 = vpack.c.b16 %v1811, %v1803
        %v2012 = vpack.c.b16 %v1812, %v1804
        %v2013 = vpack.c.b16 %v1813, %v1805
        %v2014 = vpack.c.b16 %v1814, %v1806
        %v2015 = vpack.c.b16 %v1815, %v1807
        %v2016 = vpack.c.b16 %v1816, %v1808
        %v2017 = vpack.c.b16 %v1817, %v1809
        %v2018 = vpack.c.b16 %v1818, %v1810
        %v2019 = vpack.c.b16 %v1827, %v1819
        %v2020 = vpack.c.b16 %v1828, %v1820
        %v2021 = vpack.c.b16 %v1829, %v1821
        %v2022 = vpack.c.b16 %v1830, %v1822
        %v2023 = vpack.c.b16 %v1831, %v1823
        %v2024 = vpack.c.b16 %v1832, %v1824
        %v2025 = vpack.c.b16 %v1833, %v1825
        %v2026 = vpack.c.b16 %v1834, %v1826
        %v2027 = vpack.c.b16 %v1843, %v1835
        %v2028 = vpack.c.b16 %v1844, %v1836
        %v2029 = vpack.c.b16 %v1845, %v1837
        %v2030 = vpack.c.b16 %v1846, %v1838
        %v2031 = vpack.c.b16 %v1847, %v1839
        %v2032 = vpack.c.b16 %v1848, %v1840
        %v2033 = vpack.c.b16 %v1849, %v1841
        %v2034 = vpack.c.b16 %v1850, %v1842
        %v2035 = vpack.c.b16 %v1859, %v1851
        %v2036 = vpack.c.b16 %v1860, %v1852
        %v2037 = vpack.c.b16 %v1861, %v1853
        %v2038 = vpack.c.b16 %v1862, %v1854
        %v2039 = vpack.c.b16 %v1863, %v1855
        %v2040 = vpack.c.b16 %v1864, %v1856
        %v2041 = vpack.c.b16 %v1865, %v1857
        %v2042 = vpack.c.b16 %v1866, %v1858
        %v2043 = vpack.c.b16 %v1875, %v1867
        %v2044 = vpack.c.b16 %v1876, %v1868
        %v2045 = vpack.c.b16 %v1877, %v1869
        %v2046 = vpack.c.b16 %v1878, %v1870
        %v2047 = vpack.c.b16 %v1879, %v1871
        %v2048 = vpack.c.b16 %v1880, %v1872
        %v2049 = vpack.c.b16 %v1881, %v1873
        %v2050 = vpack.c.b16 %v1882, %v1874
        %v2051 = vpack.c.b16 %v1891, %v1883
        %v2052 = vpack.c.b16 %v1892, %v1884
        %v2053 = vpack.c.b16 %v1893, %v1885
        %v2054 = vpack.c.b16 %v1894, %v1886
        %v2055 = vpack.c.b16 %v1895, %v1887
        %v2056 = vpack.c.b16 %v1896, %v1888
        %v2057 = vpack.c.b16 %v1897, %v1889
        %v2058 = vpack.c.b16 %v1898, %v1890
        %v2059 = vpack.c.b16 %v1907, %v1899
        %v2060 = vpack.c.b16 %v1908, %v1900
        %v2061 = vpack.c.b16 %v1909, %v1901
        %v2062 = vpack.c.b16 %v1910, %v1902
        %v2063 = vpack.c.b16 %v1911, %v1903
        %v2064 = vpack.c.b16 %v1912, %v1904
        %v2065 = vpack.c.b16 %v1913, %v1905
        %v2066 = vpack.c.b16 %v1914, %v1906
        %v2067 = vpack.c.b16 %v1923, %v1915
        %v2068 = vpack.c.b16 %v1924, %v1916
        %v2069 = vpack.c.b16 %v1925, %v1917
        %v2070 = vpack.c.b16 %v1926, %v1918
        %v2071 = vpack.c.b16 %v1927, %v1919
        %v2072 = vpack.c.b16 %v1928, %v1920
        %v2073 = vpack.c.b16 %v1929, %v1921
        %v2074 = vpack.c.b16 %v1930, %v1922
        %v2075 = vpack.c.b16 %v1939, %v1931
        %v2076 = vpack.c.b16 %v1940, %v1932
        %v2077 = vpack.c.b16 %v1941, %v1933
        %v2078 = vpack.c.b16 %v1942, %v1934
        %v2079 = vpack.c.b16 %v1943, %v1935
        %v2080 = vpack.c.b16 %v1944, %v1936
        %v2081 = vpack.c.b16 %v1945, %v1937
        %v2082 = vpack.c.b16 %v1946, %v1938
        %v2083 = vpack.c.b16 %v1955, %v1947
        %v2084 = vpack.c.b16 %v1956, %v1948
        %v2085 = vpack.c.b16 %v1957, %v1949
        %v2086 = vpack.c.b16 %v1958, %v1950
        %v2087 = vpack.c.b16 %v1959, %v1951
        %v2088 = vpack.c.b16 %v1960, %v1952
        %v2089 = vpack.c.b16 %v1961, %v1953
        %v2090 = vpack.c.b16 %v1962, %v1954
        %v2220 = vperm.slane %v1578, 0
        %v2221 = vperm.slane %v1578, 1
        %v2222 = vperm.slane %v1578, 2
        %v2223 = vperm.slane %v1578, 3
        %v2224 = vperm.slane %v1578, 4
        %v2225 = vperm.slane %v1578, 5
        %v2226 = vperm.slane %v1578, 6
        %v2227 = vperm.slane %v1578, 7
        %2236 = vmatpush.bf16.msra.mxu0 %v2019
        %2237 = vmatpush.bf16.msra.mxu0 %v2011
        %2238 = vmatpush.bf16.msra.mxu0 %v2003
        %2239 = vmatpush.bf16.msra.mxu0 %v1995
        %2240 = vmatpush.bf16.msra.mxu0 %v1987
        %2241 = vmatpush.bf16.msra.mxu0 %v1979
        %2242 = vmatpush.bf16.msra.mxu0 %v1971
        %2243 = vmatpush.bf16.msra.mxu0 %v1963
        %2244 = vmatmul.bf16.gmra.mxu0 0
        %v2245 = vpop.f32.mrf.mxu0
        %v2246 = vadd.f32 %v2220, %v2245
        %v2247 = vpop.f32.mrf.mxu0
        %2248 = vdwg.mxu0
        %2249 = vmatpush.bf16.msra.mxu0 %v2083
        %2250 = vmatpush.bf16.msra.mxu0 %v2075
        %2251 = vmatpush.bf16.msra.mxu0 %v2067
        %2252 = vmatpush.bf16.msra.mxu0 %v2059
        %2253 = vmatpush.bf16.msra.mxu0 %v2051
        %2254 = vmatpush.bf16.msra.mxu0 %v2043
        %2255 = vmatpush.bf16.msra.mxu0 %v2035
        %2256 = vmatpush.bf16.msra.mxu0 %v2027
        %2257 = vmatmul.bf16.gmra.mxu0 0
        %v2258 = vpop.f32.mrf.mxu0
        %v2259 = vadd.f32 %v2246, %v2258
        %v2260 = vpop.f32.mrf.mxu0
        %2261 = vdwg.mxu0
        %2262 = vmatpush.bf16.msra.mxu0 %v2020
        %2263 = vmatpush.bf16.msra.mxu0 %v2012
        %2264 = vmatpush.bf16.msra.mxu0 %v2004
        %2265 = vmatpush.bf16.msra.mxu0 %v1996
        %2266 = vmatpush.bf16.msra.mxu0 %v1988
        %2267 = vmatpush.bf16.msra.mxu0 %v1980
        %2268 = vmatpush.bf16.msra.mxu0 %v1972
        %2269 = vmatpush.bf16.msra.mxu0 %v1964
        %2270 = vmatmul.bf16.gmra.mxu0 0
        %v2271 = vpop.f32.mrf.mxu0
        %v2272 = vadd.f32 %v2221, %v2271
        %v2273 = vpop.f32.mrf.mxu0
        %2274 = vdwg.mxu0
        %2275 = vmatpush.bf16.msra.mxu0 %v2084
        %2276 = vmatpush.bf16.msra.mxu0 %v2076
        %2277 = vmatpush.bf16.msra.mxu0 %v2068
        %2278 = vmatpush.bf16.msra.mxu0 %v2060
        %2279 = vmatpush.bf16.msra.mxu0 %v2052
        %2280 = vmatpush.bf16.msra.mxu0 %v2044
        %2281 = vmatpush.bf16.msra.mxu0 %v2036
        %2282 = vmatpush.bf16.msra.mxu0 %v2028
        %2283 = vmatmul.bf16.gmra.mxu0 0
        %v2284 = vpop.f32.mrf.mxu0
        %v2285 = vadd.f32 %v2272, %v2284
        %v2286 = vpop.f32.mrf.mxu0
        %2287 = vdwg.mxu0
        %2288 = vmatpush.bf16.msra.mxu0 %v2021
        %2289 = vmatpush.bf16.msra.mxu0 %v2013
        %2290 = vmatpush.bf16.msra.mxu0 %v2005
        %2291 = vmatpush.bf16.msra.mxu0 %v1997
        %2292 = vmatpush.bf16.msra.mxu0 %v1989
        %2293 = vmatpush.bf16.msra.mxu0 %v1981
        %2294 = vmatpush.bf16.msra.mxu0 %v1973
        %2295 = vmatpush.bf16.msra.mxu0 %v1965
        %2296 = vmatmul.bf16.gmra.mxu0 0
        %v2297 = vpop.f32.mrf.mxu0
        %v2298 = vadd.f32 %v2222, %v2297
        %v2299 = vpop.f32.mrf.mxu0
        %2300 = vdwg.mxu0
        %2301 = vmatpush.bf16.msra.mxu0 %v2085
        %2302 = vmatpush.bf16.msra.mxu0 %v2077
        %2303 = vmatpush.bf16.msra.mxu0 %v2069
        %2304 = vmatpush.bf16.msra.mxu0 %v2061
        %2305 = vmatpush.bf16.msra.mxu0 %v2053
        %2306 = vmatpush.bf16.msra.mxu0 %v2045
        %2307 = vmatpush.bf16.msra.mxu0 %v2037
        %2308 = vmatpush.bf16.msra.mxu0 %v2029
        %2309 = vmatmul.bf16.gmra.mxu0 0
        %v2310 = vpop.f32.mrf.mxu0
        %v2311 = vadd.f32 %v2298, %v2310
        %v2312 = vpop.f32.mrf.mxu0
        %2313 = vdwg.mxu0
        %2314 = vmatpush.bf16.msra.mxu0 %v2022
        %2315 = vmatpush.bf16.msra.mxu0 %v2014
        %2316 = vmatpush.bf16.msra.mxu0 %v2006
        %2317 = vmatpush.bf16.msra.mxu0 %v1998
        %2318 = vmatpush.bf16.msra.mxu0 %v1990
        %2319 = vmatpush.bf16.msra.mxu0 %v1982
        %2320 = vmatpush.bf16.msra.mxu0 %v1974
        %2321 = vmatpush.bf16.msra.mxu0 %v1966
        %2322 = vmatmul.bf16.gmra.mxu0 0
        %v2323 = vpop.f32.mrf.mxu0
        %v2324 = vadd.f32 %v2223, %v2323
        %v2325 = vpop.f32.mrf.mxu0
        %2326 = vdwg.mxu0
        %2327 = vmatpush.bf16.msra.mxu0 %v2086
        %2328 = vmatpush.bf16.msra.mxu0 %v2078
        %2329 = vmatpush.bf16.msra.mxu0 %v2070
        %2330 = vmatpush.bf16.msra.mxu0 %v2062
        %2331 = vmatpush.bf16.msra.mxu0 %v2054
        %2332 = vmatpush.bf16.msra.mxu0 %v2046
        %2333 = vmatpush.bf16.msra.mxu0 %v2038
        %2334 = vmatpush.bf16.msra.mxu0 %v2030
        %2335 = vmatmul.bf16.gmra.mxu0 0
        %v2336 = vpop.f32.mrf.mxu0
        %v2337 = vadd.f32 %v2324, %v2336
        %v2338 = vpop.f32.mrf.mxu0
        %2339 = vdwg.mxu0
        %2340 = vmatpush.bf16.msra.mxu0 %v2023
        %2341 = vmatpush.bf16.msra.mxu0 %v2015
        %2342 = vmatpush.bf16.msra.mxu0 %v2007
        %2343 = vmatpush.bf16.msra.mxu0 %v1999
        %2344 = vmatpush.bf16.msra.mxu0 %v1991
        %2345 = vmatpush.bf16.msra.mxu0 %v1983
        %2346 = vmatpush.bf16.msra.mxu0 %v1975
        %2347 = vmatpush.bf16.msra.mxu0 %v1967
        %2348 = vmatmul.bf16.gmra.mxu0 0
        %v2349 = vpop.f32.mrf.mxu0
        %v2350 = vadd.f32 %v2224, %v2349
        %v2351 = vpop.f32.mrf.mxu0
        %2352 = vdwg.mxu0
        %2353 = vmatpush.bf16.msra.mxu0 %v2087
        %2354 = vmatpush.bf16.msra.mxu0 %v2079
        %2355 = vmatpush.bf16.msra.mxu0 %v2071
        %2356 = vmatpush.bf16.msra.mxu0 %v2063
        %2357 = vmatpush.bf16.msra.mxu0 %v2055
        %2358 = vmatpush.bf16.msra.mxu0 %v2047
        %2359 = vmatpush.bf16.msra.mxu0 %v2039
        %2360 = vmatpush.bf16.msra.mxu0 %v2031
        %2361 = vmatmul.bf16.gmra.mxu0 0
        %v2362 = vpop.f32.mrf.mxu0
        %v2363 = vadd.f32 %v2350, %v2362
        %v2364 = vpop.f32.mrf.mxu0
        %2365 = vdwg.mxu0
        %2366 = vmatpush.bf16.msra.mxu0 %v2024
        %2367 = vmatpush.bf16.msra.mxu0 %v2016
        %2368 = vmatpush.bf16.msra.mxu0 %v2008
        %2369 = vmatpush.bf16.msra.mxu0 %v2000
        %2370 = vmatpush.bf16.msra.mxu0 %v1992
        %2371 = vmatpush.bf16.msra.mxu0 %v1984
        %2372 = vmatpush.bf16.msra.mxu0 %v1976
        %2373 = vmatpush.bf16.msra.mxu0 %v1968
        %2374 = vmatmul.bf16.gmra.mxu0 0
        %v2375 = vpop.f32.mrf.mxu0
        %v2376 = vadd.f32 %v2225, %v2375
        %v2377 = vpop.f32.mrf.mxu0
        %2378 = vdwg.mxu0
        %2379 = vmatpush.bf16.msra.mxu0 %v2088
        %2380 = vmatpush.bf16.msra.mxu0 %v2080
        %2381 = vmatpush.bf16.msra.mxu0 %v2072
        %2382 = vmatpush.bf16.msra.mxu0 %v2064
        %2383 = vmatpush.bf16.msra.mxu0 %v2056
        %2384 = vmatpush.bf16.msra.mxu0 %v2048
        %2385 = vmatpush.bf16.msra.mxu0 %v2040
        %2386 = vmatpush.bf16.msra.mxu0 %v2032
        %2387 = vmatmul.bf16.gmra.mxu0 0
        %v2388 = vpop.f32.mrf.mxu0
        %v2389 = vadd.f32 %v2376, %v2388
        %v2390 = vpop.f32.mrf.mxu0
        %2391 = vdwg.mxu0
        %2392 = vmatpush.bf16.msra.mxu0 %v2025
        %2393 = vmatpush.bf16.msra.mxu0 %v2017
        %2394 = vmatpush.bf16.msra.mxu0 %v2009
        %2395 = vmatpush.bf16.msra.mxu0 %v2001
        %2396 = vmatpush.bf16.msra.mxu0 %v1993
        %2397 = vmatpush.bf16.msra.mxu0 %v1985
        %2398 = vmatpush.bf16.msra.mxu0 %v1977
        %2399 = vmatpush.bf16.msra.mxu0 %v1969
        %2400 = vmatmul.bf16.gmra.mxu0 0
        %v2401 = vpop.f32.mrf.mxu0
        %v2402 = vadd.f32 %v2226, %v2401
        %v2403 = vpop.f32.mrf.mxu0
        %2404 = vdwg.mxu0
        %2405 = vmatpush.bf16.msra.mxu0 %v2089
        %2406 = vmatpush.bf16.msra.mxu0 %v2081
        %2407 = vmatpush.bf16.msra.mxu0 %v2073
        %2408 = vmatpush.bf16.msra.mxu0 %v2065
        %2409 = vmatpush.bf16.msra.mxu0 %v2057
        %2410 = vmatpush.bf16.msra.mxu0 %v2049
        %2411 = vmatpush.bf16.msra.mxu0 %v2041
        %2412 = vmatpush.bf16.msra.mxu0 %v2033
        %2413 = vmatmul.bf16.gmra.mxu0 0
        %v2414 = vpop.f32.mrf.mxu0
        %v2415 = vadd.f32 %v2402, %v2414
        %v2416 = vpop.f32.mrf.mxu0
        %2417 = vdwg.mxu0
        %2418 = vmatpush.bf16.msra.mxu0 %v2026
        %2419 = vmatpush.bf16.msra.mxu0 %v2018
        %2420 = vmatpush.bf16.msra.mxu0 %v2010
        %2421 = vmatpush.bf16.msra.mxu0 %v2002
        %2422 = vmatpush.bf16.msra.mxu0 %v1994
        %2423 = vmatpush.bf16.msra.mxu0 %v1986
        %2424 = vmatpush.bf16.msra.mxu0 %v1978
        %2425 = vmatpush.bf16.msra.mxu0 %v1970
        %2426 = vmatmul.bf16.gmra.mxu0 0
        %v2427 = vpop.f32.mrf.mxu0
        %v2428 = vadd.f32 %v2227, %v2427
        %v2429 = vpop.f32.mrf.mxu0
        %2430 = vdwg.mxu0
        %2431 = vmatpush.bf16.msra.mxu0 %v2090
        %2432 = vmatpush.bf16.msra.mxu0 %v2082
        %2433 = vmatpush.bf16.msra.mxu0 %v2074
        %2434 = vmatpush.bf16.msra.mxu0 %v2066
        %2435 = vmatpush.bf16.msra.mxu0 %v2058
        %2436 = vmatpush.bf16.msra.mxu0 %v2050
        %2437 = vmatpush.bf16.msra.mxu0 %v2042
        %2438 = vmatpush.bf16.msra.mxu0 %v2034
        %2439 = vmatmul.bf16.gmra.mxu0 0
        %v2440 = vpop.f32.mrf.mxu0
        %v2441 = vadd.f32 %v2428, %v2440
        %v2442 = vpop.f32.mrf.mxu0
        %2443 = vdwg.mxu0
        %v2445 = vperm.slane %v1575, 0
        %v2446 = vperm.slane %v1575, 1
        %v2447 = vperm.slane %v1575, 2
        %v2448 = vperm.slane %v1575, 3
        %v2449 = vperm.slane %v1575, 4
        %v2450 = vperm.slane %v1575, 5
        %v2451 = vperm.slane %v1575, 6
        %v2452 = vperm.slane %v1575, 7
        %v2461 = vadd.f32 %v2259, %v2445
        %v2462 = vadd.f32 %v2285, %v2446
        %v2463 = vadd.f32 %v2311, %v2447
        %v2464 = vadd.f32 %v2337, %v2448
        %v2465 = vadd.f32 %v2363, %v2449
        %v2466 = vadd.f32 %v2389, %v2450
        %v2467 = vadd.f32 %v2415, %v2451
        %v2468 = vadd.f32 %v2441, %v2452
        %v2469 = vxor.u32 %v2461, 2147483648
        %v2470 = vxor.u32 %v2462, 2147483648
        %v2471 = vxor.u32 %v2463, 2147483648
        %v2472 = vxor.u32 %v2464, 2147483648
        %v2473 = vxor.u32 %v2465, 2147483648
        %v2474 = vxor.u32 %v2466, 2147483648
        %v2475 = vmul.f32 %v2469, 1.442695
        %v2476 = vpow.pop %v2475
        %v2477 = vmul.f32 %v2470, 1.442695
        %v2478 = vpow.pop %v2477
        %v2479 = vmul.f32 %v2471, 1.442695
        %v2480 = vpow.pop %v2479
        %v2481 = vmul.f32 %v2472, 1.442695
        %v2482 = vpow.pop %v2481
        %v2483 = vmul.f32 %v2473, 1.442695
        %v2484 = vpow.pop %v2483
        %v2485 = vmul.f32 %v2474, 1.442695
        %v2486 = vpow.pop %v2485
        %v2487 = vadd.f32 %v2476, 1.0
        %v2488 = vadd.f32 %v2478, 1.0
        %v2489 = vadd.f32 %v2480, 1.0
        %v2490 = vadd.f32 %v2482, 1.0
        %v2491 = vadd.f32 %v2484, 1.0
        %v2492 = vadd.f32 %v2486, 1.0
        %v2493 = vrcp.pop %v2487
        %v2494 = vmul.f32 %v2487, %v2493
        %v2495 = vsub.f32 1.0, %v2494
        %v2496 = vmul.f32 %v2493, %v2495
        %v2497 = vadd.f32 %v2493, %v2496
        %vm2498 = vweird.f32 %v2487
        %vm2499 = vweird.f32 %v2493
        %vm2500 = vmor %vm2498, %vm2499
        %v2501 = vsel %vm2500, %v2493, %v2497
        %v2502 = vand.u32 2147483647, %v2487
        %vm2503 = vcmp.eq.f32.partialorder %v2502, 8.507059e+37
        %v2504 = vand.u32 %v2487, 2147483648
        %v2505 = vor.u32 1.1754944e-38, %v2504
        %v2506 = vsel %vm2503, %v2505, %v2501
        %v2507 = vmul.f32 1.0, %v2506
        %v2508 = vrcp.pop %v2488
        %v2509 = vmul.f32 %v2488, %v2508
        %v2510 = vsub.f32 1.0, %v2509
        %v2511 = vmul.f32 %v2508, %v2510
        %v2512 = vadd.f32 %v2508, %v2511
        %vm2513 = vweird.f32 %v2488
        %vm2514 = vweird.f32 %v2508
        %vm2515 = vmor %vm2513, %vm2514
        %v2516 = vsel %vm2515, %v2508, %v2512
        %v2517 = vand.u32 2147483647, %v2488
        %vm2518 = vcmp.eq.f32.partialorder %v2517, 8.507059e+37
        %v2519 = vand.u32 %v2488, 2147483648
        %v2520 = vor.u32 1.1754944e-38, %v2519
        %v2521 = vsel %vm2518, %v2520, %v2516
        %v2522 = vmul.f32 1.0, %v2521
        %v2523 = vrcp.pop %v2489
        %v2524 = vmul.f32 %v2489, %v2523
        %v2525 = vsub.f32 1.0, %v2524
        %v2526 = vmul.f32 %v2523, %v2525
        %v2527 = vadd.f32 %v2523, %v2526
        %vm2528 = vweird.f32 %v2489
        %vm2529 = vweird.f32 %v2523
        %vm2530 = vmor %vm2528, %vm2529
        %v2531 = vsel %vm2530, %v2523, %v2527
        %v2532 = vand.u32 2147483647, %v2489
        %vm2533 = vcmp.eq.f32.partialorder %v2532, 8.507059e+37
        %v2534 = vand.u32 %v2489, 2147483648
        %v2535 = vor.u32 1.1754944e-38, %v2534
        %v2536 = vsel %vm2533, %v2535, %v2531
        %v2537 = vmul.f32 1.0, %v2536
        %v2538 = vrcp.pop %v2490
        %v2539 = vmul.f32 %v2490, %v2538
        %v2540 = vsub.f32 1.0, %v2539
        %v2541 = vmul.f32 %v2538, %v2540
        %v2542 = vadd.f32 %v2538, %v2541
        %vm2543 = vweird.f32 %v2490
        %vm2544 = vweird.f32 %v2538
        %vm2545 = vmor %vm2543, %vm2544
        %v2546 = vsel %vm2545, %v2538, %v2542
        %v2547 = vand.u32 2147483647, %v2490
        %vm2548 = vcmp.eq.f32.partialorder %v2547, 8.507059e+37
        %v2549 = vand.u32 %v2490, 2147483648
        %v2550 = vor.u32 1.1754944e-38, %v2549
        %v2551 = vsel %vm2548, %v2550, %v2546
        %v2552 = vmul.f32 1.0, %v2551
        %v2553 = vrcp.pop %v2491
        %v2554 = vmul.f32 %v2491, %v2553
        %v2555 = vsub.f32 1.0, %v2554
        %v2556 = vmul.f32 %v2553, %v2555
        %v2557 = vadd.f32 %v2553, %v2556
        %vm2558 = vweird.f32 %v2491
        %vm2559 = vweird.f32 %v2553
        %vm2560 = vmor %vm2558, %vm2559
        %v2561 = vsel %vm2560, %v2553, %v2557
        %v2562 = vand.u32 2147483647, %v2491
        %vm2563 = vcmp.eq.f32.partialorder %v2562, 8.507059e+37
        %v2564 = vand.u32 %v2491, 2147483648
        %v2565 = vor.u32 1.1754944e-38, %v2564
        %v2566 = vsel %vm2563, %v2565, %v2561
        %v2567 = vmul.f32 1.0, %v2566
        %v2568 = vrcp.pop %v2492
        %v2569 = vmul.f32 %v2492, %v2568
        %v2570 = vsub.f32 1.0, %v2569
        %v2571 = vmul.f32 %v2568, %v2570
        %v2572 = vadd.f32 %v2568, %v2571
        %vm2573 = vweird.f32 %v2492
        %vm2574 = vweird.f32 %v2568
        %vm2575 = vmor %vm2573, %vm2574
        %v2576 = vsel %vm2575, %v2568, %v2572
        %v2577 = vand.u32 2147483647, %v2492
        %vm2578 = vcmp.eq.f32.partialorder %v2577, 8.507059e+37
        %v2579 = vand.u32 %v2492, 2147483648
        %v2580 = vor.u32 1.1754944e-38, %v2579
        %v2581 = vsel %vm2578, %v2580, %v2576
        %v2582 = vmul.f32 1.0, %v2581
        %v2583 = vtanh.pop %v2467
        %v2584 = vtanh.pop %v2468
        %v2585 = vmul.f32 %v2537, 0.0
        %v2586 = vmul.f32 %v2552, 0.0
        %v2587 = vmul.f32 %v2507, %v2583
        %v2588 = vmul.f32 %v2522, %v2584
        %v2589 = vadd.f32 %v2585, %v2587
        %v2590 = vadd.f32 %v2586, %v2588
        %v2591 = vtanh.pop %v2589
        %v2592 = vtanh.pop %v2590
        %v2593 = vmul.f32 %v2567, %v2591
        %v2594 = vmul.f32 %v2582, %v2592
        %v2597 = vrot.slane %v2594, 7
        %vm2598 = vcmask 1040384
        %v2599 = vsel %vm2598, %v2593, %v2597
        %v2601 = vlaneseq
        %vm2602 = vcmp.ge.s32.totalorder %v2601, 0
        %vm2603 = vcmp.lt.s32.totalorder %v2601, 256
        %vm2604 = vmand %vm2602, %vm2603
        %2605 = vst.msk [vmem:[#allocation2] ss:$8 sm:$0x3] %vm2604, %v2599
        %2606 = vst.msk [vmem:[#allocation2] ss:$8 sm:$0x0] %vm2604, %v2599
        %v2607 = vpack.c.bf16 %v2593, %v2593
        %v2608 = vpack.c.bf16 %v2594, %v2594
        %s2609 = scalar_lea.vmem [#allocation3], 1
        %v2610 = vld [vmem:[%s2609] ss:$8 sm:$0xf]
        %v2611 = vld [vmem:[%s2609] ss:$8 sm:$0xf0]
        %v2612 = vor.u32 %v2610, %v2611
        %v2614 = vperm.slane %v2612, 0
        %v2615 = vperm.slane %v2612, 1
        %v2616 = vperm.slane %v2612, 2
        %v2617 = vperm.slane %v2612, 3
        %v2618 = vperm.slane %v2612, 4
        %v2619 = vperm.slane %v2612, 5
        %v2620 = vperm.slane %v2612, 6
        %v2621 = vperm.slane %v2612, 7
        %2630 = vmatpush.bf16.msra.mxu0 %v2019
        %2631 = vmatpush.bf16.msra.mxu0 %v2011
        %2632 = vmatpush.bf16.msra.mxu0 %v2003
        %2633 = vmatpush.bf16.msra.mxu0 %v1995
        %2634 = vmatpush.bf16.msra.mxu0 %v1987
        %2635 = vmatpush.bf16.msra.mxu0 %v1979
        %2636 = vmatpush.bf16.msra.mxu0 %v1971
        %2637 = vmatpush.bf16.msra.mxu0 %v1963
        %2638 = vmatmul.bf16.gmra.mxu0 %v2607
        %v2639 = vpop.f32.mrf.mxu0
        %v2640 = vadd.f32 %v2614, %v2639
        %v2641 = vpop.f32.mrf.mxu0
        %2642 = vdwg.mxu0
        %2643 = vmatpush.bf16.msra.mxu0 %v2083
        %2644 = vmatpush.bf16.msra.mxu0 %v2075
        %2645 = vmatpush.bf16.msra.mxu0 %v2067
        %2646 = vmatpush.bf16.msra.mxu0 %v2059
        %2647 = vmatpush.bf16.msra.mxu0 %v2051
        %2648 = vmatpush.bf16.msra.mxu0 %v2043
        %2649 = vmatpush.bf16.msra.mxu0 %v2035
        %2650 = vmatpush.bf16.msra.mxu0 %v2027
        %2651 = vmatmul.bf16.gmra.mxu0 %v2608
        %v2652 = vpop.f32.mrf.mxu0
        %v2653 = vadd.f32 %v2640, %v2652
        %v2654 = vpop.f32.mrf.mxu0
        %2655 = vdwg.mxu0
        %2656 = vmatpush.bf16.msra.mxu0 %v2020
        %2657 = vmatpush.bf16.msra.mxu0 %v2012
        %2658 = vmatpush.bf16.msra.mxu0 %v2004
        %2659 = vmatpush.bf16.msra.mxu0 %v1996
        %2660 = vmatpush.bf16.msra.mxu0 %v1988
        %2661 = vmatpush.bf16.msra.mxu0 %v1980
        %2662 = vmatpush.bf16.msra.mxu0 %v1972
        %2663 = vmatpush.bf16.msra.mxu0 %v1964
        %2664 = vmatmul.bf16.gmra.mxu0 %v2607
        %v2665 = vpop.f32.mrf.mxu0
        %v2666 = vadd.f32 %v2615, %v2665
        %v2667 = vpop.f32.mrf.mxu0
        %2668 = vdwg.mxu0
        %2669 = vmatpush.bf16.msra.mxu0 %v2084
        %2670 = vmatpush.bf16.msra.mxu0 %v2076
        %2671 = vmatpush.bf16.msra.mxu0 %v2068
        %2672 = vmatpush.bf16.msra.mxu0 %v2060
        %2673 = vmatpush.bf16.msra.mxu0 %v2052
        %2674 = vmatpush.bf16.msra.mxu0 %v2044
        %2675 = vmatpush.bf16.msra.mxu0 %v2036
        %2676 = vmatpush.bf16.msra.mxu0 %v2028
        %2677 = vmatmul.bf16.gmra.mxu0 %v2608
        %v2678 = vpop.f32.mrf.mxu0
        %v2679 = vadd.f32 %v2666, %v2678
        %v2680 = vpop.f32.mrf.mxu0
        %2681 = vdwg.mxu0
        %2682 = vmatpush.bf16.msra.mxu0 %v2021
        %2683 = vmatpush.bf16.msra.mxu0 %v2013
        %2684 = vmatpush.bf16.msra.mxu0 %v2005
        %2685 = vmatpush.bf16.msra.mxu0 %v1997
        %2686 = vmatpush.bf16.msra.mxu0 %v1989
        %2687 = vmatpush.bf16.msra.mxu0 %v1981
        %2688 = vmatpush.bf16.msra.mxu0 %v1973
        %2689 = vmatpush.bf16.msra.mxu0 %v1965
        %2690 = vmatmul.bf16.gmra.mxu0 %v2607
        %v2691 = vpop.f32.mrf.mxu0
        %v2692 = vadd.f32 %v2616, %v2691
        %v2693 = vpop.f32.mrf.mxu0
        %2694 = vdwg.mxu0
        %2695 = vmatpush.bf16.msra.mxu0 %v2085
        %2696 = vmatpush.bf16.msra.mxu0 %v2077
        %2697 = vmatpush.bf16.msra.mxu0 %v2069
        %2698 = vmatpush.bf16.msra.mxu0 %v2061
        %2699 = vmatpush.bf16.msra.mxu0 %v2053
        %2700 = vmatpush.bf16.msra.mxu0 %v2045
        %2701 = vmatpush.bf16.msra.mxu0 %v2037
        %2702 = vmatpush.bf16.msra.mxu0 %v2029
        %2703 = vmatmul.bf16.gmra.mxu0 %v2608
        %v2704 = vpop.f32.mrf.mxu0
        %v2705 = vadd.f32 %v2692, %v2704
        %v2706 = vpop.f32.mrf.mxu0
        %2707 = vdwg.mxu0
        %2708 = vmatpush.bf16.msra.mxu0 %v2022
        %2709 = vmatpush.bf16.msra.mxu0 %v2014
        %2710 = vmatpush.bf16.msra.mxu0 %v2006
        %2711 = vmatpush.bf16.msra.mxu0 %v1998
        %2712 = vmatpush.bf16.msra.mxu0 %v1990
        %2713 = vmatpush.bf16.msra.mxu0 %v1982
        %2714 = vmatpush.bf16.msra.mxu0 %v1974
        %2715 = vmatpush.bf16.msra.mxu0 %v1966
        %2716 = vmatmul.bf16.gmra.mxu0 %v2607
        %v2717 = vpop.f32.mrf.mxu0
        %v2718 = vadd.f32 %v2617, %v2717
        %v2719 = vpop.f32.mrf.mxu0
        %2720 = vdwg.mxu0
        %2721 = vmatpush.bf16.msra.mxu0 %v2086
        %2722 = vmatpush.bf16.msra.mxu0 %v2078
        %2723 = vmatpush.bf16.msra.mxu0 %v2070
        %2724 = vmatpush.bf16.msra.mxu0 %v2062
        %2725 = vmatpush.bf16.msra.mxu0 %v2054
        %2726 = vmatpush.bf16.msra.mxu0 %v2046
        %2727 = vmatpush.bf16.msra.mxu0 %v2038
        %2728 = vmatpush.bf16.msra.mxu0 %v2030
        %2729 = vmatmul.bf16.gmra.mxu0 %v2608
        %v2730 = vpop.f32.mrf.mxu0
        %v2731 = vadd.f32 %v2718, %v2730
        %v2732 = vpop.f32.mrf.mxu0
        %2733 = vdwg.mxu0
        %2734 = vmatpush.bf16.msra.mxu0 %v2023
        %2735 = vmatpush.bf16.msra.mxu0 %v2015
        %2736 = vmatpush.bf16.msra.mxu0 %v2007
        %2737 = vmatpush.bf16.msra.mxu0 %v1999
        %2738 = vmatpush.bf16.msra.mxu0 %v1991
        %2739 = vmatpush.bf16.msra.mxu0 %v1983
        %2740 = vmatpush.bf16.msra.mxu0 %v1975
        %2741 = vmatpush.bf16.msra.mxu0 %v1967
        %2742 = vmatmul.bf16.gmra.mxu0 %v2607
        %v2743 = vpop.f32.mrf.mxu0
        %v2744 = vadd.f32 %v2618, %v2743
        %v2745 = vpop.f32.mrf.mxu0
        %2746 = vdwg.mxu0
        %2747 = vmatpush.bf16.msra.mxu0 %v2087
        %2748 = vmatpush.bf16.msra.mxu0 %v2079
        %2749 = vmatpush.bf16.msra.mxu0 %v2071
        %2750 = vmatpush.bf16.msra.mxu0 %v2063
        %2751 = vmatpush.bf16.msra.mxu0 %v2055
        %2752 = vmatpush.bf16.msra.mxu0 %v2047
        %2753 = vmatpush.bf16.msra.mxu0 %v2039
        %2754 = vmatpush.bf16.msra.mxu0 %v2031
        %2755 = vmatmul.bf16.gmra.mxu0 %v2608
        %v2756 = vpop.f32.mrf.mxu0
        %v2757 = vadd.f32 %v2744, %v2756
        %v2758 = vpop.f32.mrf.mxu0
        %2759 = vdwg.mxu0
        %2760 = vmatpush.bf16.msra.mxu0 %v2024
        %2761 = vmatpush.bf16.msra.mxu0 %v2016
        %2762 = vmatpush.bf16.msra.mxu0 %v2008
        %2763 = vmatpush.bf16.msra.mxu0 %v2000
        %2764 = vmatpush.bf16.msra.mxu0 %v1992
        %2765 = vmatpush.bf16.msra.mxu0 %v1984
        %2766 = vmatpush.bf16.msra.mxu0 %v1976
        %2767 = vmatpush.bf16.msra.mxu0 %v1968
        %2768 = vmatmul.bf16.gmra.mxu0 %v2607
        %v2769 = vpop.f32.mrf.mxu0
        %v2770 = vadd.f32 %v2619, %v2769
        %v2771 = vpop.f32.mrf.mxu0
        %2772 = vdwg.mxu0
        %2773 = vmatpush.bf16.msra.mxu0 %v2088
        %2774 = vmatpush.bf16.msra.mxu0 %v2080
        %2775 = vmatpush.bf16.msra.mxu0 %v2072
        %2776 = vmatpush.bf16.msra.mxu0 %v2064
        %2777 = vmatpush.bf16.msra.mxu0 %v2056
        %2778 = vmatpush.bf16.msra.mxu0 %v2048
        %2779 = vmatpush.bf16.msra.mxu0 %v2040
        %2780 = vmatpush.bf16.msra.mxu0 %v2032
        %2781 = vmatmul.bf16.gmra.mxu0 %v2608
        %v2782 = vpop.f32.mrf.mxu0
        %v2783 = vadd.f32 %v2770, %v2782
        %v2784 = vpop.f32.mrf.mxu0
        %2785 = vdwg.mxu0
        %2786 = vmatpush.bf16.msra.mxu0 %v2025
        %2787 = vmatpush.bf16.msra.mxu0 %v2017
        %2788 = vmatpush.bf16.msra.mxu0 %v2009
        %2789 = vmatpush.bf16.msra.mxu0 %v2001
        %2790 = vmatpush.bf16.msra.mxu0 %v1993
        %2791 = vmatpush.bf16.msra.mxu0 %v1985
        %2792 = vmatpush.bf16.msra.mxu0 %v1977
        %2793 = vmatpush.bf16.msra.mxu0 %v1969
        %2794 = vmatmul.bf16.gmra.mxu0 %v2607
        %v2795 = vpop.f32.mrf.mxu0
        %v2796 = vadd.f32 %v2620, %v2795
        %v2797 = vpop.f32.mrf.mxu0
        %2798 = vdwg.mxu0
        %2799 = vmatpush.bf16.msra.mxu0 %v2089
        %2800 = vmatpush.bf16.msra.mxu0 %v2081
        %2801 = vmatpush.bf16.msra.mxu0 %v2073
        %2802 = vmatpush.bf16.msra.mxu0 %v2065
        %2803 = vmatpush.bf16.msra.mxu0 %v2057
        %2804 = vmatpush.bf16.msra.mxu0 %v2049
        %2805 = vmatpush.bf16.msra.mxu0 %v2041
        %2806 = vmatpush.bf16.msra.mxu0 %v2033
        %2807 = vmatmul.bf16.gmra.mxu0 %v2608
        %v2808 = vpop.f32.mrf.mxu0
        %v2809 = vadd.f32 %v2796, %v2808
        %v2810 = vpop.f32.mrf.mxu0
        %2811 = vdwg.mxu0
        %2812 = vmatpush.bf16.msra.mxu0 %v2026
        %2813 = vmatpush.bf16.msra.mxu0 %v2018
        %2814 = vmatpush.bf16.msra.mxu0 %v2010
        %2815 = vmatpush.bf16.msra.mxu0 %v2002
        %2816 = vmatpush.bf16.msra.mxu0 %v1994
        %2817 = vmatpush.bf16.msra.mxu0 %v1986
        %2818 = vmatpush.bf16.msra.mxu0 %v1978
        %2819 = vmatpush.bf16.msra.mxu0 %v1970
        %2820 = vmatmul.bf16.gmra.mxu0 %v2607
        %v2821 = vpop.f32.mrf.mxu0
        %v2822 = vadd.f32 %v2621, %v2821
        %v2823 = vpop.f32.mrf.mxu0
        %2824 = vdwg.mxu0
        %2825 = vmatpush.bf16.msra.mxu0 %v2090
        %2826 = vmatpush.bf16.msra.mxu0 %v2082
        %2827 = vmatpush.bf16.msra.mxu0 %v2074
        %2828 = vmatpush.bf16.msra.mxu0 %v2066
        %2829 = vmatpush.bf16.msra.mxu0 %v2058
        %2830 = vmatpush.bf16.msra.mxu0 %v2050
        %2831 = vmatpush.bf16.msra.mxu0 %v2042
        %2832 = vmatpush.bf16.msra.mxu0 %v2034
        %2833 = vmatmul.bf16.gmra.mxu0 %v2608
        %v2834 = vpop.f32.mrf.mxu0
        %v2835 = vadd.f32 %v2822, %v2834
        %v2836 = vpop.f32.mrf.mxu0
        %2837 = vdwg.mxu0
        %v2838 = vadd.f32 %v2653, %v2445
        %v2839 = vadd.f32 %v2679, %v2446
        %v2840 = vadd.f32 %v2705, %v2447
        %v2841 = vadd.f32 %v2731, %v2448
        %v2842 = vadd.f32 %v2757, %v2449
        %v2843 = vadd.f32 %v2783, %v2450
        %v2844 = vadd.f32 %v2809, %v2451
        %v2845 = vadd.f32 %v2835, %v2452
        %v2846 = vxor.u32 %v2838, 2147483648
        %v2847 = vxor.u32 %v2839, 2147483648
        %v2848 = vxor.u32 %v2840, 2147483648
        %v2849 = vxor.u32 %v2841, 2147483648
        %v2850 = vxor.u32 %v2842, 2147483648
        %v2851 = vxor.u32 %v2843, 2147483648
        %v2852 = vmul.f32 %v2846, 1.442695
        %v2853 = vpow.pop %v2852
        %v2854 = vmul.f32 %v2847, 1.442695
        %v2855 = vpow.pop %v2854
        %v2856 = vmul.f32 %v2848, 1.442695
        %v2857 = vpow.pop %v2856
        %v2858 = vmul.f32 %v2849, 1.442695
        %v2859 = vpow.pop %v2858
        %v2860 = vmul.f32 %v2850, 1.442695
        %v2861 = vpow.pop %v2860
        %v2862 = vmul.f32 %v2851, 1.442695
        %v2863 = vpow.pop %v2862
        %v2864 = vadd.f32 %v2853, 1.0
        %v2865 = vadd.f32 %v2855, 1.0
        %v2866 = vadd.f32 %v2857, 1.0
        %v2867 = vadd.f32 %v2859, 1.0
        %v2868 = vadd.f32 %v2861, 1.0
        %v2869 = vadd.f32 %v2863, 1.0
        %v2870 = vrcp.pop %v2864
        %v2871 = vmul.f32 %v2864, %v2870
        %v2872 = vsub.f32 1.0, %v2871
        %v2873 = vmul.f32 %v2870, %v2872
        %v2874 = vadd.f32 %v2870, %v2873
        %vm2875 = vweird.f32 %v2864
        %vm2876 = vweird.f32 %v2870
        %vm2877 = vmor %vm2875, %vm2876
        %v2878 = vsel %vm2877, %v2870, %v2874
        %v2879 = vand.u32 2147483647, %v2864
        %vm2880 = vcmp.eq.f32.partialorder %v2879, 8.507059e+37
        %v2881 = vand.u32 %v2864, 2147483648
        %v2882 = vor.u32 1.1754944e-38, %v2881
        %v2883 = vsel %vm2880, %v2882, %v2878
        %v2884 = vmul.f32 1.0, %v2883
        %v2885 = vrcp.pop %v2865
        %v2886 = vmul.f32 %v2865, %v2885
        %v2887 = vsub.f32 1.0, %v2886
        %v2888 = vmul.f32 %v2885, %v2887
        %v2889 = vadd.f32 %v2885, %v2888
        %vm2890 = vweird.f32 %v2865
        %vm2891 = vweird.f32 %v2885
        %vm2892 = vmor %vm2890, %vm2891
        %v2893 = vsel %vm2892, %v2885, %v2889
        %v2894 = vand.u32 2147483647, %v2865
        %vm2895 = vcmp.eq.f32.partialorder %v2894, 8.507059e+37
        %v2896 = vand.u32 %v2865, 2147483648
        %v2897 = vor.u32 1.1754944e-38, %v2896
        %v2898 = vsel %vm2895, %v2897, %v2893
        %v2899 = vmul.f32 1.0, %v2898
        %v2900 = vrcp.pop %v2866
        %v2901 = vmul.f32 %v2866, %v2900
        %v2902 = vsub.f32 1.0, %v2901
        %v2903 = vmul.f32 %v2900, %v2902
        %v2904 = vadd.f32 %v2900, %v2903
        %vm2905 = vweird.f32 %v2866
        %vm2906 = vweird.f32 %v2900
        %vm2907 = vmor %vm2905, %vm2906
        %v2908 = vsel %vm2907, %v2900, %v2904
        %v2909 = vand.u32 2147483647, %v2866
        %vm2910 = vcmp.eq.f32.partialorder %v2909, 8.507059e+37
        %v2911 = vand.u32 %v2866, 2147483648
        %v2912 = vor.u32 1.1754944e-38, %v2911
        %v2913 = vsel %vm2910, %v2912, %v2908
        %v2914 = vmul.f32 1.0, %v2913
        %v2915 = vrcp.pop %v2867
        %v2916 = vmul.f32 %v2867, %v2915
        %v2917 = vsub.f32 1.0, %v2916
        %v2918 = vmul.f32 %v2915, %v2917
        %v2919 = vadd.f32 %v2915, %v2918
        %vm2920 = vweird.f32 %v2867
        %vm2921 = vweird.f32 %v2915
        %vm2922 = vmor %vm2920, %vm2921
        %v2923 = vsel %vm2922, %v2915, %v2919
        %v2924 = vand.u32 2147483647, %v2867
        %vm2925 = vcmp.eq.f32.partialorder %v2924, 8.507059e+37
        %v2926 = vand.u32 %v2867, 2147483648
        %v2927 = vor.u32 1.1754944e-38, %v2926
        %v2928 = vsel %vm2925, %v2927, %v2923
        %v2929 = vmul.f32 1.0, %v2928
        %v2930 = vrcp.pop %v2868
        %v2931 = vmul.f32 %v2868, %v2930
        %v2932 = vsub.f32 1.0, %v2931
        %v2933 = vmul.f32 %v2930, %v2932
        %v2934 = vadd.f32 %v2930, %v2933
        %vm2935 = vweird.f32 %v2868
        %vm2936 = vweird.f32 %v2930
        %vm2937 = vmor %vm2935, %vm2936
        %v2938 = vsel %vm2937, %v2930, %v2934
        %v2939 = vand.u32 2147483647, %v2868
        %vm2940 = vcmp.eq.f32.partialorder %v2939, 8.507059e+37
        %v2941 = vand.u32 %v2868, 2147483648
        %v2942 = vor.u32 1.1754944e-38, %v2941
        %v2943 = vsel %vm2940, %v2942, %v2938
        %v2944 = vmul.f32 1.0, %v2943
        %v2945 = vrcp.pop %v2869
        %v2946 = vmul.f32 %v2869, %v2945
        %v2947 = vsub.f32 1.0, %v2946
        %v2948 = vmul.f32 %v2945, %v2947
        %v2949 = vadd.f32 %v2945, %v2948
        %vm2950 = vweird.f32 %v2869
        %vm2951 = vweird.f32 %v2945
        %vm2952 = vmor %vm2950, %vm2951
        %v2953 = vsel %vm2952, %v2945, %v2949
        %v2954 = vand.u32 2147483647, %v2869
        %vm2955 = vcmp.eq.f32.partialorder %v2954, 8.507059e+37
        %v2956 = vand.u32 %v2869, 2147483648
        %v2957 = vor.u32 1.1754944e-38, %v2956
        %v2958 = vsel %vm2955, %v2957, %v2953
        %v2959 = vmul.f32 1.0, %v2958
        %v2960 = vtanh.pop %v2844
        %v2961 = vtanh.pop %v2845
        %v2962 = vmul.f32 %v2914, %v2589
        %v2963 = vmul.f32 %v2929, %v2590
        %v2964 = vmul.f32 %v2884, %v2960
        %v2965 = vmul.f32 %v2899, %v2961
        %v2966 = vadd.f32 %v2962, %v2964
        %v2967 = vadd.f32 %v2963, %v2965
        %v2968 = vtanh.pop %v2966
        %v2969 = vtanh.pop %v2967
        %v2970 = vmul.f32 %v2944, %v2968
        %v2971 = vmul.f32 %v2959, %v2969
        %v2974 = vrot.slane %v2971, 7
        %v2975 = vsel %vm2598, %v2970, %v2974
        %s2977 = scalar_lea.vmem [#allocation2], 1
        %2978 = vst.msk [vmem:[%s2977] ss:$8 sm:$0x3] %vm2604, %v2975
        %2979 = vst.msk [vmem:[%s2977] ss:$8 sm:$0x0] %vm2604, %v2975
        %v2980 = vpack.c.bf16 %v2970, %v2970
        %v2981 = vpack.c.bf16 %v2971, %v2971
        %s2982 = scalar_lea.vmem [#allocation3], 2
        %v2983 = vld [vmem:[%s2982] ss:$8 sm:$0xf]
        %v2984 = vld [vmem:[%s2982] ss:$8 sm:$0xf0]
        %v2985 = vor.u32 %v2983, %v2984
        %v2987 = vperm.slane %v2985, 0
        %v2988 = vperm.slane %v2985, 1
        %v2989 = vperm.slane %v2985, 2
        %v2990 = vperm.slane %v2985, 3
        %v2991 = vperm.slane %v2985, 4
        %v2992 = vperm.slane %v2985, 5
        %v2993 = vperm.slane %v2985, 6
        %v2994 = vperm.slane %v2985, 7
        %3003 = vmatpush.bf16.msra.mxu0 %v2019
        %3004 = vmatpush.bf16.msra.mxu0 %v2011
        %3005 = vmatpush.bf16.msra.mxu0 %v2003
        %3006 = vmatpush.bf16.msra.mxu0 %v1995
        %3007 = vmatpush.bf16.msra.mxu0 %v1987
        %3008 = vmatpush.bf16.msra.mxu0 %v1979
        %3009 = vmatpush.bf16.msra.mxu0 %v1971
        %3010 = vmatpush.bf16.msra.mxu0 %v1963
        %3011 = vmatmul.bf16.gmra.mxu0 %v2980
        %v3012 = vpop.f32.mrf.mxu0
        %v3013 = vadd.f32 %v2987, %v3012
        %v3014 = vpop.f32.mrf.mxu0
        %3015 = vdwg.mxu0
        %3016 = vmatpush.bf16.msra.mxu0 %v2083
        %3017 = vmatpush.bf16.msra.mxu0 %v2075
        %3018 = vmatpush.bf16.msra.mxu0 %v2067
        %3019 = vmatpush.bf16.msra.mxu0 %v2059
        %3020 = vmatpush.bf16.msra.mxu0 %v2051
        %3021 = vmatpush.bf16.msra.mxu0 %v2043
        %3022 = vmatpush.bf16.msra.mxu0 %v2035
        %3023 = vmatpush.bf16.msra.mxu0 %v2027
        %3024 = vmatmul.bf16.gmra.mxu0 %v2981
        %v3025 = vpop.f32.mrf.mxu0
        %v3026 = vadd.f32 %v3013, %v3025
        %v3027 = vpop.f32.mrf.mxu0
        %3028 = vdwg.mxu0
        %3029 = vmatpush.bf16.msra.mxu0 %v2020
        %3030 = vmatpush.bf16.msra.mxu0 %v2012
        %3031 = vmatpush.bf16.msra.mxu0 %v2004
        %3032 = vmatpush.bf16.msra.mxu0 %v1996
        %3033 = vmatpush.bf16.msra.mxu0 %v1988
        %3034 = vmatpush.bf16.msra.mxu0 %v1980
        %3035 = vmatpush.bf16.msra.mxu0 %v1972
        %3036 = vmatpush.bf16.msra.mxu0 %v1964
        %3037 = vmatmul.bf16.gmra.mxu0 %v2980
        %v3038 = vpop.f32.mrf.mxu0
        %v3039 = vadd.f32 %v2988, %v3038
        %v3040 = vpop.f32.mrf.mxu0
        %3041 = vdwg.mxu0
        %3042 = vmatpush.bf16.msra.mxu0 %v2084
        %3043 = vmatpush.bf16.msra.mxu0 %v2076
        %3044 = vmatpush.bf16.msra.mxu0 %v2068
        %3045 = vmatpush.bf16.msra.mxu0 %v2060
        %3046 = vmatpush.bf16.msra.mxu0 %v2052
        %3047 = vmatpush.bf16.msra.mxu0 %v2044
        %3048 = vmatpush.bf16.msra.mxu0 %v2036
        %3049 = vmatpush.bf16.msra.mxu0 %v2028
        %3050 = vmatmul.bf16.gmra.mxu0 %v2981
        %v3051 = vpop.f32.mrf.mxu0
        %v3052 = vadd.f32 %v3039, %v3051
        %v3053 = vpop.f32.mrf.mxu0
        %3054 = vdwg.mxu0
        %3055 = vmatpush.bf16.msra.mxu0 %v2021
        %3056 = vmatpush.bf16.msra.mxu0 %v2013
        %3057 = vmatpush.bf16.msra.mxu0 %v2005
        %3058 = vmatpush.bf16.msra.mxu0 %v1997
        %3059 = vmatpush.bf16.msra.mxu0 %v1989
        %3060 = vmatpush.bf16.msra.mxu0 %v1981
        %3061 = vmatpush.bf16.msra.mxu0 %v1973
        %3062 = vmatpush.bf16.msra.mxu0 %v1965
        %3063 = vmatmul.bf16.gmra.mxu0 %v2980
        %v3064 = vpop.f32.mrf.mxu0
        %v3065 = vadd.f32 %v2989, %v3064
        %v3066 = vpop.f32.mrf.mxu0
        %3067 = vdwg.mxu0
        %3068 = vmatpush.bf16.msra.mxu0 %v2085
        %3069 = vmatpush.bf16.msra.mxu0 %v2077
        %3070 = vmatpush.bf16.msra.mxu0 %v2069
        %3071 = vmatpush.bf16.msra.mxu0 %v2061
        %3072 = vmatpush.bf16.msra.mxu0 %v2053
        %3073 = vmatpush.bf16.msra.mxu0 %v2045
        %3074 = vmatpush.bf16.msra.mxu0 %v2037
        %3075 = vmatpush.bf16.msra.mxu0 %v2029
        %3076 = vmatmul.bf16.gmra.mxu0 %v2981
        %v3077 = vpop.f32.mrf.mxu0
        %v3078 = vadd.f32 %v3065, %v3077
        %v3079 = vpop.f32.mrf.mxu0
        %3080 = vdwg.mxu0
        %3081 = vmatpush.bf16.msra.mxu0 %v2022
        %3082 = vmatpush.bf16.msra.mxu0 %v2014
        %3083 = vmatpush.bf16.msra.mxu0 %v2006
        %3084 = vmatpush.bf16.msra.mxu0 %v1998
        %3085 = vmatpush.bf16.msra.mxu0 %v1990
        %3086 = vmatpush.bf16.msra.mxu0 %v1982
        %3087 = vmatpush.bf16.msra.mxu0 %v1974
        %3088 = vmatpush.bf16.msra.mxu0 %v1966
        %3089 = vmatmul.bf16.gmra.mxu0 %v2980
        %v3090 = vpop.f32.mrf.mxu0
        %v3091 = vadd.f32 %v2990, %v3090
        %v3092 = vpop.f32.mrf.mxu0
        %3093 = vdwg.mxu0
        %3094 = vmatpush.bf16.msra.mxu0 %v2086
        %3095 = vmatpush.bf16.msra.mxu0 %v2078
        %3096 = vmatpush.bf16.msra.mxu0 %v2070
        %3097 = vmatpush.bf16.msra.mxu0 %v2062
        %3098 = vmatpush.bf16.msra.mxu0 %v2054
        %3099 = vmatpush.bf16.msra.mxu0 %v2046
        %3100 = vmatpush.bf16.msra.mxu0 %v2038
        %3101 = vmatpush.bf16.msra.mxu0 %v2030
        %3102 = vmatmul.bf16.gmra.mxu0 %v2981
        %v3103 = vpop.f32.mrf.mxu0
        %v3104 = vadd.f32 %v3091, %v3103
        %v3105 = vpop.f32.mrf.mxu0
        %3106 = vdwg.mxu0
        %3107 = vmatpush.bf16.msra.mxu0 %v2023
        %3108 = vmatpush.bf16.msra.mxu0 %v2015
        %3109 = vmatpush.bf16.msra.mxu0 %v2007
        %3110 = vmatpush.bf16.msra.mxu0 %v1999
        %3111 = vmatpush.bf16.msra.mxu0 %v1991
        %3112 = vmatpush.bf16.msra.mxu0 %v1983
        %3113 = vmatpush.bf16.msra.mxu0 %v1975
        %3114 = vmatpush.bf16.msra.mxu0 %v1967
        %3115 = vmatmul.bf16.gmra.mxu0 %v2980
        %v3116 = vpop.f32.mrf.mxu0
        %v3117 = vadd.f32 %v2991, %v3116
        %v3118 = vpop.f32.mrf.mxu0
        %3119 = vdwg.mxu0
        %3120 = vmatpush.bf16.msra.mxu0 %v2087
        %3121 = vmatpush.bf16.msra.mxu0 %v2079
        %3122 = vmatpush.bf16.msra.mxu0 %v2071
        %3123 = vmatpush.bf16.msra.mxu0 %v2063
        %3124 = vmatpush.bf16.msra.mxu0 %v2055
        %3125 = vmatpush.bf16.msra.mxu0 %v2047
        %3126 = vmatpush.bf16.msra.mxu0 %v2039
        %3127 = vmatpush.bf16.msra.mxu0 %v2031
        %3128 = vmatmul.bf16.gmra.mxu0 %v2981
        %v3129 = vpop.f32.mrf.mxu0
        %v3130 = vadd.f32 %v3117, %v3129
        %v3131 = vpop.f32.mrf.mxu0
        %3132 = vdwg.mxu0
        %3133 = vmatpush.bf16.msra.mxu0 %v2024
        %3134 = vmatpush.bf16.msra.mxu0 %v2016
        %3135 = vmatpush.bf16.msra.mxu0 %v2008
        %3136 = vmatpush.bf16.msra.mxu0 %v2000
        %3137 = vmatpush.bf16.msra.mxu0 %v1992
        %3138 = vmatpush.bf16.msra.mxu0 %v1984
        %3139 = vmatpush.bf16.msra.mxu0 %v1976
        %3140 = vmatpush.bf16.msra.mxu0 %v1968
        %3141 = vmatmul.bf16.gmra.mxu0 %v2980
        %v3142 = vpop.f32.mrf.mxu0
        %v3143 = vadd.f32 %v2992, %v3142
        %v3144 = vpop.f32.mrf.mxu0
        %3145 = vdwg.mxu0
        %3146 = vmatpush.bf16.msra.mxu0 %v2088
        %3147 = vmatpush.bf16.msra.mxu0 %v2080
        %3148 = vmatpush.bf16.msra.mxu0 %v2072
        %3149 = vmatpush.bf16.msra.mxu0 %v2064
        %3150 = vmatpush.bf16.msra.mxu0 %v2056
        %3151 = vmatpush.bf16.msra.mxu0 %v2048
        %3152 = vmatpush.bf16.msra.mxu0 %v2040
        %3153 = vmatpush.bf16.msra.mxu0 %v2032
        %3154 = vmatmul.bf16.gmra.mxu0 %v2981
        %v3155 = vpop.f32.mrf.mxu0
        %v3156 = vadd.f32 %v3143, %v3155
        %v3157 = vpop.f32.mrf.mxu0
        %3158 = vdwg.mxu0
        %3159 = vmatpush.bf16.msra.mxu0 %v2025
        %3160 = vmatpush.bf16.msra.mxu0 %v2017
        %3161 = vmatpush.bf16.msra.mxu0 %v2009
        %3162 = vmatpush.bf16.msra.mxu0 %v2001
        %3163 = vmatpush.bf16.msra.mxu0 %v1993
        %3164 = vmatpush.bf16.msra.mxu0 %v1985
        %3165 = vmatpush.bf16.msra.mxu0 %v1977
        %3166 = vmatpush.bf16.msra.mxu0 %v1969
        %3167 = vmatmul.bf16.gmra.mxu0 %v2980
        %v3168 = vpop.f32.mrf.mxu0
        %v3169 = vadd.f32 %v2993, %v3168
        %v3170 = vpop.f32.mrf.mxu0
        %3171 = vdwg.mxu0
        %3172 = vmatpush.bf16.msra.mxu0 %v2089
        %3173 = vmatpush.bf16.msra.mxu0 %v2081
        %3174 = vmatpush.bf16.msra.mxu0 %v2073
        %3175 = vmatpush.bf16.msra.mxu0 %v2065
        %3176 = vmatpush.bf16.msra.mxu0 %v2057
        %3177 = vmatpush.bf16.msra.mxu0 %v2049
        %3178 = vmatpush.bf16.msra.mxu0 %v2041
        %3179 = vmatpush.bf16.msra.mxu0 %v2033
        %3180 = vmatmul.bf16.gmra.mxu0 %v2981
        %v3181 = vpop.f32.mrf.mxu0
        %v3182 = vadd.f32 %v3169, %v3181
        %v3183 = vpop.f32.mrf.mxu0
        %3184 = vdwg.mxu0
        %3185 = vmatpush.bf16.msra.mxu0 %v2026
        %3186 = vmatpush.bf16.msra.mxu0 %v2018
        %3187 = vmatpush.bf16.msra.mxu0 %v2010
        %3188 = vmatpush.bf16.msra.mxu0 %v2002
        %3189 = vmatpush.bf16.msra.mxu0 %v1994
        %3190 = vmatpush.bf16.msra.mxu0 %v1986
        %3191 = vmatpush.bf16.msra.mxu0 %v1978
        %3192 = vmatpush.bf16.msra.mxu0 %v1970
        %3193 = vmatmul.bf16.gmra.mxu0 %v2980
        %v3194 = vpop.f32.mrf.mxu0
        %v3195 = vadd.f32 %v2994, %v3194
        %v3196 = vpop.f32.mrf.mxu0
        %3197 = vdwg.mxu0
        %3198 = vmatpush.bf16.msra.mxu0 %v2090
        %3199 = vmatpush.bf16.msra.mxu0 %v2082
        %3200 = vmatpush.bf16.msra.mxu0 %v2074
        %3201 = vmatpush.bf16.msra.mxu0 %v2066
        %3202 = vmatpush.bf16.msra.mxu0 %v2058
        %3203 = vmatpush.bf16.msra.mxu0 %v2050
        %3204 = vmatpush.bf16.msra.mxu0 %v2042
        %3205 = vmatpush.bf16.msra.mxu0 %v2034
        %3206 = vmatmul.bf16.gmra.mxu0 %v2981
        %v3207 = vpop.f32.mrf.mxu0
        %v3208 = vadd.f32 %v3195, %v3207
        %v3209 = vpop.f32.mrf.mxu0
        %3210 = vdwg.mxu0
        %v3211 = vadd.f32 %v3026, %v2445
        %v3212 = vadd.f32 %v3052, %v2446
        %v3213 = vadd.f32 %v3078, %v2447
        %v3214 = vadd.f32 %v3104, %v2448
        %v3215 = vadd.f32 %v3130, %v2449
        %v3216 = vadd.f32 %v3156, %v2450
        %v3217 = vadd.f32 %v3182, %v2451
        %v3218 = vadd.f32 %v3208, %v2452
        %v3219 = vxor.u32 %v3211, 2147483648
        %v3220 = vxor.u32 %v3212, 2147483648
        %v3221 = vxor.u32 %v3213, 2147483648
        %v3222 = vxor.u32 %v3214, 2147483648
        %v3223 = vxor.u32 %v3215, 2147483648
        %v3224 = vxor.u32 %v3216, 2147483648
        %v3225 = vmul.f32 %v3219, 1.442695
        %v3226 = vpow.pop %v3225
        %v3227 = vmul.f32 %v3220, 1.442695
        %v3228 = vpow.pop %v3227
        %v3229 = vmul.f32 %v3221, 1.442695
        %v3230 = vpow.pop %v3229
        %v3231 = vmul.f32 %v3222, 1.442695
        %v3232 = vpow.pop %v3231
        %v3233 = vmul.f32 %v3223, 1.442695
        %v3234 = vpow.pop %v3233
        %v3235 = vmul.f32 %v3224, 1.442695
        %v3236 = vpow.pop %v3235
        %v3237 = vadd.f32 %v3226, 1.0
        %v3238 = vadd.f32 %v3228, 1.0
        %v3239 = vadd.f32 %v3230, 1.0
        %v3240 = vadd.f32 %v3232, 1.0
        %v3241 = vadd.f32 %v3234, 1.0
        %v3242 = vadd.f32 %v3236, 1.0
        %v3243 = vrcp.pop %v3237
        %v3244 = vmul.f32 %v3237, %v3243
        %v3245 = vsub.f32 1.0, %v3244
        %v3246 = vmul.f32 %v3243, %v3245
        %v3247 = vadd.f32 %v3243, %v3246
        %vm3248 = vweird.f32 %v3237
        %vm3249 = vweird.f32 %v3243
        %vm3250 = vmor %vm3248, %vm3249
        %v3251 = vsel %vm3250, %v3243, %v3247
        %v3252 = vand.u32 2147483647, %v3237
        %vm3253 = vcmp.eq.f32.partialorder %v3252, 8.507059e+37
        %v3254 = vand.u32 %v3237, 2147483648
        %v3255 = vor.u32 1.1754944e-38, %v3254
        %v3256 = vsel %vm3253, %v3255, %v3251
        %v3257 = vmul.f32 1.0, %v3256
        %v3258 = vrcp.pop %v3238
        %v3259 = vmul.f32 %v3238, %v3258
        %v3260 = vsub.f32 1.0, %v3259
        %v3261 = vmul.f32 %v3258, %v3260
        %v3262 = vadd.f32 %v3258, %v3261
        %vm3263 = vweird.f32 %v3238
        %vm3264 = vweird.f32 %v3258
        %vm3265 = vmor %vm3263, %vm3264
        %v3266 = vsel %vm3265, %v3258, %v3262
        %v3267 = vand.u32 2147483647, %v3238
        %vm3268 = vcmp.eq.f32.partialorder %v3267, 8.507059e+37
        %v3269 = vand.u32 %v3238, 2147483648
        %v3270 = vor.u32 1.1754944e-38, %v3269
        %v3271 = vsel %vm3268, %v3270, %v3266
        %v3272 = vmul.f32 1.0, %v3271
        %v3273 = vrcp.pop %v3239
        %v3274 = vmul.f32 %v3239, %v3273
        %v3275 = vsub.f32 1.0, %v3274
        %v3276 = vmul.f32 %v3273, %v3275
        %v3277 = vadd.f32 %v3273, %v3276
        %vm3278 = vweird.f32 %v3239
        %vm3279 = vweird.f32 %v3273
        %vm3280 = vmor %vm3278, %vm3279
        %v3281 = vsel %vm3280, %v3273, %v3277
        %v3282 = vand.u32 2147483647, %v3239
        %vm3283 = vcmp.eq.f32.partialorder %v3282, 8.507059e+37
        %v3284 = vand.u32 %v3239, 2147483648
        %v3285 = vor.u32 1.1754944e-38, %v3284
        %v3286 = vsel %vm3283, %v3285, %v3281
        %v3287 = vmul.f32 1.0, %v3286
        %v3288 = vrcp.pop %v3240
        %v3289 = vmul.f32 %v3240, %v3288
        %v3290 = vsub.f32 1.0, %v3289
        %v3291 = vmul.f32 %v3288, %v3290
        %v3292 = vadd.f32 %v3288, %v3291
        %vm3293 = vweird.f32 %v3240
        %vm3294 = vweird.f32 %v3288
        %vm3295 = vmor %vm3293, %vm3294
        %v3296 = vsel %vm3295, %v3288, %v3292
        %v3297 = vand.u32 2147483647, %v3240
        %vm3298 = vcmp.eq.f32.partialorder %v3297, 8.507059e+37
        %v3299 = vand.u32 %v3240, 2147483648
        %v3300 = vor.u32 1.1754944e-38, %v3299
        %v3301 = vsel %vm3298, %v3300, %v3296
        %v3302 = vmul.f32 1.0, %v3301
        %v3303 = vrcp.pop %v3241
        %v3304 = vmul.f32 %v3241, %v3303
        %v3305 = vsub.f32 1.0, %v3304
        %v3306 = vmul.f32 %v3303, %v3305
        %v3307 = vadd.f32 %v3303, %v3306
        %vm3308 = vweird.f32 %v3241
        %vm3309 = vweird.f32 %v3303
        %vm3310 = vmor %vm3308, %vm3309
        %v3311 = vsel %vm3310, %v3303, %v3307
        %v3312 = vand.u32 2147483647, %v3241
        %vm3313 = vcmp.eq.f32.partialorder %v3312, 8.507059e+37
        %v3314 = vand.u32 %v3241, 2147483648
        %v3315 = vor.u32 1.1754944e-38, %v3314
        %v3316 = vsel %vm3313, %v3315, %v3311
        %v3317 = vmul.f32 1.0, %v3316
        %v3318 = vrcp.pop %v3242
        %v3319 = vmul.f32 %v3242, %v3318
        %v3320 = vsub.f32 1.0, %v3319
        %v3321 = vmul.f32 %v3318, %v3320
        %v3322 = vadd.f32 %v3318, %v3321
        %vm3323 = vweird.f32 %v3242
        %vm3324 = vweird.f32 %v3318
        %vm3325 = vmor %vm3323, %vm3324
        %v3326 = vsel %vm3325, %v3318, %v3322
        %v3327 = vand.u32 2147483647, %v3242
        %vm3328 = vcmp.eq.f32.partialorder %v3327, 8.507059e+37
        %v3329 = vand.u32 %v3242, 2147483648
        %v3330 = vor.u32 1.1754944e-38, %v3329
        %v3331 = vsel %vm3328, %v3330, %v3326
        %v3332 = vmul.f32 1.0, %v3331
        %v3333 = vtanh.pop %v3217
        %v3334 = vtanh.pop %v3218
        %v3335 = vmul.f32 %v3287, %v2966
        %v3336 = vmul.f32 %v3302, %v2967
        %v3337 = vmul.f32 %v3257, %v3333
        %v3338 = vmul.f32 %v3272, %v3334
        %v3339 = vadd.f32 %v3335, %v3337
        %v3340 = vadd.f32 %v3336, %v3338
        %v3341 = vtanh.pop %v3339
        %v3342 = vtanh.pop %v3340
        %v3343 = vmul.f32 %v3317, %v3341
        %v3344 = vmul.f32 %v3332, %v3342
        %v3347 = vrot.slane %v3344, 7
        %v3348 = vsel %vm2598, %v3343, %v3347
        %s3350 = scalar_lea.vmem [#allocation2], 2
        %3351 = vst.msk [vmem:[%s3350] ss:$8 sm:$0x3] %vm2604, %v3348
        %3352 = vst.msk [vmem:[%s3350] ss:$8 sm:$0x0] %vm2604, %v3348
        %v3353 = vpack.c.bf16 %v3343, %v3343
        %v3354 = vpack.c.bf16 %v3344, %v3344
        %s3355 = scalar_lea.vmem [#allocation3], 3
        %v3356 = vld [vmem:[%s3355] ss:$8 sm:$0xf]
        %v3357 = vld [vmem:[%s3355] ss:$8 sm:$0xf0]
        %v3358 = vor.u32 %v3356, %v3357
        %v3360 = vperm.slane %v3358, 0
        %v3361 = vperm.slane %v3358, 1
        %v3362 = vperm.slane %v3358, 2
        %v3363 = vperm.slane %v3358, 3
        %v3364 = vperm.slane %v3358, 4
        %v3365 = vperm.slane %v3358, 5
        %v3366 = vperm.slane %v3358, 6
        %v3367 = vperm.slane %v3358, 7
        %3376 = vmatpush.bf16.msra.mxu0 %v2019
        %3377 = vmatpush.bf16.msra.mxu0 %v2011
        %3378 = vmatpush.bf16.msra.mxu0 %v2003
        %3379 = vmatpush.bf16.msra.mxu0 %v1995
        %3380 = vmatpush.bf16.msra.mxu0 %v1987
        %3381 = vmatpush.bf16.msra.mxu0 %v1979
        %3382 = vmatpush.bf16.msra.mxu0 %v1971
        %3383 = vmatpush.bf16.msra.mxu0 %v1963
        %3384 = vmatmul.bf16.gmra.mxu0 %v3353
        %v3385 = vpop.f32.mrf.mxu0
        %v3386 = vadd.f32 %v3360, %v3385
        %v3387 = vpop.f32.mrf.mxu0
        %3388 = vdwg.mxu0
        %3389 = vmatpush.bf16.msra.mxu0 %v2083
        %3390 = vmatpush.bf16.msra.mxu0 %v2075
        %3391 = vmatpush.bf16.msra.mxu0 %v2067
        %3392 = vmatpush.bf16.msra.mxu0 %v2059
        %3393 = vmatpush.bf16.msra.mxu0 %v2051
        %3394 = vmatpush.bf16.msra.mxu0 %v2043
        %3395 = vmatpush.bf16.msra.mxu0 %v2035
        %3396 = vmatpush.bf16.msra.mxu0 %v2027
        %3397 = vmatmul.bf16.gmra.mxu0 %v3354
        %v3398 = vpop.f32.mrf.mxu0
        %v3399 = vadd.f32 %v3386, %v3398
        %v3400 = vpop.f32.mrf.mxu0
        %3401 = vdwg.mxu0
        %3402 = vmatpush.bf16.msra.mxu0 %v2020
        %3403 = vmatpush.bf16.msra.mxu0 %v2012
        %3404 = vmatpush.bf16.msra.mxu0 %v2004
        %3405 = vmatpush.bf16.msra.mxu0 %v1996
        %3406 = vmatpush.bf16.msra.mxu0 %v1988
        %3407 = vmatpush.bf16.msra.mxu0 %v1980
        %3408 = vmatpush.bf16.msra.mxu0 %v1972
        %3409 = vmatpush.bf16.msra.mxu0 %v1964
        %3410 = vmatmul.bf16.gmra.mxu0 %v3353
        %v3411 = vpop.f32.mrf.mxu0
        %v3412 = vadd.f32 %v3361, %v3411
        %v3413 = vpop.f32.mrf.mxu0
        %3414 = vdwg.mxu0
        %3415 = vmatpush.bf16.msra.mxu0 %v2084
        %3416 = vmatpush.bf16.msra.mxu0 %v2076
        %3417 = vmatpush.bf16.msra.mxu0 %v2068
        %3418 = vmatpush.bf16.msra.mxu0 %v2060
        %3419 = vmatpush.bf16.msra.mxu0 %v2052
        %3420 = vmatpush.bf16.msra.mxu0 %v2044
        %3421 = vmatpush.bf16.msra.mxu0 %v2036
        %3422 = vmatpush.bf16.msra.mxu0 %v2028
        %3423 = vmatmul.bf16.gmra.mxu0 %v3354
        %v3424 = vpop.f32.mrf.mxu0
        %v3425 = vadd.f32 %v3412, %v3424
        %v3426 = vpop.f32.mrf.mxu0
        %3427 = vdwg.mxu0
        %3428 = vmatpush.bf16.msra.mxu0 %v2021
        %3429 = vmatpush.bf16.msra.mxu0 %v2013
        %3430 = vmatpush.bf16.msra.mxu0 %v2005
        %3431 = vmatpush.bf16.msra.mxu0 %v1997
        %3432 = vmatpush.bf16.msra.mxu0 %v1989
        %3433 = vmatpush.bf16.msra.mxu0 %v1981
        %3434 = vmatpush.bf16.msra.mxu0 %v1973
        %3435 = vmatpush.bf16.msra.mxu0 %v1965
        %3436 = vmatmul.bf16.gmra.mxu0 %v3353
        %v3437 = vpop.f32.mrf.mxu0
        %v3438 = vadd.f32 %v3362, %v3437
        %v3439 = vpop.f32.mrf.mxu0
        %3440 = vdwg.mxu0
        %3441 = vmatpush.bf16.msra.mxu0 %v2085
        %3442 = vmatpush.bf16.msra.mxu0 %v2077
        %3443 = vmatpush.bf16.msra.mxu0 %v2069
        %3444 = vmatpush.bf16.msra.mxu0 %v2061
        %3445 = vmatpush.bf16.msra.mxu0 %v2053
        %3446 = vmatpush.bf16.msra.mxu0 %v2045
        %3447 = vmatpush.bf16.msra.mxu0 %v2037
        %3448 = vmatpush.bf16.msra.mxu0 %v2029
        %3449 = vmatmul.bf16.gmra.mxu0 %v3354
        %v3450 = vpop.f32.mrf.mxu0
        %v3451 = vadd.f32 %v3438, %v3450
        %v3452 = vpop.f32.mrf.mxu0
        %3453 = vdwg.mxu0
        %3454 = vmatpush.bf16.msra.mxu0 %v2022
        %3455 = vmatpush.bf16.msra.mxu0 %v2014
        %3456 = vmatpush.bf16.msra.mxu0 %v2006
        %3457 = vmatpush.bf16.msra.mxu0 %v1998
        %3458 = vmatpush.bf16.msra.mxu0 %v1990
        %3459 = vmatpush.bf16.msra.mxu0 %v1982
        %3460 = vmatpush.bf16.msra.mxu0 %v1974
        %3461 = vmatpush.bf16.msra.mxu0 %v1966
        %3462 = vmatmul.bf16.gmra.mxu0 %v3353
        %v3463 = vpop.f32.mrf.mxu0
        %v3464 = vadd.f32 %v3363, %v3463
        %v3465 = vpop.f32.mrf.mxu0
        %3466 = vdwg.mxu0
        %3467 = vmatpush.bf16.msra.mxu0 %v2086
        %3468 = vmatpush.bf16.msra.mxu0 %v2078
        %3469 = vmatpush.bf16.msra.mxu0 %v2070
        %3470 = vmatpush.bf16.msra.mxu0 %v2062
        %3471 = vmatpush.bf16.msra.mxu0 %v2054
        %3472 = vmatpush.bf16.msra.mxu0 %v2046
        %3473 = vmatpush.bf16.msra.mxu0 %v2038
        %3474 = vmatpush.bf16.msra.mxu0 %v2030
        %3475 = vmatmul.bf16.gmra.mxu0 %v3354
        %v3476 = vpop.f32.mrf.mxu0
        %v3477 = vadd.f32 %v3464, %v3476
        %v3478 = vpop.f32.mrf.mxu0
        %3479 = vdwg.mxu0
        %3480 = vmatpush.bf16.msra.mxu0 %v2023
        %3481 = vmatpush.bf16.msra.mxu0 %v2015
        %3482 = vmatpush.bf16.msra.mxu0 %v2007
        %3483 = vmatpush.bf16.msra.mxu0 %v1999
        %3484 = vmatpush.bf16.msra.mxu0 %v1991
        %3485 = vmatpush.bf16.msra.mxu0 %v1983
        %3486 = vmatpush.bf16.msra.mxu0 %v1975
        %3487 = vmatpush.bf16.msra.mxu0 %v1967
        %3488 = vmatmul.bf16.gmra.mxu0 %v3353
        %v3489 = vpop.f32.mrf.mxu0
        %v3490 = vadd.f32 %v3364, %v3489
        %v3491 = vpop.f32.mrf.mxu0
        %3492 = vdwg.mxu0
        %3493 = vmatpush.bf16.msra.mxu0 %v2087
        %3494 = vmatpush.bf16.msra.mxu0 %v2079
        %3495 = vmatpush.bf16.msra.mxu0 %v2071
        %3496 = vmatpush.bf16.msra.mxu0 %v2063
        %3497 = vmatpush.bf16.msra.mxu0 %v2055
        %3498 = vmatpush.bf16.msra.mxu0 %v2047
        %3499 = vmatpush.bf16.msra.mxu0 %v2039
        %3500 = vmatpush.bf16.msra.mxu0 %v2031
        %3501 = vmatmul.bf16.gmra.mxu0 %v3354
        %v3502 = vpop.f32.mrf.mxu0
        %v3503 = vadd.f32 %v3490, %v3502
        %v3504 = vpop.f32.mrf.mxu0
        %3505 = vdwg.mxu0
        %3506 = vmatpush.bf16.msra.mxu0 %v2024
        %3507 = vmatpush.bf16.msra.mxu0 %v2016
        %3508 = vmatpush.bf16.msra.mxu0 %v2008
        %3509 = vmatpush.bf16.msra.mxu0 %v2000
        %3510 = vmatpush.bf16.msra.mxu0 %v1992
        %3511 = vmatpush.bf16.msra.mxu0 %v1984
        %3512 = vmatpush.bf16.msra.mxu0 %v1976
        %3513 = vmatpush.bf16.msra.mxu0 %v1968
        %3514 = vmatmul.bf16.gmra.mxu0 %v3353
        %v3515 = vpop.f32.mrf.mxu0
        %v3516 = vadd.f32 %v3365, %v3515
        %v3517 = vpop.f32.mrf.mxu0
        %3518 = vdwg.mxu0
        %3519 = vmatpush.bf16.msra.mxu0 %v2088
        %3520 = vmatpush.bf16.msra.mxu0 %v2080
        %3521 = vmatpush.bf16.msra.mxu0 %v2072
        %3522 = vmatpush.bf16.msra.mxu0 %v2064
        %3523 = vmatpush.bf16.msra.mxu0 %v2056
        %3524 = vmatpush.bf16.msra.mxu0 %v2048
        %3525 = vmatpush.bf16.msra.mxu0 %v2040
        %3526 = vmatpush.bf16.msra.mxu0 %v2032
        %3527 = vmatmul.bf16.gmra.mxu0 %v3354
        %v3528 = vpop.f32.mrf.mxu0
        %v3529 = vadd.f32 %v3516, %v3528
        %v3530 = vpop.f32.mrf.mxu0
        %3531 = vdwg.mxu0
        %3532 = vmatpush.bf16.msra.mxu0 %v2025
        %3533 = vmatpush.bf16.msra.mxu0 %v2017
        %3534 = vmatpush.bf16.msra.mxu0 %v2009
        %3535 = vmatpush.bf16.msra.mxu0 %v2001
        %3536 = vmatpush.bf16.msra.mxu0 %v1993
        %3537 = vmatpush.bf16.msra.mxu0 %v1985
        %3538 = vmatpush.bf16.msra.mxu0 %v1977
        %3539 = vmatpush.bf16.msra.mxu0 %v1969
        %3540 = vmatmul.bf16.gmra.mxu0 %v3353
        %v3541 = vpop.f32.mrf.mxu0
        %v3542 = vadd.f32 %v3366, %v3541
        %v3543 = vpop.f32.mrf.mxu0
        %3544 = vdwg.mxu0
        %3545 = vmatpush.bf16.msra.mxu0 %v2089
        %3546 = vmatpush.bf16.msra.mxu0 %v2081
        %3547 = vmatpush.bf16.msra.mxu0 %v2073
        %3548 = vmatpush.bf16.msra.mxu0 %v2065
        %3549 = vmatpush.bf16.msra.mxu0 %v2057
        %3550 = vmatpush.bf16.msra.mxu0 %v2049
        %3551 = vmatpush.bf16.msra.mxu0 %v2041
        %3552 = vmatpush.bf16.msra.mxu0 %v2033
        %3553 = vmatmul.bf16.gmra.mxu0 %v3354
        %v3554 = vpop.f32.mrf.mxu0
        %v3555 = vadd.f32 %v3542, %v3554
        %v3556 = vpop.f32.mrf.mxu0
        %3557 = vdwg.mxu0
        %3558 = vmatpush.bf16.msra.mxu0 %v2026
        %3559 = vmatpush.bf16.msra.mxu0 %v2018
        %3560 = vmatpush.bf16.msra.mxu0 %v2010
        %3561 = vmatpush.bf16.msra.mxu0 %v2002
        %3562 = vmatpush.bf16.msra.mxu0 %v1994
        %3563 = vmatpush.bf16.msra.mxu0 %v1986
        %3564 = vmatpush.bf16.msra.mxu0 %v1978
        %3565 = vmatpush.bf16.msra.mxu0 %v1970
        %3566 = vmatmul.bf16.gmra.mxu0 %v3353
        %v3567 = vpop.f32.mrf.mxu0
        %v3568 = vadd.f32 %v3367, %v3567
        %v3569 = vpop.f32.mrf.mxu0
        %3570 = vdwg.mxu0
        %3571 = vmatpush.bf16.msra.mxu0 %v2090
        %3572 = vmatpush.bf16.msra.mxu0 %v2082
        %3573 = vmatpush.bf16.msra.mxu0 %v2074
        %3574 = vmatpush.bf16.msra.mxu0 %v2066
        %3575 = vmatpush.bf16.msra.mxu0 %v2058
        %3576 = vmatpush.bf16.msra.mxu0 %v2050
        %3577 = vmatpush.bf16.msra.mxu0 %v2042
        %3578 = vmatpush.bf16.msra.mxu0 %v2034
        %3579 = vmatmul.bf16.gmra.mxu0 %v3354
        %v3580 = vpop.f32.mrf.mxu0
        %v3581 = vadd.f32 %v3568, %v3580
        %v3582 = vpop.f32.mrf.mxu0
        %3583 = vdwg.mxu0
        %v3584 = vadd.f32 %v3399, %v2445
        %v3585 = vadd.f32 %v3425, %v2446
        %v3586 = vadd.f32 %v3451, %v2447
        %v3587 = vadd.f32 %v3477, %v2448
        %v3588 = vadd.f32 %v3503, %v2449
        %v3589 = vadd.f32 %v3529, %v2450
        %v3590 = vadd.f32 %v3555, %v2451
        %v3591 = vadd.f32 %v3581, %v2452
        %v3592 = vxor.u32 %v3584, 2147483648
        %v3593 = vxor.u32 %v3585, 2147483648
        %v3594 = vxor.u32 %v3586, 2147483648
        %v3595 = vxor.u32 %v3587, 2147483648
        %v3596 = vxor.u32 %v3588, 2147483648
        %v3597 = vxor.u32 %v3589, 2147483648
        %v3598 = vmul.f32 %v3592, 1.442695
        %v3599 = vpow.pop %v3598
        %v3600 = vmul.f32 %v3593, 1.442695
        %v3601 = vpow.pop %v3600
        %v3602 = vmul.f32 %v3594, 1.442695
        %v3603 = vpow.pop %v3602
        %v3604 = vmul.f32 %v3595, 1.442695
        %v3605 = vpow.pop %v3604
        %v3606 = vmul.f32 %v3596, 1.442695
        %v3607 = vpow.pop %v3606
        %v3608 = vmul.f32 %v3597, 1.442695
        %v3609 = vpow.pop %v3608
        %v3610 = vadd.f32 %v3599, 1.0
        %v3611 = vadd.f32 %v3601, 1.0
        %v3612 = vadd.f32 %v3603, 1.0
        %v3613 = vadd.f32 %v3605, 1.0
        %v3614 = vadd.f32 %v3607, 1.0
        %v3615 = vadd.f32 %v3609, 1.0
        %v3616 = vrcp.pop %v3610
        %v3617 = vmul.f32 %v3610, %v3616
        %v3618 = vsub.f32 1.0, %v3617
        %v3619 = vmul.f32 %v3616, %v3618
        %v3620 = vadd.f32 %v3616, %v3619
        %vm3621 = vweird.f32 %v3610
        %vm3622 = vweird.f32 %v3616
        %vm3623 = vmor %vm3621, %vm3622
        %v3624 = vsel %vm3623, %v3616, %v3620
        %v3625 = vand.u32 2147483647, %v3610
        %vm3626 = vcmp.eq.f32.partialorder %v3625, 8.507059e+37
        %v3627 = vand.u32 %v3610, 2147483648
        %v3628 = vor.u32 1.1754944e-38, %v3627
        %v3629 = vsel %vm3626, %v3628, %v3624
        %v3630 = vmul.f32 1.0, %v3629
        %v3631 = vrcp.pop %v3611
        %v3632 = vmul.f32 %v3611, %v3631
        %v3633 = vsub.f32 1.0, %v3632
        %v3634 = vmul.f32 %v3631, %v3633
        %v3635 = vadd.f32 %v3631, %v3634
        %vm3636 = vweird.f32 %v3611
        %vm3637 = vweird.f32 %v3631
        %vm3638 = vmor %vm3636, %vm3637
        %v3639 = vsel %vm3638, %v3631, %v3635
        %v3640 = vand.u32 2147483647, %v3611
        %vm3641 = vcmp.eq.f32.partialorder %v3640, 8.507059e+37
        %v3642 = vand.u32 %v3611, 2147483648
        %v3643 = vor.u32 1.1754944e-38, %v3642
        %v3644 = vsel %vm3641, %v3643, %v3639
        %v3645 = vmul.f32 1.0, %v3644
        %v3646 = vrcp.pop %v3612
        %v3647 = vmul.f32 %v3612, %v3646
        %v3648 = vsub.f32 1.0, %v3647
        %v3649 = vmul.f32 %v3646, %v3648
        %v3650 = vadd.f32 %v3646, %v3649
        %vm3651 = vweird.f32 %v3612
        %vm3652 = vweird.f32 %v3646
        %vm3653 = vmor %vm3651, %vm3652
        %v3654 = vsel %vm3653, %v3646, %v3650
        %v3655 = vand.u32 2147483647, %v3612
        %vm3656 = vcmp.eq.f32.partialorder %v3655, 8.507059e+37
        %v3657 = vand.u32 %v3612, 2147483648
        %v3658 = vor.u32 1.1754944e-38, %v3657
        %v3659 = vsel %vm3656, %v3658, %v3654
        %v3660 = vmul.f32 1.0, %v3659
        %v3661 = vrcp.pop %v3613
        %v3662 = vmul.f32 %v3613, %v3661
        %v3663 = vsub.f32 1.0, %v3662
        %v3664 = vmul.f32 %v3661, %v3663
        %v3665 = vadd.f32 %v3661, %v3664
        %vm3666 = vweird.f32 %v3613
        %vm3667 = vweird.f32 %v3661
        %vm3668 = vmor %vm3666, %vm3667
        %v3669 = vsel %vm3668, %v3661, %v3665
        %v3670 = vand.u32 2147483647, %v3613
        %vm3671 = vcmp.eq.f32.partialorder %v3670, 8.507059e+37
        %v3672 = vand.u32 %v3613, 2147483648
        %v3673 = vor.u32 1.1754944e-38, %v3672
        %v3674 = vsel %vm3671, %v3673, %v3669
        %v3675 = vmul.f32 1.0, %v3674
        %v3676 = vrcp.pop %v3614
        %v3677 = vmul.f32 %v3614, %v3676
        %v3678 = vsub.f32 1.0, %v3677
        %v3679 = vmul.f32 %v3676, %v3678
        %v3680 = vadd.f32 %v3676, %v3679
        %vm3681 = vweird.f32 %v3614
        %vm3682 = vweird.f32 %v3676
        %vm3683 = vmor %vm3681, %vm3682
        %v3684 = vsel %vm3683, %v3676, %v3680
        %v3685 = vand.u32 2147483647, %v3614
        %vm3686 = vcmp.eq.f32.partialorder %v3685, 8.507059e+37
        %v3687 = vand.u32 %v3614, 2147483648
        %v3688 = vor.u32 1.1754944e-38, %v3687
        %v3689 = vsel %vm3686, %v3688, %v3684
        %v3690 = vmul.f32 1.0, %v3689
        %v3691 = vrcp.pop %v3615
        %v3692 = vmul.f32 %v3615, %v3691
        %v3693 = vsub.f32 1.0, %v3692
        %v3694 = vmul.f32 %v3691, %v3693
        %v3695 = vadd.f32 %v3691, %v3694
        %vm3696 = vweird.f32 %v3615
        %vm3697 = vweird.f32 %v3691
        %vm3698 = vmor %vm3696, %vm3697
        %v3699 = vsel %vm3698, %v3691, %v3695
        %v3700 = vand.u32 2147483647, %v3615
        %vm3701 = vcmp.eq.f32.partialorder %v3700, 8.507059e+37
        %v3702 = vand.u32 %v3615, 2147483648
        %v3703 = vor.u32 1.1754944e-38, %v3702
        %v3704 = vsel %vm3701, %v3703, %v3699
        %v3705 = vmul.f32 1.0, %v3704
        %v3706 = vtanh.pop %v3590
        %v3707 = vtanh.pop %v3591
        %v3708 = vmul.f32 %v3660, %v3339
        %v3709 = vmul.f32 %v3675, %v3340
        %v3710 = vmul.f32 %v3630, %v3706
        %v3711 = vmul.f32 %v3645, %v3707
        %v3712 = vadd.f32 %v3708, %v3710
        %v3713 = vadd.f32 %v3709, %v3711
        %v3714 = vtanh.pop %v3712
        %v3715 = vtanh.pop %v3713
        %v3716 = vmul.f32 %v3690, %v3714
        %v3717 = vmul.f32 %v3705, %v3715
        %v3720 = vrot.slane %v3717, 7
        %v3721 = vsel %vm2598, %v3716, %v3720
        %s3723 = scalar_lea.vmem [#allocation2], 3
        %3724 = vst.msk [vmem:[%s3723] ss:$8 sm:$0x3] %vm2604, %v3721
        %3725 = vst.msk [vmem:[%s3723] ss:$8 sm:$0x0] %vm2604, %v3721
        %v3726 = vpack.c.bf16 %v3716, %v3716
        %v3727 = vpack.c.bf16 %v3717, %v3717
        %s3728 = scalar_lea.vmem [#allocation3], 4
        %v3729 = vld [vmem:[%s3728] ss:$8 sm:$0xf]
        %v3730 = vld [vmem:[%s3728] ss:$8 sm:$0xf0]
        %v3731 = vor.u32 %v3729, %v3730
        %v3733 = vperm.slane %v3731, 0
        %v3734 = vperm.slane %v3731, 1
        %v3735 = vperm.slane %v3731, 2
        %v3736 = vperm.slane %v3731, 3
        %v3737 = vperm.slane %v3731, 4
        %v3738 = vperm.slane %v3731, 5
        %v3739 = vperm.slane %v3731, 6
        %v3740 = vperm.slane %v3731, 7
        %3749 = vmatpush.bf16.msra.mxu0 %v2019
        %3750 = vmatpush.bf16.msra.mxu0 %v2011
        %3751 = vmatpush.bf16.msra.mxu0 %v2003
        %3752 = vmatpush.bf16.msra.mxu0 %v1995
        %3753 = vmatpush.bf16.msra.mxu0 %v1987
        %3754 = vmatpush.bf16.msra.mxu0 %v1979
        %3755 = vmatpush.bf16.msra.mxu0 %v1971
        %3756 = vmatpush.bf16.msra.mxu0 %v1963
        %3757 = vmatmul.bf16.gmra.mxu0 %v3726
        %v3758 = vpop.f32.mrf.mxu0
        %v3759 = vadd.f32 %v3733, %v3758
        %v3760 = vpop.f32.mrf.mxu0
        %3761 = vdwg.mxu0
        %3762 = vmatpush.bf16.msra.mxu0 %v2083
        %3763 = vmatpush.bf16.msra.mxu0 %v2075
        %3764 = vmatpush.bf16.msra.mxu0 %v2067
        %3765 = vmatpush.bf16.msra.mxu0 %v2059
        %3766 = vmatpush.bf16.msra.mxu0 %v2051
        %3767 = vmatpush.bf16.msra.mxu0 %v2043
        %3768 = vmatpush.bf16.msra.mxu0 %v2035
        %3769 = vmatpush.bf16.msra.mxu0 %v2027
        %3770 = vmatmul.bf16.gmra.mxu0 %v3727
        %v3771 = vpop.f32.mrf.mxu0
        %v3772 = vadd.f32 %v3759, %v3771
        %v3773 = vpop.f32.mrf.mxu0
        %3774 = vdwg.mxu0
        %3775 = vmatpush.bf16.msra.mxu0 %v2020
        %3776 = vmatpush.bf16.msra.mxu0 %v2012
        %3777 = vmatpush.bf16.msra.mxu0 %v2004
        %3778 = vmatpush.bf16.msra.mxu0 %v1996
        %3779 = vmatpush.bf16.msra.mxu0 %v1988
        %3780 = vmatpush.bf16.msra.mxu0 %v1980
        %3781 = vmatpush.bf16.msra.mxu0 %v1972
        %3782 = vmatpush.bf16.msra.mxu0 %v1964
        %3783 = vmatmul.bf16.gmra.mxu0 %v3726
        %v3784 = vpop.f32.mrf.mxu0
        %v3785 = vadd.f32 %v3734, %v3784
        %v3786 = vpop.f32.mrf.mxu0
        %3787 = vdwg.mxu0
        %3788 = vmatpush.bf16.msra.mxu0 %v2084
        %3789 = vmatpush.bf16.msra.mxu0 %v2076
        %3790 = vmatpush.bf16.msra.mxu0 %v2068
        %3791 = vmatpush.bf16.msra.mxu0 %v2060
        %3792 = vmatpush.bf16.msra.mxu0 %v2052
        %3793 = vmatpush.bf16.msra.mxu0 %v2044
        %3794 = vmatpush.bf16.msra.mxu0 %v2036
        %3795 = vmatpush.bf16.msra.mxu0 %v2028
        %3796 = vmatmul.bf16.gmra.mxu0 %v3727
        %v3797 = vpop.f32.mrf.mxu0
        %v3798 = vadd.f32 %v3785, %v3797
        %v3799 = vpop.f32.mrf.mxu0
        %3800 = vdwg.mxu0
        %3801 = vmatpush.bf16.msra.mxu0 %v2021
        %3802 = vmatpush.bf16.msra.mxu0 %v2013
        %3803 = vmatpush.bf16.msra.mxu0 %v2005
        %3804 = vmatpush.bf16.msra.mxu0 %v1997
        %3805 = vmatpush.bf16.msra.mxu0 %v1989
        %3806 = vmatpush.bf16.msra.mxu0 %v1981
        %3807 = vmatpush.bf16.msra.mxu0 %v1973
        %3808 = vmatpush.bf16.msra.mxu0 %v1965
        %3809 = vmatmul.bf16.gmra.mxu0 %v3726
        %v3810 = vpop.f32.mrf.mxu0
        %v3811 = vadd.f32 %v3735, %v3810
        %v3812 = vpop.f32.mrf.mxu0
        %3813 = vdwg.mxu0
        %3814 = vmatpush.bf16.msra.mxu0 %v2085
        %3815 = vmatpush.bf16.msra.mxu0 %v2077
        %3816 = vmatpush.bf16.msra.mxu0 %v2069
        %3817 = vmatpush.bf16.msra.mxu0 %v2061
        %3818 = vmatpush.bf16.msra.mxu0 %v2053
        %3819 = vmatpush.bf16.msra.mxu0 %v2045
        %3820 = vmatpush.bf16.msra.mxu0 %v2037
        %3821 = vmatpush.bf16.msra.mxu0 %v2029
        %3822 = vmatmul.bf16.gmra.mxu0 %v3727
        %v3823 = vpop.f32.mrf.mxu0
        %v3824 = vadd.f32 %v3811, %v3823
        %v3825 = vpop.f32.mrf.mxu0
        %3826 = vdwg.mxu0
        %3827 = vmatpush.bf16.msra.mxu0 %v2022
        %3828 = vmatpush.bf16.msra.mxu0 %v2014
        %3829 = vmatpush.bf16.msra.mxu0 %v2006
        %3830 = vmatpush.bf16.msra.mxu0 %v1998
        %3831 = vmatpush.bf16.msra.mxu0 %v1990
        %3832 = vmatpush.bf16.msra.mxu0 %v1982
        %3833 = vmatpush.bf16.msra.mxu0 %v1974
        %3834 = vmatpush.bf16.msra.mxu0 %v1966
        %3835 = vmatmul.bf16.gmra.mxu0 %v3726
        %v3836 = vpop.f32.mrf.mxu0
        %v3837 = vadd.f32 %v3736, %v3836
        %v3838 = vpop.f32.mrf.mxu0
        %3839 = vdwg.mxu0
        %3840 = vmatpush.bf16.msra.mxu0 %v2086
        %3841 = vmatpush.bf16.msra.mxu0 %v2078
        %3842 = vmatpush.bf16.msra.mxu0 %v2070
        %3843 = vmatpush.bf16.msra.mxu0 %v2062
        %3844 = vmatpush.bf16.msra.mxu0 %v2054
        %3845 = vmatpush.bf16.msra.mxu0 %v2046
        %3846 = vmatpush.bf16.msra.mxu0 %v2038
        %3847 = vmatpush.bf16.msra.mxu0 %v2030
        %3848 = vmatmul.bf16.gmra.mxu0 %v3727
        %v3849 = vpop.f32.mrf.mxu0
        %v3850 = vadd.f32 %v3837, %v3849
        %v3851 = vpop.f32.mrf.mxu0
        %3852 = vdwg.mxu0
        %3853 = vmatpush.bf16.msra.mxu0 %v2023
        %3854 = vmatpush.bf16.msra.mxu0 %v2015
        %3855 = vmatpush.bf16.msra.mxu0 %v2007
        %3856 = vmatpush.bf16.msra.mxu0 %v1999
        %3857 = vmatpush.bf16.msra.mxu0 %v1991
        %3858 = vmatpush.bf16.msra.mxu0 %v1983
        %3859 = vmatpush.bf16.msra.mxu0 %v1975
        %3860 = vmatpush.bf16.msra.mxu0 %v1967
        %3861 = vmatmul.bf16.gmra.mxu0 %v3726
        %v3862 = vpop.f32.mrf.mxu0
        %v3863 = vadd.f32 %v3737, %v3862
        %v3864 = vpop.f32.mrf.mxu0
        %3865 = vdwg.mxu0
        %3866 = vmatpush.bf16.msra.mxu0 %v2087
        %3867 = vmatpush.bf16.msra.mxu0 %v2079
        %3868 = vmatpush.bf16.msra.mxu0 %v2071
        %3869 = vmatpush.bf16.msra.mxu0 %v2063
        %3870 = vmatpush.bf16.msra.mxu0 %v2055
        %3871 = vmatpush.bf16.msra.mxu0 %v2047
        %3872 = vmatpush.bf16.msra.mxu0 %v2039
        %3873 = vmatpush.bf16.msra.mxu0 %v2031
        %3874 = vmatmul.bf16.gmra.mxu0 %v3727
        %v3875 = vpop.f32.mrf.mxu0
        %v3876 = vadd.f32 %v3863, %v3875
        %v3877 = vpop.f32.mrf.mxu0
        %3878 = vdwg.mxu0
        %3879 = vmatpush.bf16.msra.mxu0 %v2024
        %3880 = vmatpush.bf16.msra.mxu0 %v2016
        %3881 = vmatpush.bf16.msra.mxu0 %v2008
        %3882 = vmatpush.bf16.msra.mxu0 %v2000
        %3883 = vmatpush.bf16.msra.mxu0 %v1992
        %3884 = vmatpush.bf16.msra.mxu0 %v1984
        %3885 = vmatpush.bf16.msra.mxu0 %v1976
        %3886 = vmatpush.bf16.msra.mxu0 %v1968
        %3887 = vmatmul.bf16.gmra.mxu0 %v3726
        %v3888 = vpop.f32.mrf.mxu0
        %v3889 = vadd.f32 %v3738, %v3888
        %v3890 = vpop.f32.mrf.mxu0
        %3891 = vdwg.mxu0
        %3892 = vmatpush.bf16.msra.mxu0 %v2088
        %3893 = vmatpush.bf16.msra.mxu0 %v2080
        %3894 = vmatpush.bf16.msra.mxu0 %v2072
        %3895 = vmatpush.bf16.msra.mxu0 %v2064
        %3896 = vmatpush.bf16.msra.mxu0 %v2056
        %3897 = vmatpush.bf16.msra.mxu0 %v2048
        %3898 = vmatpush.bf16.msra.mxu0 %v2040
        %3899 = vmatpush.bf16.msra.mxu0 %v2032
        %3900 = vmatmul.bf16.gmra.mxu0 %v3727
        %v3901 = vpop.f32.mrf.mxu0
        %v3902 = vadd.f32 %v3889, %v3901
        %v3903 = vpop.f32.mrf.mxu0
        %3904 = vdwg.mxu0
        %3905 = vmatpush.bf16.msra.mxu0 %v2025
        %3906 = vmatpush.bf16.msra.mxu0 %v2017
        %3907 = vmatpush.bf16.msra.mxu0 %v2009
        %3908 = vmatpush.bf16.msra.mxu0 %v2001
        %3909 = vmatpush.bf16.msra.mxu0 %v1993
        %3910 = vmatpush.bf16.msra.mxu0 %v1985
        %3911 = vmatpush.bf16.msra.mxu0 %v1977
        %3912 = vmatpush.bf16.msra.mxu0 %v1969
        %3913 = vmatmul.bf16.gmra.mxu0 %v3726
        %v3914 = vpop.f32.mrf.mxu0
        %v3915 = vadd.f32 %v3739, %v3914
        %v3916 = vpop.f32.mrf.mxu0
        %3917 = vdwg.mxu0
        %3918 = vmatpush.bf16.msra.mxu0 %v2089
        %3919 = vmatpush.bf16.msra.mxu0 %v2081
        %3920 = vmatpush.bf16.msra.mxu0 %v2073
        %3921 = vmatpush.bf16.msra.mxu0 %v2065
        %3922 = vmatpush.bf16.msra.mxu0 %v2057
        %3923 = vmatpush.bf16.msra.mxu0 %v2049
        %3924 = vmatpush.bf16.msra.mxu0 %v2041
        %3925 = vmatpush.bf16.msra.mxu0 %v2033
        %3926 = vmatmul.bf16.gmra.mxu0 %v3727
        %v3927 = vpop.f32.mrf.mxu0
        %v3928 = vadd.f32 %v3915, %v3927
        %v3929 = vpop.f32.mrf.mxu0
        %3930 = vdwg.mxu0
        %3931 = vmatpush.bf16.msra.mxu0 %v2026
        %3932 = vmatpush.bf16.msra.mxu0 %v2018
        %3933 = vmatpush.bf16.msra.mxu0 %v2010
        %3934 = vmatpush.bf16.msra.mxu0 %v2002
        %3935 = vmatpush.bf16.msra.mxu0 %v1994
        %3936 = vmatpush.bf16.msra.mxu0 %v1986
        %3937 = vmatpush.bf16.msra.mxu0 %v1978
        %3938 = vmatpush.bf16.msra.mxu0 %v1970
        %3939 = vmatmul.bf16.gmra.mxu0 %v3726
        %v3940 = vpop.f32.mrf.mxu0
        %v3941 = vadd.f32 %v3740, %v3940
        %v3942 = vpop.f32.mrf.mxu0
        %3943 = vdwg.mxu0
        %3944 = vmatpush.bf16.msra.mxu0 %v2090
        %3945 = vmatpush.bf16.msra.mxu0 %v2082
        %3946 = vmatpush.bf16.msra.mxu0 %v2074
        %3947 = vmatpush.bf16.msra.mxu0 %v2066
        %3948 = vmatpush.bf16.msra.mxu0 %v2058
        %3949 = vmatpush.bf16.msra.mxu0 %v2050
        %3950 = vmatpush.bf16.msra.mxu0 %v2042
        %3951 = vmatpush.bf16.msra.mxu0 %v2034
        %3952 = vmatmul.bf16.gmra.mxu0 %v3727
        %v3953 = vpop.f32.mrf.mxu0
        %v3954 = vadd.f32 %v3941, %v3953
        %v3955 = vpop.f32.mrf.mxu0
        %3956 = vdwg.mxu0
        %v3957 = vadd.f32 %v3772, %v2445
        %v3958 = vadd.f32 %v3798, %v2446
        %v3959 = vadd.f32 %v3824, %v2447
        %v3960 = vadd.f32 %v3850, %v2448
        %v3961 = vadd.f32 %v3876, %v2449
        %v3962 = vadd.f32 %v3902, %v2450
        %v3963 = vadd.f32 %v3928, %v2451
        %v3964 = vadd.f32 %v3954, %v2452
        %v3965 = vxor.u32 %v3957, 2147483648
        %v3966 = vxor.u32 %v3958, 2147483648
        %v3967 = vxor.u32 %v3959, 2147483648
        %v3968 = vxor.u32 %v3960, 2147483648
        %v3969 = vxor.u32 %v3961, 2147483648
        %v3970 = vxor.u32 %v3962, 2147483648
        %v3971 = vmul.f32 %v3965, 1.442695
        %v3972 = vpow.pop %v3971
        %v3973 = vmul.f32 %v3966, 1.442695
        %v3974 = vpow.pop %v3973
        %v3975 = vmul.f32 %v3967, 1.442695
        %v3976 = vpow.pop %v3975
        %v3977 = vmul.f32 %v3968, 1.442695
        %v3978 = vpow.pop %v3977
        %v3979 = vmul.f32 %v3969, 1.442695
        %v3980 = vpow.pop %v3979
        %v3981 = vmul.f32 %v3970, 1.442695
        %v3982 = vpow.pop %v3981
        %v3983 = vadd.f32 %v3972, 1.0
        %v3984 = vadd.f32 %v3974, 1.0
        %v3985 = vadd.f32 %v3976, 1.0
        %v3986 = vadd.f32 %v3978, 1.0
        %v3987 = vadd.f32 %v3980, 1.0
        %v3988 = vadd.f32 %v3982, 1.0
        %v3989 = vrcp.pop %v3983
        %v3990 = vmul.f32 %v3983, %v3989
        %v3991 = vsub.f32 1.0, %v3990
        %v3992 = vmul.f32 %v3989, %v3991
        %v3993 = vadd.f32 %v3989, %v3992
        %vm3994 = vweird.f32 %v3983
        %vm3995 = vweird.f32 %v3989
        %vm3996 = vmor %vm3994, %vm3995
        %v3997 = vsel %vm3996, %v3989, %v3993
        %v3998 = vand.u32 2147483647, %v3983
        %vm3999 = vcmp.eq.f32.partialorder %v3998, 8.507059e+37
        %v4000 = vand.u32 %v3983, 2147483648
        %v4001 = vor.u32 1.1754944e-38, %v4000
        %v4002 = vsel %vm3999, %v4001, %v3997
        %v4003 = vmul.f32 1.0, %v4002
        %v4004 = vrcp.pop %v3984
        %v4005 = vmul.f32 %v3984, %v4004
        %v4006 = vsub.f32 1.0, %v4005
        %v4007 = vmul.f32 %v4004, %v4006
        %v4008 = vadd.f32 %v4004, %v4007
        %vm4009 = vweird.f32 %v3984
        %vm4010 = vweird.f32 %v4004
        %vm4011 = vmor %vm4009, %vm4010
        %v4012 = vsel %vm4011, %v4004, %v4008
        %v4013 = vand.u32 2147483647, %v3984
        %vm4014 = vcmp.eq.f32.partialorder %v4013, 8.507059e+37
        %v4015 = vand.u32 %v3984, 2147483648
        %v4016 = vor.u32 1.1754944e-38, %v4015
        %v4017 = vsel %vm4014, %v4016, %v4012
        %v4018 = vmul.f32 1.0, %v4017
        %v4019 = vrcp.pop %v3985
        %v4020 = vmul.f32 %v3985, %v4019
        %v4021 = vsub.f32 1.0, %v4020
        %v4022 = vmul.f32 %v4019, %v4021
        %v4023 = vadd.f32 %v4019, %v4022
        %vm4024 = vweird.f32 %v3985
        %vm4025 = vweird.f32 %v4019
        %vm4026 = vmor %vm4024, %vm4025
        %v4027 = vsel %vm4026, %v4019, %v4023
        %v4028 = vand.u32 2147483647, %v3985
        %vm4029 = vcmp.eq.f32.partialorder %v4028, 8.507059e+37
        %v4030 = vand.u32 %v3985, 2147483648
        %v4031 = vor.u32 1.1754944e-38, %v4030
        %v4032 = vsel %vm4029, %v4031, %v4027
        %v4033 = vmul.f32 1.0, %v4032
        %v4034 = vrcp.pop %v3986
        %v4035 = vmul.f32 %v3986, %v4034
        %v4036 = vsub.f32 1.0, %v4035
        %v4037 = vmul.f32 %v4034, %v4036
        %v4038 = vadd.f32 %v4034, %v4037
        %vm4039 = vweird.f32 %v3986
        %vm4040 = vweird.f32 %v4034
        %vm4041 = vmor %vm4039, %vm4040
        %v4042 = vsel %vm4041, %v4034, %v4038
        %v4043 = vand.u32 2147483647, %v3986
        %vm4044 = vcmp.eq.f32.partialorder %v4043, 8.507059e+37
        %v4045 = vand.u32 %v3986, 2147483648
        %v4046 = vor.u32 1.1754944e-38, %v4045
        %v4047 = vsel %vm4044, %v4046, %v4042
        %v4048 = vmul.f32 1.0, %v4047
        %v4049 = vrcp.pop %v3987
        %v4050 = vmul.f32 %v3987, %v4049
        %v4051 = vsub.f32 1.0, %v4050
        %v4052 = vmul.f32 %v4049, %v4051
        %v4053 = vadd.f32 %v4049, %v4052
        %vm4054 = vweird.f32 %v3987
        %vm4055 = vweird.f32 %v4049
        %vm4056 = vmor %vm4054, %vm4055
        %v4057 = vsel %vm4056, %v4049, %v4053
        %v4058 = vand.u32 2147483647, %v3987
        %vm4059 = vcmp.eq.f32.partialorder %v4058, 8.507059e+37
        %v4060 = vand.u32 %v3987, 2147483648
        %v4061 = vor.u32 1.1754944e-38, %v4060
        %v4062 = vsel %vm4059, %v4061, %v4057
        %v4063 = vmul.f32 1.0, %v4062
        %v4064 = vrcp.pop %v3988
        %v4065 = vmul.f32 %v3988, %v4064
        %v4066 = vsub.f32 1.0, %v4065
        %v4067 = vmul.f32 %v4064, %v4066
        %v4068 = vadd.f32 %v4064, %v4067
        %vm4069 = vweird.f32 %v3988
        %vm4070 = vweird.f32 %v4064
        %vm4071 = vmor %vm4069, %vm4070
        %v4072 = vsel %vm4071, %v4064, %v4068
        %v4073 = vand.u32 2147483647, %v3988
        %vm4074 = vcmp.eq.f32.partialorder %v4073, 8.507059e+37
        %v4075 = vand.u32 %v3988, 2147483648
        %v4076 = vor.u32 1.1754944e-38, %v4075
        %v4077 = vsel %vm4074, %v4076, %v4072
        %v4078 = vmul.f32 1.0, %v4077
        %v4079 = vtanh.pop %v3963
        %v4080 = vtanh.pop %v3964
        %v4081 = vmul.f32 %v4033, %v3712
        %v4082 = vmul.f32 %v4048, %v3713
        %v4083 = vmul.f32 %v4003, %v4079
        %v4084 = vmul.f32 %v4018, %v4080
        %v4085 = vadd.f32 %v4081, %v4083
        %v4086 = vadd.f32 %v4082, %v4084
        %v4087 = vtanh.pop %v4085
        %v4088 = vtanh.pop %v4086
        %v4089 = vmul.f32 %v4063, %v4087
        %v4090 = vmul.f32 %v4078, %v4088
        %v4093 = vrot.slane %v4090, 7
        %v4094 = vsel %vm2598, %v4089, %v4093
        %s4096 = scalar_lea.vmem [#allocation2], 4
        %4097 = vst.msk [vmem:[%s4096] ss:$8 sm:$0x3] %vm2604, %v4094
        %4098 = vst.msk [vmem:[%s4096] ss:$8 sm:$0x0] %vm2604, %v4094
        %v4099 = vpack.c.bf16 %v4089, %v4089
        %v4100 = vpack.c.bf16 %v4090, %v4090
        %s4101 = scalar_lea.vmem [#allocation3], 5
        %v4102 = vld [vmem:[%s4101] ss:$8 sm:$0xf]
        %v4103 = vld [vmem:[%s4101] ss:$8 sm:$0xf0]
        %v4104 = vor.u32 %v4102, %v4103
        %v4106 = vperm.slane %v4104, 0
        %v4107 = vperm.slane %v4104, 1
        %v4108 = vperm.slane %v4104, 2
        %v4109 = vperm.slane %v4104, 3
        %v4110 = vperm.slane %v4104, 4
        %v4111 = vperm.slane %v4104, 5
        %v4112 = vperm.slane %v4104, 6
        %v4113 = vperm.slane %v4104, 7
        %4122 = vmatpush.bf16.msra.mxu0 %v2019
        %4123 = vmatpush.bf16.msra.mxu0 %v2011
        %4124 = vmatpush.bf16.msra.mxu0 %v2003
        %4125 = vmatpush.bf16.msra.mxu0 %v1995
        %4126 = vmatpush.bf16.msra.mxu0 %v1987
        %4127 = vmatpush.bf16.msra.mxu0 %v1979
        %4128 = vmatpush.bf16.msra.mxu0 %v1971
        %4129 = vmatpush.bf16.msra.mxu0 %v1963
        %4130 = vmatmul.bf16.gmra.mxu0 %v4099
        %v4131 = vpop.f32.mrf.mxu0
        %v4132 = vadd.f32 %v4106, %v4131
        %v4133 = vpop.f32.mrf.mxu0
        %4134 = vdwg.mxu0
        %4135 = vmatpush.bf16.msra.mxu0 %v2083
        %4136 = vmatpush.bf16.msra.mxu0 %v2075
        %4137 = vmatpush.bf16.msra.mxu0 %v2067
        %4138 = vmatpush.bf16.msra.mxu0 %v2059
        %4139 = vmatpush.bf16.msra.mxu0 %v2051
        %4140 = vmatpush.bf16.msra.mxu0 %v2043
        %4141 = vmatpush.bf16.msra.mxu0 %v2035
        %4142 = vmatpush.bf16.msra.mxu0 %v2027
        %4143 = vmatmul.bf16.gmra.mxu0 %v4100
        %v4144 = vpop.f32.mrf.mxu0
        %v4145 = vadd.f32 %v4132, %v4144
        %v4146 = vpop.f32.mrf.mxu0
        %4147 = vdwg.mxu0
        %4148 = vmatpush.bf16.msra.mxu0 %v2020
        %4149 = vmatpush.bf16.msra.mxu0 %v2012
        %4150 = vmatpush.bf16.msra.mxu0 %v2004
        %4151 = vmatpush.bf16.msra.mxu0 %v1996
        %4152 = vmatpush.bf16.msra.mxu0 %v1988
        %4153 = vmatpush.bf16.msra.mxu0 %v1980
        %4154 = vmatpush.bf16.msra.mxu0 %v1972
        %4155 = vmatpush.bf16.msra.mxu0 %v1964
        %4156 = vmatmul.bf16.gmra.mxu0 %v4099
        %v4157 = vpop.f32.mrf.mxu0
        %v4158 = vadd.f32 %v4107, %v4157
        %v4159 = vpop.f32.mrf.mxu0
        %4160 = vdwg.mxu0
        %4161 = vmatpush.bf16.msra.mxu0 %v2084
        %4162 = vmatpush.bf16.msra.mxu0 %v2076
        %4163 = vmatpush.bf16.msra.mxu0 %v2068
        %4164 = vmatpush.bf16.msra.mxu0 %v2060
        %4165 = vmatpush.bf16.msra.mxu0 %v2052
        %4166 = vmatpush.bf16.msra.mxu0 %v2044
        %4167 = vmatpush.bf16.msra.mxu0 %v2036
        %4168 = vmatpush.bf16.msra.mxu0 %v2028
        %4169 = vmatmul.bf16.gmra.mxu0 %v4100
        %v4170 = vpop.f32.mrf.mxu0
        %v4171 = vadd.f32 %v4158, %v4170
        %v4172 = vpop.f32.mrf.mxu0
        %4173 = vdwg.mxu0
        %4174 = vmatpush.bf16.msra.mxu0 %v2021
        %4175 = vmatpush.bf16.msra.mxu0 %v2013
        %4176 = vmatpush.bf16.msra.mxu0 %v2005
        %4177 = vmatpush.bf16.msra.mxu0 %v1997
        %4178 = vmatpush.bf16.msra.mxu0 %v1989
        %4179 = vmatpush.bf16.msra.mxu0 %v1981
        %4180 = vmatpush.bf16.msra.mxu0 %v1973
        %4181 = vmatpush.bf16.msra.mxu0 %v1965
        %4182 = vmatmul.bf16.gmra.mxu0 %v4099
        %v4183 = vpop.f32.mrf.mxu0
        %v4184 = vadd.f32 %v4108, %v4183
        %v4185 = vpop.f32.mrf.mxu0
        %4186 = vdwg.mxu0
        %4187 = vmatpush.bf16.msra.mxu0 %v2085
        %4188 = vmatpush.bf16.msra.mxu0 %v2077
        %4189 = vmatpush.bf16.msra.mxu0 %v2069
        %4190 = vmatpush.bf16.msra.mxu0 %v2061
        %4191 = vmatpush.bf16.msra.mxu0 %v2053
        %4192 = vmatpush.bf16.msra.mxu0 %v2045
        %4193 = vmatpush.bf16.msra.mxu0 %v2037
        %4194 = vmatpush.bf16.msra.mxu0 %v2029
        %4195 = vmatmul.bf16.gmra.mxu0 %v4100
        %v4196 = vpop.f32.mrf.mxu0
        %v4197 = vadd.f32 %v4184, %v4196
        %v4198 = vpop.f32.mrf.mxu0
        %4199 = vdwg.mxu0
        %4200 = vmatpush.bf16.msra.mxu0 %v2022
        %4201 = vmatpush.bf16.msra.mxu0 %v2014
        %4202 = vmatpush.bf16.msra.mxu0 %v2006
        %4203 = vmatpush.bf16.msra.mxu0 %v1998
        %4204 = vmatpush.bf16.msra.mxu0 %v1990
        %4205 = vmatpush.bf16.msra.mxu0 %v1982
        %4206 = vmatpush.bf16.msra.mxu0 %v1974
        %4207 = vmatpush.bf16.msra.mxu0 %v1966
        %4208 = vmatmul.bf16.gmra.mxu0 %v4099
        %v4209 = vpop.f32.mrf.mxu0
        %v4210 = vadd.f32 %v4109, %v4209
        %v4211 = vpop.f32.mrf.mxu0
        %4212 = vdwg.mxu0
        %4213 = vmatpush.bf16.msra.mxu0 %v2086
        %4214 = vmatpush.bf16.msra.mxu0 %v2078
        %4215 = vmatpush.bf16.msra.mxu0 %v2070
        %4216 = vmatpush.bf16.msra.mxu0 %v2062
        %4217 = vmatpush.bf16.msra.mxu0 %v2054
        %4218 = vmatpush.bf16.msra.mxu0 %v2046
        %4219 = vmatpush.bf16.msra.mxu0 %v2038
        %4220 = vmatpush.bf16.msra.mxu0 %v2030
        %4221 = vmatmul.bf16.gmra.mxu0 %v4100
        %v4222 = vpop.f32.mrf.mxu0
        %v4223 = vadd.f32 %v4210, %v4222
        %v4224 = vpop.f32.mrf.mxu0
        %4225 = vdwg.mxu0
        %4226 = vmatpush.bf16.msra.mxu0 %v2023
        %4227 = vmatpush.bf16.msra.mxu0 %v2015
        %4228 = vmatpush.bf16.msra.mxu0 %v2007
        %4229 = vmatpush.bf16.msra.mxu0 %v1999
        %4230 = vmatpush.bf16.msra.mxu0 %v1991
        %4231 = vmatpush.bf16.msra.mxu0 %v1983
        %4232 = vmatpush.bf16.msra.mxu0 %v1975
        %4233 = vmatpush.bf16.msra.mxu0 %v1967
        %4234 = vmatmul.bf16.gmra.mxu0 %v4099
        %v4235 = vpop.f32.mrf.mxu0
        %v4236 = vadd.f32 %v4110, %v4235
        %v4237 = vpop.f32.mrf.mxu0
        %4238 = vdwg.mxu0
        %4239 = vmatpush.bf16.msra.mxu0 %v2087
        %4240 = vmatpush.bf16.msra.mxu0 %v2079
        %4241 = vmatpush.bf16.msra.mxu0 %v2071
        %4242 = vmatpush.bf16.msra.mxu0 %v2063
        %4243 = vmatpush.bf16.msra.mxu0 %v2055
        %4244 = vmatpush.bf16.msra.mxu0 %v2047
        %4245 = vmatpush.bf16.msra.mxu0 %v2039
        %4246 = vmatpush.bf16.msra.mxu0 %v2031
        %4247 = vmatmul.bf16.gmra.mxu0 %v4100
        %v4248 = vpop.f32.mrf.mxu0
        %v4249 = vadd.f32 %v4236, %v4248
        %v4250 = vpop.f32.mrf.mxu0
        %4251 = vdwg.mxu0
        %4252 = vmatpush.bf16.msra.mxu0 %v2024
        %4253 = vmatpush.bf16.msra.mxu0 %v2016
        %4254 = vmatpush.bf16.msra.mxu0 %v2008
        %4255 = vmatpush.bf16.msra.mxu0 %v2000
        %4256 = vmatpush.bf16.msra.mxu0 %v1992
        %4257 = vmatpush.bf16.msra.mxu0 %v1984
        %4258 = vmatpush.bf16.msra.mxu0 %v1976
        %4259 = vmatpush.bf16.msra.mxu0 %v1968
        %4260 = vmatmul.bf16.gmra.mxu0 %v4099
        %v4261 = vpop.f32.mrf.mxu0
        %v4262 = vadd.f32 %v4111, %v4261
        %v4263 = vpop.f32.mrf.mxu0
        %4264 = vdwg.mxu0
        %4265 = vmatpush.bf16.msra.mxu0 %v2088
        %4266 = vmatpush.bf16.msra.mxu0 %v2080
        %4267 = vmatpush.bf16.msra.mxu0 %v2072
        %4268 = vmatpush.bf16.msra.mxu0 %v2064
        %4269 = vmatpush.bf16.msra.mxu0 %v2056
        %4270 = vmatpush.bf16.msra.mxu0 %v2048
        %4271 = vmatpush.bf16.msra.mxu0 %v2040
        %4272 = vmatpush.bf16.msra.mxu0 %v2032
        %4273 = vmatmul.bf16.gmra.mxu0 %v4100
        %v4274 = vpop.f32.mrf.mxu0
        %v4275 = vadd.f32 %v4262, %v4274
        %v4276 = vpop.f32.mrf.mxu0
        %4277 = vdwg.mxu0
        %4278 = vmatpush.bf16.msra.mxu0 %v2025
        %4279 = vmatpush.bf16.msra.mxu0 %v2017
        %4280 = vmatpush.bf16.msra.mxu0 %v2009
        %4281 = vmatpush.bf16.msra.mxu0 %v2001
        %4282 = vmatpush.bf16.msra.mxu0 %v1993
        %4283 = vmatpush.bf16.msra.mxu0 %v1985
        %4284 = vmatpush.bf16.msra.mxu0 %v1977
        %4285 = vmatpush.bf16.msra.mxu0 %v1969
        %4286 = vmatmul.bf16.gmra.mxu0 %v4099
        %v4287 = vpop.f32.mrf.mxu0
        %v4288 = vadd.f32 %v4112, %v4287
        %v4289 = vpop.f32.mrf.mxu0
        %4290 = vdwg.mxu0
        %4291 = vmatpush.bf16.msra.mxu0 %v2089
        %4292 = vmatpush.bf16.msra.mxu0 %v2081
        %4293 = vmatpush.bf16.msra.mxu0 %v2073
        %4294 = vmatpush.bf16.msra.mxu0 %v2065
        %4295 = vmatpush.bf16.msra.mxu0 %v2057
        %4296 = vmatpush.bf16.msra.mxu0 %v2049
        %4297 = vmatpush.bf16.msra.mxu0 %v2041
        %4298 = vmatpush.bf16.msra.mxu0 %v2033
        %4299 = vmatmul.bf16.gmra.mxu0 %v4100
        %v4300 = vpop.f32.mrf.mxu0
        %v4301 = vadd.f32 %v4288, %v4300
        %v4302 = vpop.f32.mrf.mxu0
        %4303 = vdwg.mxu0
        %4304 = vmatpush.bf16.msra.mxu0 %v2026
        %4305 = vmatpush.bf16.msra.mxu0 %v2018
        %4306 = vmatpush.bf16.msra.mxu0 %v2010
        %4307 = vmatpush.bf16.msra.mxu0 %v2002
        %4308 = vmatpush.bf16.msra.mxu0 %v1994
        %4309 = vmatpush.bf16.msra.mxu0 %v1986
        %4310 = vmatpush.bf16.msra.mxu0 %v1978
        %4311 = vmatpush.bf16.msra.mxu0 %v1970
        %4312 = vmatmul.bf16.gmra.mxu0 %v4099
        %v4313 = vpop.f32.mrf.mxu0
        %v4314 = vadd.f32 %v4113, %v4313
        %v4315 = vpop.f32.mrf.mxu0
        %4316 = vdwg.mxu0
        %4317 = vmatpush.bf16.msra.mxu0 %v2090
        %4318 = vmatpush.bf16.msra.mxu0 %v2082
        %4319 = vmatpush.bf16.msra.mxu0 %v2074
        %4320 = vmatpush.bf16.msra.mxu0 %v2066
        %4321 = vmatpush.bf16.msra.mxu0 %v2058
        %4322 = vmatpush.bf16.msra.mxu0 %v2050
        %4323 = vmatpush.bf16.msra.mxu0 %v2042
        %4324 = vmatpush.bf16.msra.mxu0 %v2034
        %4325 = vmatmul.bf16.gmra.mxu0 %v4100
        %v4326 = vpop.f32.mrf.mxu0
        %v4327 = vadd.f32 %v4314, %v4326
        %v4328 = vpop.f32.mrf.mxu0
        %4329 = vdwg.mxu0
        %v4330 = vadd.f32 %v4145, %v2445
        %v4331 = vadd.f32 %v4171, %v2446
        %v4332 = vadd.f32 %v4197, %v2447
        %v4333 = vadd.f32 %v4223, %v2448
        %v4334 = vadd.f32 %v4249, %v2449
        %v4335 = vadd.f32 %v4275, %v2450
        %v4336 = vadd.f32 %v4301, %v2451
        %v4337 = vadd.f32 %v4327, %v2452
        %v4338 = vxor.u32 %v4330, 2147483648
        %v4339 = vxor.u32 %v4331, 2147483648
        %v4340 = vxor.u32 %v4332, 2147483648
        %v4341 = vxor.u32 %v4333, 2147483648
        %v4342 = vxor.u32 %v4334, 2147483648
        %v4343 = vxor.u32 %v4335, 2147483648
        %v4344 = vmul.f32 %v4338, 1.442695
        %v4345 = vpow.pop %v4344
        %v4346 = vmul.f32 %v4339, 1.442695
        %v4347 = vpow.pop %v4346
        %v4348 = vmul.f32 %v4340, 1.442695
        %v4349 = vpow.pop %v4348
        %v4350 = vmul.f32 %v4341, 1.442695
        %v4351 = vpow.pop %v4350
        %v4352 = vmul.f32 %v4342, 1.442695
        %v4353 = vpow.pop %v4352
        %v4354 = vmul.f32 %v4343, 1.442695
        %v4355 = vpow.pop %v4354
        %v4356 = vadd.f32 %v4345, 1.0
        %v4357 = vadd.f32 %v4347, 1.0
        %v4358 = vadd.f32 %v4349, 1.0
        %v4359 = vadd.f32 %v4351, 1.0
        %v4360 = vadd.f32 %v4353, 1.0
        %v4361 = vadd.f32 %v4355, 1.0
        %v4362 = vrcp.pop %v4356
        %v4363 = vmul.f32 %v4356, %v4362
        %v4364 = vsub.f32 1.0, %v4363
        %v4365 = vmul.f32 %v4362, %v4364
        %v4366 = vadd.f32 %v4362, %v4365
        %vm4367 = vweird.f32 %v4356
        %vm4368 = vweird.f32 %v4362
        %vm4369 = vmor %vm4367, %vm4368
        %v4370 = vsel %vm4369, %v4362, %v4366
        %v4371 = vand.u32 2147483647, %v4356
        %vm4372 = vcmp.eq.f32.partialorder %v4371, 8.507059e+37
        %v4373 = vand.u32 %v4356, 2147483648
        %v4374 = vor.u32 1.1754944e-38, %v4373
        %v4375 = vsel %vm4372, %v4374, %v4370
        %v4376 = vmul.f32 1.0, %v4375
        %v4377 = vrcp.pop %v4357
        %v4378 = vmul.f32 %v4357, %v4377
        %v4379 = vsub.f32 1.0, %v4378
        %v4380 = vmul.f32 %v4377, %v4379
        %v4381 = vadd.f32 %v4377, %v4380
        %vm4382 = vweird.f32 %v4357
        %vm4383 = vweird.f32 %v4377
        %vm4384 = vmor %vm4382, %vm4383
        %v4385 = vsel %vm4384, %v4377, %v4381
        %v4386 = vand.u32 2147483647, %v4357
        %vm4387 = vcmp.eq.f32.partialorder %v4386, 8.507059e+37
        %v4388 = vand.u32 %v4357, 2147483648
        %v4389 = vor.u32 1.1754944e-38, %v4388
        %v4390 = vsel %vm4387, %v4389, %v4385
        %v4391 = vmul.f32 1.0, %v4390
        %v4392 = vrcp.pop %v4358
        %v4393 = vmul.f32 %v4358, %v4392
        %v4394 = vsub.f32 1.0, %v4393
        %v4395 = vmul.f32 %v4392, %v4394
        %v4396 = vadd.f32 %v4392, %v4395
        %vm4397 = vweird.f32 %v4358
        %vm4398 = vweird.f32 %v4392
        %vm4399 = vmor %vm4397, %vm4398
        %v4400 = vsel %vm4399, %v4392, %v4396
        %v4401 = vand.u32 2147483647, %v4358
        %vm4402 = vcmp.eq.f32.partialorder %v4401, 8.507059e+37
        %v4403 = vand.u32 %v4358, 2147483648
        %v4404 = vor.u32 1.1754944e-38, %v4403
        %v4405 = vsel %vm4402, %v4404, %v4400
        %v4406 = vmul.f32 1.0, %v4405
        %v4407 = vrcp.pop %v4359
        %v4408 = vmul.f32 %v4359, %v4407
        %v4409 = vsub.f32 1.0, %v4408
        %v4410 = vmul.f32 %v4407, %v4409
        %v4411 = vadd.f32 %v4407, %v4410
        %vm4412 = vweird.f32 %v4359
        %vm4413 = vweird.f32 %v4407
        %vm4414 = vmor %vm4412, %vm4413
        %v4415 = vsel %vm4414, %v4407, %v4411
        %v4416 = vand.u32 2147483647, %v4359
        %vm4417 = vcmp.eq.f32.partialorder %v4416, 8.507059e+37
        %v4418 = vand.u32 %v4359, 2147483648
        %v4419 = vor.u32 1.1754944e-38, %v4418
        %v4420 = vsel %vm4417, %v4419, %v4415
        %v4421 = vmul.f32 1.0, %v4420
        %v4422 = vrcp.pop %v4360
        %v4423 = vmul.f32 %v4360, %v4422
        %v4424 = vsub.f32 1.0, %v4423
        %v4425 = vmul.f32 %v4422, %v4424
        %v4426 = vadd.f32 %v4422, %v4425
        %vm4427 = vweird.f32 %v4360
        %vm4428 = vweird.f32 %v4422
        %vm4429 = vmor %vm4427, %vm4428
        %v4430 = vsel %vm4429, %v4422, %v4426
        %v4431 = vand.u32 2147483647, %v4360
        %vm4432 = vcmp.eq.f32.partialorder %v4431, 8.507059e+37
        %v4433 = vand.u32 %v4360, 2147483648
        %v4434 = vor.u32 1.1754944e-38, %v4433
        %v4435 = vsel %vm4432, %v4434, %v4430
        %v4436 = vmul.f32 1.0, %v4435
        %v4437 = vrcp.pop %v4361
        %v4438 = vmul.f32 %v4361, %v4437
        %v4439 = vsub.f32 1.0, %v4438
        %v4440 = vmul.f32 %v4437, %v4439
        %v4441 = vadd.f32 %v4437, %v4440
        %vm4442 = vweird.f32 %v4361
        %vm4443 = vweird.f32 %v4437
        %vm4444 = vmor %vm4442, %vm4443
        %v4445 = vsel %vm4444, %v4437, %v4441
        %v4446 = vand.u32 2147483647, %v4361
        %vm4447 = vcmp.eq.f32.partialorder %v4446, 8.507059e+37
        %v4448 = vand.u32 %v4361, 2147483648
        %v4449 = vor.u32 1.1754944e-38, %v4448
        %v4450 = vsel %vm4447, %v4449, %v4445
        %v4451 = vmul.f32 1.0, %v4450
        %v4452 = vtanh.pop %v4336
        %v4453 = vtanh.pop %v4337
        %v4454 = vmul.f32 %v4406, %v4085
        %v4455 = vmul.f32 %v4421, %v4086
        %v4456 = vmul.f32 %v4376, %v4452
        %v4457 = vmul.f32 %v4391, %v4453
        %v4458 = vadd.f32 %v4454, %v4456
        %v4459 = vadd.f32 %v4455, %v4457
        %v4460 = vtanh.pop %v4458
        %v4461 = vtanh.pop %v4459
        %v4462 = vmul.f32 %v4436, %v4460
        %v4463 = vmul.f32 %v4451, %v4461
        %v4466 = vrot.slane %v4463, 7
        %v4467 = vsel %vm2598, %v4462, %v4466
        %s4469 = scalar_lea.vmem [#allocation2], 5
        %4470 = vst.msk [vmem:[%s4469] ss:$8 sm:$0x3] %vm2604, %v4467
        %4471 = vst.msk [vmem:[%s4469] ss:$8 sm:$0x0] %vm2604, %v4467
        %v4472 = vpack.c.bf16 %v4462, %v4462
        %v4473 = vpack.c.bf16 %v4463, %v4463
        %s4474 = scalar_lea.vmem [#allocation3], 6
        %v4475 = vld [vmem:[%s4474] ss:$8 sm:$0xf]
        %v4476 = vld [vmem:[%s4474] ss:$8 sm:$0xf0]
        %v4477 = vor.u32 %v4475, %v4476
        %v4479 = vperm.slane %v4477, 0
        %v4480 = vperm.slane %v4477, 1
        %v4481 = vperm.slane %v4477, 2
        %v4482 = vperm.slane %v4477, 3
        %v4483 = vperm.slane %v4477, 4
        %v4484 = vperm.slane %v4477, 5
        %v4485 = vperm.slane %v4477, 6
        %v4486 = vperm.slane %v4477, 7
        %4495 = vmatpush.bf16.msra.mxu0 %v2019
        %4496 = vmatpush.bf16.msra.mxu0 %v2011
        %4497 = vmatpush.bf16.msra.mxu0 %v2003
        %4498 = vmatpush.bf16.msra.mxu0 %v1995
        %4499 = vmatpush.bf16.msra.mxu0 %v1987
        %4500 = vmatpush.bf16.msra.mxu0 %v1979
        %4501 = vmatpush.bf16.msra.mxu0 %v1971
        %4502 = vmatpush.bf16.msra.mxu0 %v1963
        %4503 = vmatmul.bf16.gmra.mxu0 %v4472
        %v4504 = vpop.f32.mrf.mxu0
        %v4505 = vadd.f32 %v4479, %v4504
        %v4506 = vpop.f32.mrf.mxu0
        %4507 = vdwg.mxu0
        %4508 = vmatpush.bf16.msra.mxu0 %v2083
        %4509 = vmatpush.bf16.msra.mxu0 %v2075
        %4510 = vmatpush.bf16.msra.mxu0 %v2067
        %4511 = vmatpush.bf16.msra.mxu0 %v2059
        %4512 = vmatpush.bf16.msra.mxu0 %v2051
        %4513 = vmatpush.bf16.msra.mxu0 %v2043
        %4514 = vmatpush.bf16.msra.mxu0 %v2035
        %4515 = vmatpush.bf16.msra.mxu0 %v2027
        %4516 = vmatmul.bf16.gmra.mxu0 %v4473
        %v4517 = vpop.f32.mrf.mxu0
        %v4518 = vadd.f32 %v4505, %v4517
        %v4519 = vpop.f32.mrf.mxu0
        %4520 = vdwg.mxu0
        %4521 = vmatpush.bf16.msra.mxu0 %v2020
        %4522 = vmatpush.bf16.msra.mxu0 %v2012
        %4523 = vmatpush.bf16.msra.mxu0 %v2004
        %4524 = vmatpush.bf16.msra.mxu0 %v1996
        %4525 = vmatpush.bf16.msra.mxu0 %v1988
        %4526 = vmatpush.bf16.msra.mxu0 %v1980
        %4527 = vmatpush.bf16.msra.mxu0 %v1972
        %4528 = vmatpush.bf16.msra.mxu0 %v1964
        %4529 = vmatmul.bf16.gmra.mxu0 %v4472
        %v4530 = vpop.f32.mrf.mxu0
        %v4531 = vadd.f32 %v4480, %v4530
        %v4532 = vpop.f32.mrf.mxu0
        %4533 = vdwg.mxu0
        %4534 = vmatpush.bf16.msra.mxu0 %v2084
        %4535 = vmatpush.bf16.msra.mxu0 %v2076
        %4536 = vmatpush.bf16.msra.mxu0 %v2068
        %4537 = vmatpush.bf16.msra.mxu0 %v2060
        %4538 = vmatpush.bf16.msra.mxu0 %v2052
        %4539 = vmatpush.bf16.msra.mxu0 %v2044
        %4540 = vmatpush.bf16.msra.mxu0 %v2036
        %4541 = vmatpush.bf16.msra.mxu0 %v2028
        %4542 = vmatmul.bf16.gmra.mxu0 %v4473
        %v4543 = vpop.f32.mrf.mxu0
        %v4544 = vadd.f32 %v4531, %v4543
        %v4545 = vpop.f32.mrf.mxu0
        %4546 = vdwg.mxu0
        %4547 = vmatpush.bf16.msra.mxu0 %v2021
        %4548 = vmatpush.bf16.msra.mxu0 %v2013
        %4549 = vmatpush.bf16.msra.mxu0 %v2005
        %4550 = vmatpush.bf16.msra.mxu0 %v1997
        %4551 = vmatpush.bf16.msra.mxu0 %v1989
        %4552 = vmatpush.bf16.msra.mxu0 %v1981
        %4553 = vmatpush.bf16.msra.mxu0 %v1973
        %4554 = vmatpush.bf16.msra.mxu0 %v1965
        %4555 = vmatmul.bf16.gmra.mxu0 %v4472
        %v4556 = vpop.f32.mrf.mxu0
        %v4557 = vadd.f32 %v4481, %v4556
        %v4558 = vpop.f32.mrf.mxu0
        %4559 = vdwg.mxu0
        %4560 = vmatpush.bf16.msra.mxu0 %v2085
        %4561 = vmatpush.bf16.msra.mxu0 %v2077
        %4562 = vmatpush.bf16.msra.mxu0 %v2069
        %4563 = vmatpush.bf16.msra.mxu0 %v2061
        %4564 = vmatpush.bf16.msra.mxu0 %v2053
        %4565 = vmatpush.bf16.msra.mxu0 %v2045
        %4566 = vmatpush.bf16.msra.mxu0 %v2037
        %4567 = vmatpush.bf16.msra.mxu0 %v2029
        %4568 = vmatmul.bf16.gmra.mxu0 %v4473
        %v4569 = vpop.f32.mrf.mxu0
        %v4570 = vadd.f32 %v4557, %v4569
        %v4571 = vpop.f32.mrf.mxu0
        %4572 = vdwg.mxu0
        %4573 = vmatpush.bf16.msra.mxu0 %v2022
        %4574 = vmatpush.bf16.msra.mxu0 %v2014
        %4575 = vmatpush.bf16.msra.mxu0 %v2006
        %4576 = vmatpush.bf16.msra.mxu0 %v1998
        %4577 = vmatpush.bf16.msra.mxu0 %v1990
        %4578 = vmatpush.bf16.msra.mxu0 %v1982
        %4579 = vmatpush.bf16.msra.mxu0 %v1974
        %4580 = vmatpush.bf16.msra.mxu0 %v1966
        %4581 = vmatmul.bf16.gmra.mxu0 %v4472
        %v4582 = vpop.f32.mrf.mxu0
        %v4583 = vadd.f32 %v4482, %v4582
        %v4584 = vpop.f32.mrf.mxu0
        %4585 = vdwg.mxu0
        %4586 = vmatpush.bf16.msra.mxu0 %v2086
        %4587 = vmatpush.bf16.msra.mxu0 %v2078
        %4588 = vmatpush.bf16.msra.mxu0 %v2070
        %4589 = vmatpush.bf16.msra.mxu0 %v2062
        %4590 = vmatpush.bf16.msra.mxu0 %v2054
        %4591 = vmatpush.bf16.msra.mxu0 %v2046
        %4592 = vmatpush.bf16.msra.mxu0 %v2038
        %4593 = vmatpush.bf16.msra.mxu0 %v2030
        %4594 = vmatmul.bf16.gmra.mxu0 %v4473
        %v4595 = vpop.f32.mrf.mxu0
        %v4596 = vadd.f32 %v4583, %v4595
        %v4597 = vpop.f32.mrf.mxu0
        %4598 = vdwg.mxu0
        %4599 = vmatpush.bf16.msra.mxu0 %v2023
        %4600 = vmatpush.bf16.msra.mxu0 %v2015
        %4601 = vmatpush.bf16.msra.mxu0 %v2007
        %4602 = vmatpush.bf16.msra.mxu0 %v1999
        %4603 = vmatpush.bf16.msra.mxu0 %v1991
        %4604 = vmatpush.bf16.msra.mxu0 %v1983
        %4605 = vmatpush.bf16.msra.mxu0 %v1975
        %4606 = vmatpush.bf16.msra.mxu0 %v1967
        %4607 = vmatmul.bf16.gmra.mxu0 %v4472
        %v4608 = vpop.f32.mrf.mxu0
        %v4609 = vadd.f32 %v4483, %v4608
        %v4610 = vpop.f32.mrf.mxu0
        %4611 = vdwg.mxu0
        %4612 = vmatpush.bf16.msra.mxu0 %v2087
        %4613 = vmatpush.bf16.msra.mxu0 %v2079
        %4614 = vmatpush.bf16.msra.mxu0 %v2071
        %4615 = vmatpush.bf16.msra.mxu0 %v2063
        %4616 = vmatpush.bf16.msra.mxu0 %v2055
        %4617 = vmatpush.bf16.msra.mxu0 %v2047
        %4618 = vmatpush.bf16.msra.mxu0 %v2039
        %4619 = vmatpush.bf16.msra.mxu0 %v2031
        %4620 = vmatmul.bf16.gmra.mxu0 %v4473
        %v4621 = vpop.f32.mrf.mxu0
        %v4622 = vadd.f32 %v4609, %v4621
        %v4623 = vpop.f32.mrf.mxu0
        %4624 = vdwg.mxu0
        %4625 = vmatpush.bf16.msra.mxu0 %v2024
        %4626 = vmatpush.bf16.msra.mxu0 %v2016
        %4627 = vmatpush.bf16.msra.mxu0 %v2008
        %4628 = vmatpush.bf16.msra.mxu0 %v2000
        %4629 = vmatpush.bf16.msra.mxu0 %v1992
        %4630 = vmatpush.bf16.msra.mxu0 %v1984
        %4631 = vmatpush.bf16.msra.mxu0 %v1976
        %4632 = vmatpush.bf16.msra.mxu0 %v1968
        %4633 = vmatmul.bf16.gmra.mxu0 %v4472
        %v4634 = vpop.f32.mrf.mxu0
        %v4635 = vadd.f32 %v4484, %v4634
        %v4636 = vpop.f32.mrf.mxu0
        %4637 = vdwg.mxu0
        %4638 = vmatpush.bf16.msra.mxu0 %v2088
        %4639 = vmatpush.bf16.msra.mxu0 %v2080
        %4640 = vmatpush.bf16.msra.mxu0 %v2072
        %4641 = vmatpush.bf16.msra.mxu0 %v2064
        %4642 = vmatpush.bf16.msra.mxu0 %v2056
        %4643 = vmatpush.bf16.msra.mxu0 %v2048
        %4644 = vmatpush.bf16.msra.mxu0 %v2040
        %4645 = vmatpush.bf16.msra.mxu0 %v2032
        %4646 = vmatmul.bf16.gmra.mxu0 %v4473
        %v4647 = vpop.f32.mrf.mxu0
        %v4648 = vadd.f32 %v4635, %v4647
        %v4649 = vpop.f32.mrf.mxu0
        %4650 = vdwg.mxu0
        %4651 = vmatpush.bf16.msra.mxu0 %v2025
        %4652 = vmatpush.bf16.msra.mxu0 %v2017
        %4653 = vmatpush.bf16.msra.mxu0 %v2009
        %4654 = vmatpush.bf16.msra.mxu0 %v2001
        %4655 = vmatpush.bf16.msra.mxu0 %v1993
        %4656 = vmatpush.bf16.msra.mxu0 %v1985
        %4657 = vmatpush.bf16.msra.mxu0 %v1977
        %4658 = vmatpush.bf16.msra.mxu0 %v1969
        %4659 = vmatmul.bf16.gmra.mxu0 %v4472
        %v4660 = vpop.f32.mrf.mxu0
        %v4661 = vadd.f32 %v4485, %v4660
        %v4662 = vpop.f32.mrf.mxu0
        %4663 = vdwg.mxu0
        %4664 = vmatpush.bf16.msra.mxu0 %v2089
        %4665 = vmatpush.bf16.msra.mxu0 %v2081
        %4666 = vmatpush.bf16.msra.mxu0 %v2073
        %4667 = vmatpush.bf16.msra.mxu0 %v2065
        %4668 = vmatpush.bf16.msra.mxu0 %v2057
        %4669 = vmatpush.bf16.msra.mxu0 %v2049
        %4670 = vmatpush.bf16.msra.mxu0 %v2041
        %4671 = vmatpush.bf16.msra.mxu0 %v2033
        %4672 = vmatmul.bf16.gmra.mxu0 %v4473
        %v4673 = vpop.f32.mrf.mxu0
        %v4674 = vadd.f32 %v4661, %v4673
        %v4675 = vpop.f32.mrf.mxu0
        %4676 = vdwg.mxu0
        %4677 = vmatpush.bf16.msra.mxu0 %v2026
        %4678 = vmatpush.bf16.msra.mxu0 %v2018
        %4679 = vmatpush.bf16.msra.mxu0 %v2010
        %4680 = vmatpush.bf16.msra.mxu0 %v2002
        %4681 = vmatpush.bf16.msra.mxu0 %v1994
        %4682 = vmatpush.bf16.msra.mxu0 %v1986
        %4683 = vmatpush.bf16.msra.mxu0 %v1978
        %4684 = vmatpush.bf16.msra.mxu0 %v1970
        %4685 = vmatmul.bf16.gmra.mxu0 %v4472
        %v4686 = vpop.f32.mrf.mxu0
        %v4687 = vadd.f32 %v4486, %v4686
        %v4688 = vpop.f32.mrf.mxu0
        %4689 = vdwg.mxu0
        %4690 = vmatpush.bf16.msra.mxu0 %v2090
        %4691 = vmatpush.bf16.msra.mxu0 %v2082
        %4692 = vmatpush.bf16.msra.mxu0 %v2074
        %4693 = vmatpush.bf16.msra.mxu0 %v2066
        %4694 = vmatpush.bf16.msra.mxu0 %v2058
        %4695 = vmatpush.bf16.msra.mxu0 %v2050
        %4696 = vmatpush.bf16.msra.mxu0 %v2042
        %4697 = vmatpush.bf16.msra.mxu0 %v2034
        %4698 = vmatmul.bf16.gmra.mxu0 %v4473
        %v4699 = vpop.f32.mrf.mxu0
        %v4700 = vadd.f32 %v4687, %v4699
        %v4701 = vpop.f32.mrf.mxu0
        %4702 = vdwg.mxu0
        %v4703 = vadd.f32 %v4518, %v2445
        %v4704 = vadd.f32 %v4544, %v2446
        %v4705 = vadd.f32 %v4570, %v2447
        %v4706 = vadd.f32 %v4596, %v2448
        %v4707 = vadd.f32 %v4622, %v2449
        %v4708 = vadd.f32 %v4648, %v2450
        %v4709 = vadd.f32 %v4674, %v2451
        %v4710 = vadd.f32 %v4700, %v2452
        %v4711 = vxor.u32 %v4703, 2147483648
        %v4712 = vxor.u32 %v4704, 2147483648
        %v4713 = vxor.u32 %v4705, 2147483648
        %v4714 = vxor.u32 %v4706, 2147483648
        %v4715 = vxor.u32 %v4707, 2147483648
        %v4716 = vxor.u32 %v4708, 2147483648
        %v4717 = vmul.f32 %v4711, 1.442695
        %v4718 = vpow.pop %v4717
        %v4719 = vmul.f32 %v4712, 1.442695
        %v4720 = vpow.pop %v4719
        %v4721 = vmul.f32 %v4713, 1.442695
        %v4722 = vpow.pop %v4721
        %v4723 = vmul.f32 %v4714, 1.442695
        %v4724 = vpow.pop %v4723
        %v4725 = vmul.f32 %v4715, 1.442695
        %v4726 = vpow.pop %v4725
        %v4727 = vmul.f32 %v4716, 1.442695
        %v4728 = vpow.pop %v4727
        %v4729 = vadd.f32 %v4718, 1.0
        %v4730 = vadd.f32 %v4720, 1.0
        %v4731 = vadd.f32 %v4722, 1.0
        %v4732 = vadd.f32 %v4724, 1.0
        %v4733 = vadd.f32 %v4726, 1.0
        %v4734 = vadd.f32 %v4728, 1.0
        %v4735 = vrcp.pop %v4729
        %v4736 = vmul.f32 %v4729, %v4735
        %v4737 = vsub.f32 1.0, %v4736
        %v4738 = vmul.f32 %v4735, %v4737
        %v4739 = vadd.f32 %v4735, %v4738
        %vm4740 = vweird.f32 %v4729
        %vm4741 = vweird.f32 %v4735
        %vm4742 = vmor %vm4740, %vm4741
        %v4743 = vsel %vm4742, %v4735, %v4739
        %v4744 = vand.u32 2147483647, %v4729
        %vm4745 = vcmp.eq.f32.partialorder %v4744, 8.507059e+37
        %v4746 = vand.u32 %v4729, 2147483648
        %v4747 = vor.u32 1.1754944e-38, %v4746
        %v4748 = vsel %vm4745, %v4747, %v4743
        %v4749 = vmul.f32 1.0, %v4748
        %v4750 = vrcp.pop %v4730
        %v4751 = vmul.f32 %v4730, %v4750
        %v4752 = vsub.f32 1.0, %v4751
        %v4753 = vmul.f32 %v4750, %v4752
        %v4754 = vadd.f32 %v4750, %v4753
        %vm4755 = vweird.f32 %v4730
        %vm4756 = vweird.f32 %v4750
        %vm4757 = vmor %vm4755, %vm4756
        %v4758 = vsel %vm4757, %v4750, %v4754
        %v4759 = vand.u32 2147483647, %v4730
        %vm4760 = vcmp.eq.f32.partialorder %v4759, 8.507059e+37
        %v4761 = vand.u32 %v4730, 2147483648
        %v4762 = vor.u32 1.1754944e-38, %v4761
        %v4763 = vsel %vm4760, %v4762, %v4758
        %v4764 = vmul.f32 1.0, %v4763
        %v4765 = vrcp.pop %v4731
        %v4766 = vmul.f32 %v4731, %v4765
        %v4767 = vsub.f32 1.0, %v4766
        %v4768 = vmul.f32 %v4765, %v4767
        %v4769 = vadd.f32 %v4765, %v4768
        %vm4770 = vweird.f32 %v4731
        %vm4771 = vweird.f32 %v4765
        %vm4772 = vmor %vm4770, %vm4771
        %v4773 = vsel %vm4772, %v4765, %v4769
        %v4774 = vand.u32 2147483647, %v4731
        %vm4775 = vcmp.eq.f32.partialorder %v4774, 8.507059e+37
        %v4776 = vand.u32 %v4731, 2147483648
        %v4777 = vor.u32 1.1754944e-38, %v4776
        %v4778 = vsel %vm4775, %v4777, %v4773
        %v4779 = vmul.f32 1.0, %v4778
        %v4780 = vrcp.pop %v4732
        %v4781 = vmul.f32 %v4732, %v4780
        %v4782 = vsub.f32 1.0, %v4781
        %v4783 = vmul.f32 %v4780, %v4782
        %v4784 = vadd.f32 %v4780, %v4783
        %vm4785 = vweird.f32 %v4732
        %vm4786 = vweird.f32 %v4780
        %vm4787 = vmor %vm4785, %vm4786
        %v4788 = vsel %vm4787, %v4780, %v4784
        %v4789 = vand.u32 2147483647, %v4732
        %vm4790 = vcmp.eq.f32.partialorder %v4789, 8.507059e+37
        %v4791 = vand.u32 %v4732, 2147483648
        %v4792 = vor.u32 1.1754944e-38, %v4791
        %v4793 = vsel %vm4790, %v4792, %v4788
        %v4794 = vmul.f32 1.0, %v4793
        %v4795 = vrcp.pop %v4733
        %v4796 = vmul.f32 %v4733, %v4795
        %v4797 = vsub.f32 1.0, %v4796
        %v4798 = vmul.f32 %v4795, %v4797
        %v4799 = vadd.f32 %v4795, %v4798
        %vm4800 = vweird.f32 %v4733
        %vm4801 = vweird.f32 %v4795
        %vm4802 = vmor %vm4800, %vm4801
        %v4803 = vsel %vm4802, %v4795, %v4799
        %v4804 = vand.u32 2147483647, %v4733
        %vm4805 = vcmp.eq.f32.partialorder %v4804, 8.507059e+37
        %v4806 = vand.u32 %v4733, 2147483648
        %v4807 = vor.u32 1.1754944e-38, %v4806
        %v4808 = vsel %vm4805, %v4807, %v4803
        %v4809 = vmul.f32 1.0, %v4808
        %v4810 = vrcp.pop %v4734
        %v4811 = vmul.f32 %v4734, %v4810
        %v4812 = vsub.f32 1.0, %v4811
        %v4813 = vmul.f32 %v4810, %v4812
        %v4814 = vadd.f32 %v4810, %v4813
        %vm4815 = vweird.f32 %v4734
        %vm4816 = vweird.f32 %v4810
        %vm4817 = vmor %vm4815, %vm4816
        %v4818 = vsel %vm4817, %v4810, %v4814
        %v4819 = vand.u32 2147483647, %v4734
        %vm4820 = vcmp.eq.f32.partialorder %v4819, 8.507059e+37
        %v4821 = vand.u32 %v4734, 2147483648
        %v4822 = vor.u32 1.1754944e-38, %v4821
        %v4823 = vsel %vm4820, %v4822, %v4818
        %v4824 = vmul.f32 1.0, %v4823
        %v4825 = vtanh.pop %v4709
        %v4826 = vtanh.pop %v4710
        %v4827 = vmul.f32 %v4779, %v4458
        %v4828 = vmul.f32 %v4794, %v4459
        %v4829 = vmul.f32 %v4749, %v4825
        %v4830 = vmul.f32 %v4764, %v4826
        %v4831 = vadd.f32 %v4827, %v4829
        %v4832 = vadd.f32 %v4828, %v4830
        %v4833 = vtanh.pop %v4831
        %v4834 = vtanh.pop %v4832
        %v4835 = vmul.f32 %v4809, %v4833
        %v4836 = vmul.f32 %v4824, %v4834
        %v4839 = vrot.slane %v4836, 7
        %v4840 = vsel %vm2598, %v4835, %v4839
        %s4842 = scalar_lea.vmem [#allocation2], 6
        %4843 = vst.msk [vmem:[%s4842] ss:$8 sm:$0x3] %vm2604, %v4840
        %4844 = vst.msk [vmem:[%s4842] ss:$8 sm:$0x0] %vm2604, %v4840
        %v4845 = vpack.c.bf16 %v4835, %v4835
        %v4846 = vpack.c.bf16 %v4836, %v4836
        %s4847 = scalar_lea.vmem [#allocation3], 7
        %v4848 = vld [vmem:[%s4847] ss:$8 sm:$0xf]
        %v4849 = vld [vmem:[%s4847] ss:$8 sm:$0xf0]
        %v4850 = vor.u32 %v4848, %v4849
        %v4852 = vperm.slane %v4850, 0
        %v4853 = vperm.slane %v4850, 1
        %v4854 = vperm.slane %v4850, 2
        %v4855 = vperm.slane %v4850, 3
        %v4856 = vperm.slane %v4850, 4
        %v4857 = vperm.slane %v4850, 5
        %v4858 = vperm.slane %v4850, 6
        %v4859 = vperm.slane %v4850, 7
        %4868 = vmatpush.bf16.msra.mxu0 %v2019
        %4869 = vmatpush.bf16.msra.mxu0 %v2011
        %4870 = vmatpush.bf16.msra.mxu0 %v2003
        %4871 = vmatpush.bf16.msra.mxu0 %v1995
        %4872 = vmatpush.bf16.msra.mxu0 %v1987
        %4873 = vmatpush.bf16.msra.mxu0 %v1979
        %4874 = vmatpush.bf16.msra.mxu0 %v1971
        %4875 = vmatpush.bf16.msra.mxu0 %v1963
        %4876 = vmatmul.bf16.gmra.mxu0 %v4845
        %v4877 = vpop.f32.mrf.mxu0
        %v4878 = vadd.f32 %v4852, %v4877
        %v4879 = vpop.f32.mrf.mxu0
        %4880 = vdwg.mxu0
        %4881 = vmatpush.bf16.msra.mxu0 %v2083
        %4882 = vmatpush.bf16.msra.mxu0 %v2075
        %4883 = vmatpush.bf16.msra.mxu0 %v2067
        %4884 = vmatpush.bf16.msra.mxu0 %v2059
        %4885 = vmatpush.bf16.msra.mxu0 %v2051
        %4886 = vmatpush.bf16.msra.mxu0 %v2043
        %4887 = vmatpush.bf16.msra.mxu0 %v2035
        %4888 = vmatpush.bf16.msra.mxu0 %v2027
        %4889 = vmatmul.bf16.gmra.mxu0 %v4846
        %v4890 = vpop.f32.mrf.mxu0
        %v4891 = vadd.f32 %v4878, %v4890
        %v4892 = vpop.f32.mrf.mxu0
        %4893 = vdwg.mxu0
        %4894 = vmatpush.bf16.msra.mxu0 %v2020
        %4895 = vmatpush.bf16.msra.mxu0 %v2012
        %4896 = vmatpush.bf16.msra.mxu0 %v2004
        %4897 = vmatpush.bf16.msra.mxu0 %v1996
        %4898 = vmatpush.bf16.msra.mxu0 %v1988
        %4899 = vmatpush.bf16.msra.mxu0 %v1980
        %4900 = vmatpush.bf16.msra.mxu0 %v1972
        %4901 = vmatpush.bf16.msra.mxu0 %v1964
        %4902 = vmatmul.bf16.gmra.mxu0 %v4845
        %v4903 = vpop.f32.mrf.mxu0
        %v4904 = vadd.f32 %v4853, %v4903
        %v4905 = vpop.f32.mrf.mxu0
        %4906 = vdwg.mxu0
        %4907 = vmatpush.bf16.msra.mxu0 %v2084
        %4908 = vmatpush.bf16.msra.mxu0 %v2076
        %4909 = vmatpush.bf16.msra.mxu0 %v2068
        %4910 = vmatpush.bf16.msra.mxu0 %v2060
        %4911 = vmatpush.bf16.msra.mxu0 %v2052
        %4912 = vmatpush.bf16.msra.mxu0 %v2044
        %4913 = vmatpush.bf16.msra.mxu0 %v2036
        %4914 = vmatpush.bf16.msra.mxu0 %v2028
        %4915 = vmatmul.bf16.gmra.mxu0 %v4846
        %v4916 = vpop.f32.mrf.mxu0
        %v4917 = vadd.f32 %v4904, %v4916
        %v4918 = vpop.f32.mrf.mxu0
        %4919 = vdwg.mxu0
        %4920 = vmatpush.bf16.msra.mxu0 %v2021
        %4921 = vmatpush.bf16.msra.mxu0 %v2013
        %4922 = vmatpush.bf16.msra.mxu0 %v2005
        %4923 = vmatpush.bf16.msra.mxu0 %v1997
        %4924 = vmatpush.bf16.msra.mxu0 %v1989
        %4925 = vmatpush.bf16.msra.mxu0 %v1981
        %4926 = vmatpush.bf16.msra.mxu0 %v1973
        %4927 = vmatpush.bf16.msra.mxu0 %v1965
        %4928 = vmatmul.bf16.gmra.mxu0 %v4845
        %v4929 = vpop.f32.mrf.mxu0
        %v4930 = vadd.f32 %v4854, %v4929
        %v4931 = vpop.f32.mrf.mxu0
        %4932 = vdwg.mxu0
        %4933 = vmatpush.bf16.msra.mxu0 %v2085
        %4934 = vmatpush.bf16.msra.mxu0 %v2077
        %4935 = vmatpush.bf16.msra.mxu0 %v2069
        %4936 = vmatpush.bf16.msra.mxu0 %v2061
        %4937 = vmatpush.bf16.msra.mxu0 %v2053
        %4938 = vmatpush.bf16.msra.mxu0 %v2045
        %4939 = vmatpush.bf16.msra.mxu0 %v2037
        %4940 = vmatpush.bf16.msra.mxu0 %v2029
        %4941 = vmatmul.bf16.gmra.mxu0 %v4846
        %v4942 = vpop.f32.mrf.mxu0
        %v4943 = vadd.f32 %v4930, %v4942
        %v4944 = vpop.f32.mrf.mxu0
        %4945 = vdwg.mxu0
        %4946 = vmatpush.bf16.msra.mxu0 %v2022
        %4947 = vmatpush.bf16.msra.mxu0 %v2014
        %4948 = vmatpush.bf16.msra.mxu0 %v2006
        %4949 = vmatpush.bf16.msra.mxu0 %v1998
        %4950 = vmatpush.bf16.msra.mxu0 %v1990
        %4951 = vmatpush.bf16.msra.mxu0 %v1982
        %4952 = vmatpush.bf16.msra.mxu0 %v1974
        %4953 = vmatpush.bf16.msra.mxu0 %v1966
        %4954 = vmatmul.bf16.gmra.mxu0 %v4845
        %v4955 = vpop.f32.mrf.mxu0
        %v4956 = vadd.f32 %v4855, %v4955
        %v4957 = vpop.f32.mrf.mxu0
        %4958 = vdwg.mxu0
        %4959 = vmatpush.bf16.msra.mxu0 %v2086
        %4960 = vmatpush.bf16.msra.mxu0 %v2078
        %4961 = vmatpush.bf16.msra.mxu0 %v2070
        %4962 = vmatpush.bf16.msra.mxu0 %v2062
        %4963 = vmatpush.bf16.msra.mxu0 %v2054
        %4964 = vmatpush.bf16.msra.mxu0 %v2046
        %4965 = vmatpush.bf16.msra.mxu0 %v2038
        %4966 = vmatpush.bf16.msra.mxu0 %v2030
        %4967 = vmatmul.bf16.gmra.mxu0 %v4846
        %v4968 = vpop.f32.mrf.mxu0
        %v4969 = vadd.f32 %v4956, %v4968
        %v4970 = vpop.f32.mrf.mxu0
        %4971 = vdwg.mxu0
        %4972 = vmatpush.bf16.msra.mxu0 %v2023
        %4973 = vmatpush.bf16.msra.mxu0 %v2015
        %4974 = vmatpush.bf16.msra.mxu0 %v2007
        %4975 = vmatpush.bf16.msra.mxu0 %v1999
        %4976 = vmatpush.bf16.msra.mxu0 %v1991
        %4977 = vmatpush.bf16.msra.mxu0 %v1983
        %4978 = vmatpush.bf16.msra.mxu0 %v1975
        %4979 = vmatpush.bf16.msra.mxu0 %v1967
        %4980 = vmatmul.bf16.gmra.mxu0 %v4845
        %v4981 = vpop.f32.mrf.mxu0
        %v4982 = vadd.f32 %v4856, %v4981
        %v4983 = vpop.f32.mrf.mxu0
        %4984 = vdwg.mxu0
        %4985 = vmatpush.bf16.msra.mxu0 %v2087
        %4986 = vmatpush.bf16.msra.mxu0 %v2079
        %4987 = vmatpush.bf16.msra.mxu0 %v2071
        %4988 = vmatpush.bf16.msra.mxu0 %v2063
        %4989 = vmatpush.bf16.msra.mxu0 %v2055
        %4990 = vmatpush.bf16.msra.mxu0 %v2047
        %4991 = vmatpush.bf16.msra.mxu0 %v2039
        %4992 = vmatpush.bf16.msra.mxu0 %v2031
        %4993 = vmatmul.bf16.gmra.mxu0 %v4846
        %v4994 = vpop.f32.mrf.mxu0
        %v4995 = vadd.f32 %v4982, %v4994
        %v4996 = vpop.f32.mrf.mxu0
        %4997 = vdwg.mxu0
        %4998 = vmatpush.bf16.msra.mxu0 %v2024
        %4999 = vmatpush.bf16.msra.mxu0 %v2016
        %5000 = vmatpush.bf16.msra.mxu0 %v2008
        %5001 = vmatpush.bf16.msra.mxu0 %v2000
        %5002 = vmatpush.bf16.msra.mxu0 %v1992
        %5003 = vmatpush.bf16.msra.mxu0 %v1984
        %5004 = vmatpush.bf16.msra.mxu0 %v1976
        %5005 = vmatpush.bf16.msra.mxu0 %v1968
        %5006 = vmatmul.bf16.gmra.mxu0 %v4845
        %v5007 = vpop.f32.mrf.mxu0
        %v5008 = vadd.f32 %v4857, %v5007
        %v5009 = vpop.f32.mrf.mxu0
        %5010 = vdwg.mxu0
        %5011 = vmatpush.bf16.msra.mxu0 %v2088
        %5012 = vmatpush.bf16.msra.mxu0 %v2080
        %5013 = vmatpush.bf16.msra.mxu0 %v2072
        %5014 = vmatpush.bf16.msra.mxu0 %v2064
        %5015 = vmatpush.bf16.msra.mxu0 %v2056
        %5016 = vmatpush.bf16.msra.mxu0 %v2048
        %5017 = vmatpush.bf16.msra.mxu0 %v2040
        %5018 = vmatpush.bf16.msra.mxu0 %v2032
        %5019 = vmatmul.bf16.gmra.mxu0 %v4846
        %v5020 = vpop.f32.mrf.mxu0
        %v5021 = vadd.f32 %v5008, %v5020
        %v5022 = vpop.f32.mrf.mxu0
        %5023 = vdwg.mxu0
        %5024 = vmatpush.bf16.msra.mxu0 %v2025
        %5025 = vmatpush.bf16.msra.mxu0 %v2017
        %5026 = vmatpush.bf16.msra.mxu0 %v2009
        %5027 = vmatpush.bf16.msra.mxu0 %v2001
        %5028 = vmatpush.bf16.msra.mxu0 %v1993
        %5029 = vmatpush.bf16.msra.mxu0 %v1985
        %5030 = vmatpush.bf16.msra.mxu0 %v1977
        %5031 = vmatpush.bf16.msra.mxu0 %v1969
        %5032 = vmatmul.bf16.gmra.mxu0 %v4845
        %v5033 = vpop.f32.mrf.mxu0
        %v5034 = vadd.f32 %v4858, %v5033
        %v5035 = vpop.f32.mrf.mxu0
        %5036 = vdwg.mxu0
        %5037 = vmatpush.bf16.msra.mxu0 %v2089
        %5038 = vmatpush.bf16.msra.mxu0 %v2081
        %5039 = vmatpush.bf16.msra.mxu0 %v2073
        %5040 = vmatpush.bf16.msra.mxu0 %v2065
        %5041 = vmatpush.bf16.msra.mxu0 %v2057
        %5042 = vmatpush.bf16.msra.mxu0 %v2049
        %5043 = vmatpush.bf16.msra.mxu0 %v2041
        %5044 = vmatpush.bf16.msra.mxu0 %v2033
        %5045 = vmatmul.bf16.gmra.mxu0 %v4846
        %v5046 = vpop.f32.mrf.mxu0
        %v5047 = vadd.f32 %v5034, %v5046
        %v5048 = vpop.f32.mrf.mxu0
        %5049 = vdwg.mxu0
        %5050 = vmatpush.bf16.msra.mxu0 %v2026
        %5051 = vmatpush.bf16.msra.mxu0 %v2018
        %5052 = vmatpush.bf16.msra.mxu0 %v2010
        %5053 = vmatpush.bf16.msra.mxu0 %v2002
        %5054 = vmatpush.bf16.msra.mxu0 %v1994
        %5055 = vmatpush.bf16.msra.mxu0 %v1986
        %5056 = vmatpush.bf16.msra.mxu0 %v1978
        %5057 = vmatpush.bf16.msra.mxu0 %v1970
        %5058 = vmatmul.bf16.gmra.mxu0 %v4845
        %v5059 = vpop.f32.mrf.mxu0
        %v5060 = vadd.f32 %v4859, %v5059
        %v5061 = vpop.f32.mrf.mxu0
        %5062 = vdwg.mxu0
        %5063 = vmatpush.bf16.msra.mxu0 %v2090
        %5064 = vmatpush.bf16.msra.mxu0 %v2082
        %5065 = vmatpush.bf16.msra.mxu0 %v2074
        %5066 = vmatpush.bf16.msra.mxu0 %v2066
        %5067 = vmatpush.bf16.msra.mxu0 %v2058
        %5068 = vmatpush.bf16.msra.mxu0 %v2050
        %5069 = vmatpush.bf16.msra.mxu0 %v2042
        %5070 = vmatpush.bf16.msra.mxu0 %v2034
        %5071 = vmatmul.bf16.gmra.mxu0 %v4846
        %v5072 = vpop.f32.mrf.mxu0
        %v5073 = vadd.f32 %v5060, %v5072
        %v5074 = vpop.f32.mrf.mxu0
        %5075 = vdwg.mxu0
        %v5076 = vadd.f32 %v4891, %v2445
        %v5077 = vadd.f32 %v4917, %v2446
        %v5078 = vadd.f32 %v4943, %v2447
        %v5079 = vadd.f32 %v4969, %v2448
        %v5080 = vadd.f32 %v4995, %v2449
        %v5081 = vadd.f32 %v5021, %v2450
        %v5082 = vadd.f32 %v5047, %v2451
        %v5083 = vadd.f32 %v5073, %v2452
        %v5084 = vxor.u32 %v5076, 2147483648
        %v5085 = vxor.u32 %v5077, 2147483648
        %v5086 = vxor.u32 %v5078, 2147483648
        %v5087 = vxor.u32 %v5079, 2147483648
        %v5088 = vxor.u32 %v5080, 2147483648
        %v5089 = vxor.u32 %v5081, 2147483648
        %v5090 = vmul.f32 %v5084, 1.442695
        %v5091 = vpow.pop %v5090
        %v5092 = vmul.f32 %v5085, 1.442695
        %v5093 = vpow.pop %v5092
        %v5094 = vmul.f32 %v5086, 1.442695
        %v5095 = vpow.pop %v5094
        %v5096 = vmul.f32 %v5087, 1.442695
        %v5097 = vpow.pop %v5096
        %v5098 = vmul.f32 %v5088, 1.442695
        %v5099 = vpow.pop %v5098
        %v5100 = vmul.f32 %v5089, 1.442695
        %v5101 = vpow.pop %v5100
        %v5102 = vadd.f32 %v5091, 1.0
        %v5103 = vadd.f32 %v5093, 1.0
        %v5104 = vadd.f32 %v5095, 1.0
        %v5105 = vadd.f32 %v5097, 1.0
        %v5106 = vadd.f32 %v5099, 1.0
        %v5107 = vadd.f32 %v5101, 1.0
        %v5108 = vrcp.pop %v5102
        %v5109 = vmul.f32 %v5102, %v5108
        %v5110 = vsub.f32 1.0, %v5109
        %v5111 = vmul.f32 %v5108, %v5110
        %v5112 = vadd.f32 %v5108, %v5111
        %vm5113 = vweird.f32 %v5102
        %vm5114 = vweird.f32 %v5108
        %vm5115 = vmor %vm5113, %vm5114
        %v5116 = vsel %vm5115, %v5108, %v5112
        %v5117 = vand.u32 2147483647, %v5102
        %vm5118 = vcmp.eq.f32.partialorder %v5117, 8.507059e+37
        %v5119 = vand.u32 %v5102, 2147483648
        %v5120 = vor.u32 1.1754944e-38, %v5119
        %v5121 = vsel %vm5118, %v5120, %v5116
        %v5122 = vmul.f32 1.0, %v5121
        %v5123 = vrcp.pop %v5103
        %v5124 = vmul.f32 %v5103, %v5123
        %v5125 = vsub.f32 1.0, %v5124
        %v5126 = vmul.f32 %v5123, %v5125
        %v5127 = vadd.f32 %v5123, %v5126
        %vm5128 = vweird.f32 %v5103
        %vm5129 = vweird.f32 %v5123
        %vm5130 = vmor %vm5128, %vm5129
        %v5131 = vsel %vm5130, %v5123, %v5127
        %v5132 = vand.u32 2147483647, %v5103
        %vm5133 = vcmp.eq.f32.partialorder %v5132, 8.507059e+37
        %v5134 = vand.u32 %v5103, 2147483648
        %v5135 = vor.u32 1.1754944e-38, %v5134
        %v5136 = vsel %vm5133, %v5135, %v5131
        %v5137 = vmul.f32 1.0, %v5136
        %v5138 = vrcp.pop %v5104
        %v5139 = vmul.f32 %v5104, %v5138
        %v5140 = vsub.f32 1.0, %v5139
        %v5141 = vmul.f32 %v5138, %v5140
        %v5142 = vadd.f32 %v5138, %v5141
        %vm5143 = vweird.f32 %v5104
        %vm5144 = vweird.f32 %v5138
        %vm5145 = vmor %vm5143, %vm5144
        %v5146 = vsel %vm5145, %v5138, %v5142
        %v5147 = vand.u32 2147483647, %v5104
        %vm5148 = vcmp.eq.f32.partialorder %v5147, 8.507059e+37
        %v5149 = vand.u32 %v5104, 2147483648
        %v5150 = vor.u32 1.1754944e-38, %v5149
        %v5151 = vsel %vm5148, %v5150, %v5146
        %v5152 = vmul.f32 1.0, %v5151
        %v5153 = vrcp.pop %v5105
        %v5154 = vmul.f32 %v5105, %v5153
        %v5155 = vsub.f32 1.0, %v5154
        %v5156 = vmul.f32 %v5153, %v5155
        %v5157 = vadd.f32 %v5153, %v5156
        %vm5158 = vweird.f32 %v5105
        %vm5159 = vweird.f32 %v5153
        %vm5160 = vmor %vm5158, %vm5159
        %v5161 = vsel %vm5160, %v5153, %v5157
        %v5162 = vand.u32 2147483647, %v5105
        %vm5163 = vcmp.eq.f32.partialorder %v5162, 8.507059e+37
        %v5164 = vand.u32 %v5105, 2147483648
        %v5165 = vor.u32 1.1754944e-38, %v5164
        %v5166 = vsel %vm5163, %v5165, %v5161
        %v5167 = vmul.f32 1.0, %v5166
        %v5168 = vrcp.pop %v5106
        %v5169 = vmul.f32 %v5106, %v5168
        %v5170 = vsub.f32 1.0, %v5169
        %v5171 = vmul.f32 %v5168, %v5170
        %v5172 = vadd.f32 %v5168, %v5171
        %vm5173 = vweird.f32 %v5106
        %vm5174 = vweird.f32 %v5168
        %vm5175 = vmor %vm5173, %vm5174
        %v5176 = vsel %vm5175, %v5168, %v5172
        %v5177 = vand.u32 2147483647, %v5106
        %vm5178 = vcmp.eq.f32.partialorder %v5177, 8.507059e+37
        %v5179 = vand.u32 %v5106, 2147483648
        %v5180 = vor.u32 1.1754944e-38, %v5179
        %v5181 = vsel %vm5178, %v5180, %v5176
        %v5182 = vmul.f32 1.0, %v5181
        %v5183 = vrcp.pop %v5107
        %v5184 = vmul.f32 %v5107, %v5183
        %v5185 = vsub.f32 1.0, %v5184
        %v5186 = vmul.f32 %v5183, %v5185
        %v5187 = vadd.f32 %v5183, %v5186
        %vm5188 = vweird.f32 %v5107
        %vm5189 = vweird.f32 %v5183
        %vm5190 = vmor %vm5188, %vm5189
        %v5191 = vsel %vm5190, %v5183, %v5187
        %v5192 = vand.u32 2147483647, %v5107
        %vm5193 = vcmp.eq.f32.partialorder %v5192, 8.507059e+37
        %v5194 = vand.u32 %v5107, 2147483648
        %v5195 = vor.u32 1.1754944e-38, %v5194
        %v5196 = vsel %vm5193, %v5195, %v5191
        %v5197 = vmul.f32 1.0, %v5196
        %v5198 = vtanh.pop %v5082
        %v5199 = vtanh.pop %v5083
        %v5200 = vmul.f32 %v5152, %v4831
        %v5201 = vmul.f32 %v5167, %v4832
        %v5202 = vmul.f32 %v5122, %v5198
        %v5203 = vmul.f32 %v5137, %v5199
        %v5204 = vadd.f32 %v5200, %v5202
        %v5205 = vadd.f32 %v5201, %v5203
        %v5206 = vtanh.pop %v5204
        %v5207 = vtanh.pop %v5205
        %v5208 = vmul.f32 %v5182, %v5206
        %v5209 = vmul.f32 %v5197, %v5207
        %v5212 = vrot.slane %v5209, 7
        %v5213 = vsel %vm2598, %v5208, %v5212
        %s5215 = scalar_lea.vmem [#allocation2], 7
        %5216 = vst.msk [vmem:[%s5215] ss:$8 sm:$0x3] %vm2604, %v5213
        %5217 = vst.msk [vmem:[%s5215] ss:$8 sm:$0x0] %vm2604, %v5213
        %p5218 = scmp.eq.s32.totalorder %s28, 2
        // Predicated region
        $region77: #{fused_forward.1} parent=47 // pred_check
          %p5219 = pneg %p5218
        $region78: #{fused_forward.1} parent=47 // pred_check_branch
          %5221 = sbr.rel (%p5219) target = $region80
        $region79: #{fused_forward.1} parent=47 // pred_region
          %v5222 = vld [vmem:[#allocation13] sm:$0x3]
          %v5224 = vperm.slane %v5222, 0
          %v5225 = vperm.slane %v5222, 1
          %v5228 = vmul.f32 %v5208, %v5224
          %v5229 = vmul.f32 %v5209, %v5225
          %v5230 = vsel %vm2598, %v5228, 0.0
          %v5231 = vsel %vm2598, %v5229, 0.0
          %v5232 = vadd.f32 %v5230, %v5231
          %5233 = vadd.xlane.f32.xlu0 %v5232
          %v5234 = vpop.xlane.xlu0 %5233
          %v5235 = vld [vmem:[#allocation4] sm:$0x1]
          %v5236 = vadd.f32 %v5234, %v5235
          %vm5237 = vcmask 0
          %5238 = vst.msk [vmem:[#allocation14] sm:$0x1] %vm5237, %v5236
        $region80: #{fused_forward.1} parent=47 // pred_fallthru
          _
        // Predicated region
        $region81: #{fused_forward.1} parent=47 // pred_check
          %p5239 = pneg %p209
        $region82: #{fused_forward.1} parent=47 // pred_check_branch
          %5241 = sbr.rel (%p5239) target = $region84
        $region83: #{fused_forward.1} parent=47 // pred_region
          %5243 = vsyncadd [#allocation7], 0
          %s5245 = sshll.u32 [#allocation14], 4
          %s5246 = int_to_ptr.vmem [resolvable:$true] %s5245
          %s5247 = sshll.u32 %s7, 4
          %s5248 = int_to_ptr.hbm [resolvable:$true] %s5247
          %5250 = dma.vmem_to_hbm [thread:$0]  %s5246, 16, %s5248, [#allocation7]
        $region84: #{fused_forward.1} parent=47 // pred_fallthru
          _
        // Predicated region
        $region85: #{fused_forward.1} parent=47 // pred_check
          %p5251 = pneg %p209
        $region86: #{fused_forward.1} parent=47 // pred_check_branch
          %5253 = sbr.rel (%p5251) target = $region88
        $region87: #{fused_forward.1} parent=47 // pred_region
          %5255 = dma.done [#allocation7], 16
        $region88: #{fused_forward.1} parent=47 // pred_fallthru
          _
      $region48: #{fused_forward.1} parent=5 // pred_fallthru
        _
      %p5256 = scmp.le.s32.totalorder 2, %s23
      // Predicated region
      $region89: #{fused_forward.1} parent=5 // pred_check
        %p5257 = pneg %p5256
      $region90: #{fused_forward.1} parent=5 // pred_check_branch
        %5259 = sbr.rel (%p5257) target = $region92
      $region91: #{fused_forward.1} parent=5 // pred_region
        %s5260 = ssub.s32 %s23, 2
      $region92: #{fused_forward.1} parent=5 // pred_fallthru
        _
    $region6: #{fused_forward.1} parent=1 // loop_footer
      %s27 = sadd.s32 1, %s23
    $region7: #{fused_forward.1} parent=1 // loop_footer_branch
      %22 = sbr.rel target = $region3
    $region8: #{fused_forward.1} parent=1 // loop_exit
      _
    %5261 = vsyncpa [#allocation6], 1
    %s5262 = scalar_lea.sflag [#allocation6], 1
    %5263 = vsyncpa %s5262, 1
    %5264 = vsyncpa [#allocation9], 1
    %s5265 = scalar_lea.sflag [#allocation9], 1
    %5266 = vsyncpa %s5265, 1
    %5267 = vsyncpa [#allocation12], 1
    %s5268 = scalar_lea.sflag [#allocation12], 1
    %5269 = vsyncpa %s5268, 1
    %5270 = vsyncpa [#allocation7], 1
    %s5271 = scalar_lea.sflag [#allocation7], 1
    %5272 = vsyncpa %s5271, 1

</llo_original>
